<compile_context>
chip_gen: v6e
topology: v6e:2x2x1
jax: 0.10.0
libtpu: 0.0.40
codegen_flags: <defaults>
</compile_context>

<pallas_src>
import math

import jax
import jax.numpy as jnp
from jax.experimental import pallas as pl
from jax.experimental.pallas import tpu as pltpu  # noqa: F401  (TPU backend assumed)

# ---- small config consistent with the module ----
B = 2              # batch
S = 8              # seq len (= max(l))
D = 32             # args.bert_out_dim
H = 2              # args.head_num
DK = D // H        # per-head dim
C = 3              # args.num_class
TOP_K = 4          # args.top_k
LANES = 128
BS = B * S

# ---- weight-slab row offsets (multiples of 8 so in-kernel row slices stay aligned) ----
R_WQK, R_BQK = 0, 32          # token projection:  q | k | lambda_q_query | lambda_k_key
R_WA, R_BA = 40, 72           # aspect projection: qa | ka | lambda_q_ctx | lambda_k_ctx
R_WGS, R_WGM, R_BG = 80, 112, 144   # GCN output projections (syn path / sem path / bias)
R_WMLP, R_BMLP = 152, 248     # ABSAEncoder.mlp  (3D -> D)
R_WCLS, R_BCLS = 256, 320     # RGATABSA.classifier (2D -> C, lane-padded)
W_ROWS = 328

# ---- data-slab layout ----
D_EXTRA = BS                  # rows 0:BS lanes 0:S = adj_pos; rows BS:BS+B = extras
L_POOL = 0                    # lanes 0:D          -> bert pooler output
L_SMASK = D                   # lanes D:D+S        -> src_mask
L_AMASK = D + S               # lanes D+S:D+2S     -> aspect mask
L_LABEL = D + 2 * S           # lane  D+2S         -> label (as f32)
D_ROWS = 24


# =====================================================================================
# Single fused kernel: quasi-MHA -> top-k select -> 3 GCNs -> pooling -> mlp ->
# classifier -> losses.  No grid; whole batch handled with static unrolls.
# =====================================================================================
def _rgat_fused_kernel(w_ref, x_ref, d_ref, out_ref):
    f32 = jnp.float32
    scale = 1.0 / math.sqrt(DK)

    # ---------------- unpack the three packed operands (static slices) ----------------
    x_all = x_ref[...]                                                 # (BS, D)
    adj_all = d_ref[0:BS, 0:S]                                         # (BS, S)
    pool_all = d_ref[D_EXTRA:D_EXTRA + B, L_POOL:L_POOL + D]           # (B, D)
    smask = d_ref[D_EXTRA:D_EXTRA + B, L_SMASK:L_SMASK + S]            # (B, S)
    amask = d_ref[D_EXTRA:D_EXTRA + B, L_AMASK:L_AMASK + S]            # (B, S)
    label_f = d_ref[D_EXTRA:D_EXTRA + B, L_LABEL:L_LABEL + 1]          # (B, 1)

    W_qk = w_ref[R_WQK:R_WQK + D, :]
    b_qk = w_ref[R_BQK:R_BQK + 1, :]
    W_a = w_ref[R_WA:R_WA + D, :]
    b_a = w_ref[R_BA:R_BA + 1, :]
    W_gs = w_ref[R_WGS:R_WGS + D, :]
    W_gm = w_ref[R_WGM:R_WGM + D, :]
    b_g = w_ref[R_BG:R_BG + 1, :]
    W_mlp = w_ref[R_WMLP:R_WMLP + 3 * D, :]
    b_mlp = w_ref[R_BMLP:R_BMLP + 1, :]
    W_cls = w_ref[R_WCLS:R_WCLS + 2 * D, :]
    b_cls = w_ref[R_BCLS:R_BCLS + 1, :]

    # ---------------- aspect pooling via a (B, B*S) selection matrix ------------------
    asp_wn = jnp.sum(amask, axis=1, keepdims=True)                     # (B, 1)
    ridx = jax.lax.broadcasted_iota(jnp.int32, (B, 1), 0)
    pool_sel = jnp.concatenate(
        [jnp.where(ridx == bb, amask, 0.0) for bb in range(B)], axis=1)  # (B, BS)
    asp_pool = jnp.dot(pool_sel, x_all, preferred_element_type=f32) / asp_wn  # (B, D)

    # ---------------- fused projections for the whole batch (2 matmuls) ---------------
    #   qk  cols: [0:D]=q, [D:2D]=k, [2D:2D+H]=lambda_q_query, [2D+H:2D+2H]=lambda_k_key
    #   aqk cols: [0:D]=qa, [D:2D]=ka, [2D:2D+H]=lambda_q_ctx,  [2D+H:2D+2H]=lambda_k_ctx
    qk = jnp.dot(x_all, W_qk, preferred_element_type=f32) + b_qk       # (BS, 128)
    aqk = jnp.dot(asp_pool, W_a, preferred_element_type=f32) + b_a     # (B, 128)

    rr = jax.lax.broadcasted_iota(jnp.int32, (S, S), 0)
    cc = jax.lax.broadcasted_iota(jnp.int32, (S, S), 1)
    eye = (rr == cc).astype(f32)
    dn = (((1,), (1,)), ((), ()))     # contract last dims: q @ k^T without a transpose

    ax_syn_l, ax_sem_l, denom_l = [], [], []
    for b in range(B):                                   # static unroll over tiny batch
        lo = b * S
        x_b = x_all[lo:lo + S, :]                        # (S, D)
        adj_b = adj_all[lo:lo + S, :]                    # (S, S)
        smask_b = smask[b:b + 1, :]                      # (1, S)

        # ------------- quasi multi-head attention, summed over heads ------------------
        att = jnp.zeros((S, S), f32)
        for hh in range(H):                              # static unroll over heads
            c_lo, c_hi = hh * DK, (hh + 1) * DK
            qh = qk[lo:lo + S, c_lo:c_hi]
            kh = qk[lo:lo + S, D + c_lo:D + c_hi]
            scores = jax.lax.dot_general(qh, kh, dn, preferred_element_type=f32) * scale
            scores = jnp.where(smask_b == 0.0, -1e9, scores)
            probs = jax.nn.softmax(scores, axis=-1)

            # aspect rows are identical -> quasi score is one scalar per (batch, head);
            # masked columns give sigmoid(-1e9) == 0 exactly, i.e. multiply by the mask.
            qa_h = aqk[b:b + 1, c_lo:c_hi]
            ka_h = aqk[b:b + 1, D + c_lo:D + c_hi]
            sa = jnp.sum(qa_h * ka_h, axis=1, keepdims=True) * scale   # (1,1)
            quasi_row = jax.nn.sigmoid(sa) * smask_b                   # (1,S)

            lam_q = jax.nn.sigmoid(
                qk[lo:lo + S, 2 * D + hh:2 * D + hh + 1]
                + aqk[b:b + 1, 2 * D + hh:2 * D + hh + 1])             # (S,1)
            lam_k = jax.nn.sigmoid(
                qk[lo:lo + S, 2 * D + H + hh:2 * D + H + hh + 1]
                + aqk[b:b + 1, 2 * D + H + hh:2 * D + H + hh + 1])     # (S,1)
            att = att + probs + (1.0 - (lam_q + lam_k)) * quasi_row

        # ------------- select(): exact k-th largest over S*S scores, one pass ----------
        # value of the k-th largest = max{v : #(elements >= v) >= k}  (torch.topk ties)
        flat_r = jnp.concatenate([att[i:i + 1, :] for i in range(S)], axis=1)   # (1, 64)
        flat_c = jnp.concatenate([att[:, j:j + 1] for j in range(S)], axis=0)   # (64, 1)
        cnt = jnp.sum((flat_r >= flat_c).astype(f32), axis=1, keepdims=True)    # (64, 1)
        cand = jnp.where(cnt >= float(TOP_K), flat_c, -1e30)
        kth = jnp.max(cand, axis=0, keepdims=True)                              # (1, 1)
        binary = (att >= kth).astype(f32)
        sym = binary + binary.T
        sym = sym * (1.0 - eye) + eye                    # fill_diagonal_(1)
        att_adj = sym * binary                           # select(attn) * attn (aliased)

        denom_l.append(jnp.sum(adj_b, axis=1, keepdims=True) + 1.0)
        ax_syn_l.append(jnp.dot(adj_b, x_b, preferred_element_type=f32))
        ax_sem_l.append(jnp.dot(att_adj, x_b, preferred_element_type=f32))

    ax_syn = jnp.concatenate(ax_syn_l, axis=0)           # (BS, D)
    ax_sem = jnp.concatenate(ax_sem_l, axis=0)           # (BS, D)
    denom = jnp.concatenate(denom_l, axis=0)             # (BS, 1)

    # ------------- the three GCN layers fused into two batch-stacked matmuls ----------
    # lanes: [0:D]=out_syn, [D:2D]=out_sem, [2D:3D]=out_com  (h_weight folded on host)
    gcn_pre = (jnp.dot(ax_syn, W_gs, preferred_element_type=f32)
               + jnp.dot(ax_sem, W_gm, preferred_element_type=f32) + b_g) / denom
    gcn_out = jnp.maximum(gcn_pre, 0.0)                  # (BS, 128)

    # ------------- similarity losses: F.normalize(dim=1) + mean squared diff ----------
    ss_syn = jnp.zeros((1, 1), f32)
    ss_sem = jnp.zeros((1, 1), f32)
    for b in range(B):
        blk = gcn_out[b * S:(b + 1) * S, :]              # (S, 128)
        nrm = jnp.sqrt(jnp.sum(blk * blk, axis=0, keepdims=True))
        nb = blk / jnp.maximum(nrm, 1e-12)
        d1 = nb[:, 2 * D:3 * D] - nb[:, 0:D]
        d2 = nb[:, 2 * D:3 * D] - nb[:, D:2 * D]
        ss_syn = ss_syn + jnp.sum(jnp.sum(d1 * d1, axis=1, keepdims=True),
                                  axis=0, keepdims=True)
        ss_sem = ss_sem + jnp.sum(jnp.sum(d2 * d2, axis=1, keepdims=True),
                                  axis=0, keepdims=True)

    # ------------- aspect-masked pooling + mlp + classifier (whole batch) -------------
    enc_cat = jnp.dot(pool_sel, gcn_out, preferred_element_type=f32) / asp_wn   # (B,128)
    hmlp = jnp.maximum(jnp.dot(enc_cat[:, 0:3 * D], W_mlp, preferred_element_type=f32)
                       + b_mlp, 0.0)                                            # (B,128)
    cls_in = jnp.concatenate([hmlp[:, 0:D], pool_all], axis=1)                  # (B, 2D)
    logits_pad = jnp.dot(cls_in, W_cls, preferred_element_type=f32) + b_cls     # (B,128)

    # ------------- multi_dropout in eval mode == a single cross entropy ---------------
    cidx = jax.lax.broadcasted_iota(jnp.int32, (B, LANES), 1)
    onehot = (cidx == label_f.astype(jnp.int32)).astype(f32)
    lg = jnp.where(cidx < C, logits_pad, -1e30)
    m = jnp.max(lg, axis=1, keepdims=True)
    lse = m + jnp.log(jnp.sum(jnp.exp(lg - m), axis=1, keepdims=True))
    picked = jnp.sum(logits_pad * onehot, axis=1, keepdims=True)
    loss_com = jnp.sum(lse - picked, axis=0, keepdims=True) * (1.0 / B)         # (1,1)
    loss_syn = ss_syn * (1.0 / (B * S * D))
    loss_sem = ss_sem * (1.0 / (B * S * D))

    # ------------- single lane-dense (8,128) output slab ------------------------------
    lane = cidx[0:1, :]
    loss_row = (jnp.where(lane == 0, loss_com, 0.0)
                + jnp.where(lane == 1, loss_syn, 0.0)
                + jnp.where(lane == 2, loss_sem, 0.0))                          # (1,128)
    out_ref[...] = jnp.concatenate(
        [logits_pad, loss_row, jnp.zeros((8 - B - 1, LANES), f32)], axis=0)


# =====================================================================================
# Host-side parameter init & one-time packing into the (W_ROWS, 128) weight slab
# =====================================================================================
def init_params(key):
    ks = iter(jax.random.split(key, 32))

    def lin(out_d, in_d):
        w = jax.random.normal(next(ks), (out_d, in_d), jnp.float32) * 0.05
        b = jax.random.normal(next(ks), (1, out_d), jnp.float32) * 0.05
        return w, b

    p = {}
    # MultiHeadAttention
    p["wq"], p["bq"] = lin(D, D)          # linears[0]
    p["wk"], p["bk"] = lin(D, D)          # linears[1]
    p["wqa"], p["bqa"] = lin(D, D)        # q_aspect
    p["wka"], p["bka"] = lin(D, D)        # k_aspect
    p["wlqc"], p["blqc"] = lin(1, DK)     # lambda_q_context_layer
    p["wlqq"], p["blqq"] = lin(1, DK)     # lambda_q_query_layer
    p["wlkc"], p["blkc"] = lin(1, DK)     # lambda_k_context_layer
    p["wlkk"], p["blkk"] = lin(1, DK)     # lambda_k_key_layer
    # GCN last-layer weights (gc1.W[1], gc2.Z[1], gc3.W[1]) -- earlier layers are
    # discarded by the reference forward (it always re-feeds the original inputs)
    p["w_syn"], p["b_syn"] = lin(D, D)
    p["z_sem"], p["b_sem"] = lin(D, D)
    p["w_com"], p["b_com"] = lin(D, D)
    p["h_weight"] = jnp.array([0.7, 0.4], jnp.float32)   # ~ Normal(0.5, 0.5), fixed
    # ABSAEncoder.mlp and RGATABSA.classifier
    p["w_mlp"], p["b_mlp"] = lin(D, 3 * D)
    p["w_cls"], p["b_cls"] = lin(C, 2 * D)
    return p


def prepare_params(p):
    """Pack every weight into one lane-dense (W_ROWS, 128) f32 slab (done once)."""

    def lam_fold(wT, bias, wl, bl):
        # Compose Linear_DK->1 with the per-head block of a D->D projection so that
        #   x @ col_h + b_h == lambda_layer( (x @ wT + bias)[:, h*DK:(h+1)*DK] )
        cols, bs = [], []
        for hh in range(H):
            blk = wT[:, hh * DK:(hh + 1) * DK]                       # (D, DK)
            cols.append(blk @ wl[0])                                 # (D,)
            bs.append(jnp.sum(bias[0, hh * DK:(hh + 1) * DK] * wl[0]) + bl[0, 0])
        return jnp.stack(cols, axis=1), jnp.stack(bs)                # (D, H), (H,)

    wqT, wkT = p["wq"].T, p["wk"].T
    wqaT, wkaT = p["wqa"].T, p["wka"].T
    lqq_c, lqq_b = lam_fold(wqT, p["bq"], p["wlqq"], p["blqq"])
    lkk_c, lkk_b = lam_fold(wkT, p["bk"], p["wlkk"], p["blkk"])
    lqc_c, lqc_b = lam_fold(wqaT, p["bqa"], p["wlqc"], p["blqc"])
    lkc_c, lkc_b = lam_fold(wkaT, p["bka"], p["wlkc"], p["blkc"])

    hw0 = p["h_weight"][0]
    hw1_half = p["h_weight"][1] * 0.5

    w = jnp.zeros((W_ROWS, LANES), jnp.float32)
    # token-side projection: q | k | lambda_q_query | lambda_k_key
    w = w.at[R_WQK:R_WQK + D, 0:D].set(wqT)
    w = w.at[R_WQK:R_WQK + D, D:2 * D].set(wkT)
    w = w.at[R_WQK:R_WQK + D, 2 * D:2 * D + H].set(lqq_c)
    w = w.at[R_WQK:R_WQK + D, 2 * D + H:2 * D + 2 * H].set(lkk_c)
    w = w.at[R_BQK, 0:D].set(p["bq"][0])
    w = w.at[R_BQK, D:2 * D].set(p["bk"][0])
    w = w.at[R_BQK, 2 * D:2 * D + H].set(lqq_b)
    w = w.at[R_BQK, 2 * D + H:2 * D + 2 * H].set(lkk_b)
    # aspect-side projection: qa | ka | lambda_q_context | lambda_k_context
    w = w.at[R_WA:R_WA + D, 0:D].set(wqaT)
    w = w.at[R_WA:R_WA + D, D:2 * D].set(wkaT)
    w = w.at[R_WA:R_WA + D, 2 * D:2 * D + H].set(lqc_c)
    w = w.at[R_WA:R_WA + D, 2 * D + H:2 * D + 2 * H].set(lkc_c)
    w = w.at[R_BA, 0:D].set(p["bqa"][0])
    w = w.at[R_BA, D:2 * D].set(p["bka"][0])
    w = w.at[R_BA, 2 * D:2 * D + H].set(lqc_b)
    w = w.at[R_BA, 2 * D + H:2 * D + 2 * H].set(lkc_b)
    # GCN output projections; inter_adj = hw0*att_adj + (hw1/2)*adj folded into weights:
    #   [syn|sem|com] = ax_syn @ [Wsyn|0|c1*Wcom] + ax_sem @ [0|Wsem|c0*Wcom] + bias
    w = w.at[R_WGS:R_WGS + D, 0:D].set(p["w_syn"].T)
    w = w.at[R_WGS:R_WGS + D, 2 * D:3 * D].set(hw1_half * p["w_com"].T)
    w = w.at[R_WGM:R_WGM + D, D:2 * D].set(p["z_sem"].T)
    w = w.at[R_WGM:R_WGM + D, 2 * D:3 * D].set(hw0 * p["w_com"].T)
    w = w.at[R_BG, 0:D].set(p["b_syn"][0])
    w = w.at[R_BG, D:2 * D].set(p["b_sem"][0])
    w = w.at[R_BG, 2 * D:3 * D].set(p["b_com"][0])
    # ABSAEncoder.mlp (un-split, input order syn|sem|com) and classifier (lane-padded)
    w = w.at[R_WMLP:R_WMLP + 3 * D, 0:D].set(p["w_mlp"].T)
    w = w.at[R_BMLP, 0:D].set(p["b_mlp"][0])
    w = w.at[R_WCLS:R_WCLS + 2 * D, 0:C].set(p["w_cls"].T)
    w = w.at[R_BCLS, 0:C].set(p["b_cls"][0])
    return w


# =====================================================================================
# Forward wrapper: one pallas_call, thin (fusable) packing around it
# =====================================================================================
def rgat_absa_forward(wslab, bert_out, pool_out, adj_pos, src_mask, a_mask, label):
    x2d = bert_out.reshape(BS, D)                                       # free reshape
    extra = jnp.concatenate(
        [pool_out, src_mask, a_mask, label.astype(jnp.float32)[:, None]], axis=1)
    dslab = jnp.zeros((D_ROWS, LANES), jnp.float32)
    dslab = dslab.at[0:BS, 0:S].set(adj_pos.reshape(BS, S))
    dslab = dslab.at[D_EXTRA:D_EXTRA + B, 0:D + 2 * S + 1].set(extra)

    out = pl.pallas_call(
        _rgat_fused_kernel,
        out_shape=jax.ShapeDtypeStruct((8, LANES), jnp.float32),
    )(wslab, x2d, dslab)

    logits = out[0:B, 0:C]
    return logits, out[B, 0], out[B, 1], out[B, 2]


if __name__ == "__main__":
    key = jax.random.PRNGKey(0)
    k_param, k_bert, k_pool, k_adj = jax.random.split(key, 4)

    params = init_params(k_param)
    wslab = prepare_params(params)   # one-time host-side weight packing (1 DMA in-kernel)

    # Synthetic stand-ins for BERT outputs and head_to_adj adjacency (deterministic).
    bert_out = jax.random.normal(k_bert, (B, S, D), jnp.float32)
    pool_out = jax.random.normal(k_pool, (B, D), jnp.float32)
    adj_rand = (jax.random.uniform(k_adj, (B, S, S)) < 0.4).astype(jnp.float32)
    adj_pos = jnp.clip(adj_rand + jnp.eye(S, dtype=jnp.float32)[None], 0.0, 1.0)

    src_mask = jnp.array([[1, 1, 1, 1, 1, 1, 1, 1],
                          [1, 1, 1, 1, 1, 1, 1, 0]], jnp.float32)        # (B, S)
    a_mask = jnp.array([[0, 1, 1, 0, 0, 0, 0, 0],
                        [0, 0, 1, 1, 1, 0, 0, 0]], jnp.float32)          # (B, S)
    label = jnp.array([1, 2], jnp.int32)

    fwd = jax.jit(rgat_absa_forward)
    logits, loss_com, loss_syn, loss_sem = fwd(
        wslab, bert_out, pool_out, adj_pos, src_mask, a_mask, label)
    jax.block_until_ready((logits, loss_com, loss_syn, loss_sem))
    assert logits.shape == (B, C)
    print("KERNEL_OK")
</pallas_src>

<mosaic_0001>
module attributes {stable_mosaic.version = 11 : i64} {
  func.func @_rgat_fused_kernel(%arg0: memref<328x128xf32, #tpu.memory_space<vmem>>, %arg1: memref<16x32xf32, #tpu.memory_space<vmem>>, %arg2: memref<24x128xf32, #tpu.memory_space<vmem>>, %arg3: memref<8x128xf32, #tpu.memory_space<vmem>>) attributes {dimension_semantics = [], scalar_prefetch = 0 : i64, scratch_operands = 0 : i64, tpu.core_type = #tpu.core_type<tc>} {
    %c0 = arith.constant 0 : index
    %c0_0 = arith.constant 0 : index
    %0 = vector.load %arg1[%c0, %c0_0] : memref<16x32xf32, #tpu.memory_space<vmem>>, vector<16x32xf32>
    %c0_1 = arith.constant 0 : index
    %c0_2 = arith.constant 0 : index
    %1 = vector.load %arg2[%c0_1, %c0_2] : memref<24x128xf32, #tpu.memory_space<vmem>>, vector<16x8xf32>
    %c16 = arith.constant 16 : index
    %c0_3 = arith.constant 0 : index
    %2 = vector.load %arg2[%c16, %c0_3] : memref<24x128xf32, #tpu.memory_space<vmem>>, vector<2x32xf32>
    %c16_4 = arith.constant 16 : index
    %c32 = arith.constant 32 : index
    %3 = vector.load %arg2[%c16_4, %c32] : memref<24x128xf32, #tpu.memory_space<vmem>>, vector<2x8xf32>
    %c16_5 = arith.constant 16 : index
    %c40 = arith.constant 40 : index
    %4 = vector.load %arg2[%c16_5, %c40] : memref<24x128xf32, #tpu.memory_space<vmem>>, vector<2x8xf32>
    %c16_6 = arith.constant 16 : index
    %c48 = arith.constant 48 : index
    %5 = vector.load %arg2[%c16_6, %c48] : memref<24x128xf32, #tpu.memory_space<vmem>>, vector<2x1xf32>
    %c0_7 = arith.constant 0 : index
    %c0_8 = arith.constant 0 : index
    %6 = vector.load %arg0[%c0_7, %c0_8] : memref<328x128xf32, #tpu.memory_space<vmem>>, vector<32x128xf32>
    %c32_9 = arith.constant 32 : index
    %c0_10 = arith.constant 0 : index
    %7 = vector.load %arg0[%c32_9, %c0_10] : memref<328x128xf32, #tpu.memory_space<vmem>>, vector<1x128xf32>
    %c40_11 = arith.constant 40 : index
    %c0_12 = arith.constant 0 : index
    %8 = vector.load %arg0[%c40_11, %c0_12] : memref<328x128xf32, #tpu.memory_space<vmem>>, vector<32x128xf32>
    %c72 = arith.constant 72 : index
    %c0_13 = arith.constant 0 : index
    %9 = vector.load %arg0[%c72, %c0_13] : memref<328x128xf32, #tpu.memory_space<vmem>>, vector<1x128xf32>
    %c80 = arith.constant 80 : index
    %c0_14 = arith.constant 0 : index
    %10 = vector.load %arg0[%c80, %c0_14] : memref<328x128xf32, #tpu.memory_space<vmem>>, vector<32x128xf32>
    %c112 = arith.constant 112 : index
    %c0_15 = arith.constant 0 : index
    %11 = vector.load %arg0[%c112, %c0_15] : memref<328x128xf32, #tpu.memory_space<vmem>>, vector<32x128xf32>
    %c144 = arith.constant 144 : index
    %c0_16 = arith.constant 0 : index
    %12 = vector.load %arg0[%c144, %c0_16] : memref<328x128xf32, #tpu.memory_space<vmem>>, vector<1x128xf32>
    %c152 = arith.constant 152 : index
    %c0_17 = arith.constant 0 : index
    %13 = vector.load %arg0[%c152, %c0_17] : memref<328x128xf32, #tpu.memory_space<vmem>>, vector<96x128xf32>
    %c248 = arith.constant 248 : index
    %c0_18 = arith.constant 0 : index
    %14 = vector.load %arg0[%c248, %c0_18] : memref<328x128xf32, #tpu.memory_space<vmem>>, vector<1x128xf32>
    %c256 = arith.constant 256 : index
    %c0_19 = arith.constant 0 : index
    %15 = vector.load %arg0[%c256, %c0_19] : memref<328x128xf32, #tpu.memory_space<vmem>>, vector<64x128xf32>
    %c320 = arith.constant 320 : index
    %c0_20 = arith.constant 0 : index
    %16 = vector.load %arg0[%c320, %c0_20] : memref<328x128xf32, #tpu.memory_space<vmem>>, vector<1x128xf32>
    %cst = arith.constant dense<0.000000e+00> : vector<2xf32>
    %17 = vector.multi_reduction <add>, %4, %cst [1] : vector<2x8xf32> to vector<2xf32>
    %18 = vector.shape_cast %17 : vector<2xf32> to vector<2x1xf32>
    %19 = tpu.iota {dimensions = array<i32: 0>} : vector<2x1xi32>
    %c0_i32 = arith.constant 0 : i32
    %20 = vector.broadcast %c0_i32 : i32 to vector<2x1xi32>
    %21 = arith.cmpi eq, %19, %20 : vector<2x1xi32>
    %cst_21 = arith.constant 0.000000e+00 : f32
    %22 = vector.shape_cast %21 : vector<2x1xi1> to vector<2x1xi1>
    %23 = vector.broadcast %22 : vector<2x1xi1> to vector<2x8xi1>
    %24 = vector.broadcast %cst_21 : f32 to vector<2x8xf32>
    %25 = arith.select %23, %4, %24 : vector<2x8xi1>, vector<2x8xf32>
    %c1_i32 = arith.constant 1 : i32
    %26 = vector.broadcast %c1_i32 : i32 to vector<2x1xi32>
    %27 = arith.cmpi eq, %19, %26 : vector<2x1xi32>
    %cst_22 = arith.constant 0.000000e+00 : f32
    %28 = vector.shape_cast %27 : vector<2x1xi1> to vector<2x1xi1>
    %29 = vector.broadcast %28 : vector<2x1xi1> to vector<2x8xi1>
    %30 = vector.broadcast %cst_22 : f32 to vector<2x8xf32>
    %31 = arith.select %29, %4, %30 : vector<2x8xi1>, vector<2x8xf32>
    %32 = tpu.concatenate %25, %31 in 1 : vector<2x8xf32>, vector<2x8xf32> -> vector<2x16xf32>
    %cst_23 = arith.constant dense<0.000000e+00> : vector<2x32xf32>
    %33 = tpu.matmul %32, %0, %cst_23 {dimension_numbers = #tpu.dot_dimension_numbers<[1], [0], [0], [1], [0, 0, 1, 1], [], []>} : vector<2x16xf32>, vector<16x32xf32>, vector<2x32xf32> -> vector<2x32xf32>
    %34 = vector.broadcast %18 : vector<2x1xf32> to vector<2x32xf32>
    %35 = arith.divf %33, %34 : vector<2x32xf32>
    %cst_24 = arith.constant dense<0.000000e+00> : vector<16x128xf32>
    %36 = tpu.matmul %0, %6, %cst_24 {dimension_numbers = #tpu.dot_dimension_numbers<[1], [0], [0], [1], [0, 0, 1, 1], [], []>} : vector<16x32xf32>, vector<32x128xf32>, vector<16x128xf32> -> vector<16x128xf32>
    %37 = vector.broadcast %7 : vector<1x128xf32> to vector<16x128xf32>
    %38 = arith.addf %36, %37 : vector<16x128xf32>
    %cst_25 = arith.constant dense<0.000000e+00> : vector<2x128xf32>
    %39 = tpu.matmul %35, %8, %cst_25 {dimension_numbers = #tpu.dot_dimension_numbers<[1], [0], [0], [1], [0, 0, 1, 1], [], []>} : vector<2x32xf32>, vector<32x128xf32>, vector<2x128xf32> -> vector<2x128xf32>
    %40 = vector.broadcast %9 : vector<1x128xf32> to vector<2x128xf32>
    %41 = arith.addf %39, %40 : vector<2x128xf32>
    %42 = tpu.iota {dimensions = array<i32: 0>} : vector<8x8xi32>
    %43 = tpu.iota {dimensions = array<i32: 1>} : vector<8x8xi32>
    %44 = arith.cmpi eq, %42, %43 : vector<8x8xi32>
    %45 = arith.extui %44 : vector<8x8xi1> to vector<8x8xi32>
    %46 = arith.sitofp %45 : vector<8x8xi32> to vector<8x8xf32>
    %47 = vector.extract_strided_slice %0 {offsets = [0, 0], sizes = [8, 32], strides = [1, 1]} : vector<16x32xf32> to vector<8x32xf32>
    %48 = vector.extract_strided_slice %1 {offsets = [0, 0], sizes = [8, 8], strides = [1, 1]} : vector<16x8xf32> to vector<8x8xf32>
    %49 = vector.extract_strided_slice %3 {offsets = [0, 0], sizes = [1, 8], strides = [1, 1]} : vector<2x8xf32> to vector<1x8xf32>
    %cst_26 = arith.constant 0.000000e+00 : f32
    %50 = vector.broadcast %cst_26 : f32 to vector<8x8xf32>
    %51 = vector.extract_strided_slice %38 {offsets = [0, 0], sizes = [8, 16], strides = [1, 1]} : vector<16x128xf32> to vector<8x16xf32>
    %52 = vector.extract_strided_slice %38 {offsets = [0, 32], sizes = [8, 16], strides = [1, 1]} : vector<16x128xf32> to vector<8x16xf32>
    %cst_27 = arith.constant dense<0.000000e+00> : vector<8x8xf32>
    %53 = tpu.matmul %51, %52, %cst_27 {dimension_numbers = #tpu.dot_dimension_numbers<[1], [1], [0], [0], [0, 0, 1, 0], [], []>} : vector<8x16xf32>, vector<8x16xf32>, vector<8x8xf32> -> vector<8x8xf32>
    %cst_28 = arith.constant 2.500000e-01 : f32
    %54 = vector.broadcast %cst_28 : f32 to vector<8x8xf32>
    %55 = arith.mulf %53, %54 : vector<8x8xf32>
    %cst_29 = arith.constant 0.000000e+00 : f32
    %56 = vector.broadcast %cst_29 : f32 to vector<1x8xf32>
    %57 = arith.cmpf oeq, %49, %56 : vector<1x8xf32>
    %cst_30 = arith.constant -1.000000e+09 : f32
    %58 = vector.shape_cast %57 : vector<1x8xi1> to vector<1x8xi1>
    %59 = vector.broadcast %58 : vector<1x8xi1> to vector<8x8xi1>
    %60 = vector.broadcast %cst_30 : f32 to vector<8x8xf32>
    %61 = arith.select %59, %60, %55 : vector<8x8xi1>, vector<8x8xf32>
    %cst_31 = arith.constant dense<0xFF800000> : vector<8xf32>
    %62 = vector.multi_reduction <maximumf>, %61, %cst_31 [1] : vector<8x8xf32> to vector<8xf32>
    %cst_32 = arith.constant 0xFF800000 : f32
    %63 = vector.broadcast %cst_32 : f32 to vector<8xf32>
    %64 = arith.maximumf %63, %62 : vector<8xf32>
    %65 = vector.shape_cast %64 : vector<8xf32> to vector<8x1xf32>
    %66 = vector.broadcast %65 : vector<8x1xf32> to vector<8x8xf32>
    %67 = arith.subf %61, %66 : vector<8x8xf32>
    %68 = math.exp %67 : vector<8x8xf32>
    %cst_33 = arith.constant dense<0.000000e+00> : vector<8xf32>
    %69 = vector.multi_reduction <add>, %68, %cst_33 [1] : vector<8x8xf32> to vector<8xf32>
    %70 = vector.shape_cast %69 : vector<8xf32> to vector<8x1xf32>
    %71 = vector.broadcast %70 : vector<8x1xf32> to vector<8x8xf32>
    %72 = arith.divf %68, %71 : vector<8x8xf32>
    %73 = vector.extract_strided_slice %41 {offsets = [0, 0], sizes = [1, 16], strides = [1, 1]} : vector<2x128xf32> to vector<1x16xf32>
    %74 = vector.extract_strided_slice %41 {offsets = [0, 32], sizes = [1, 16], strides = [1, 1]} : vector<2x128xf32> to vector<1x16xf32>
    %75 = arith.mulf %73, %74 : vector<1x16xf32>
    %cst_34 = arith.constant dense<0.000000e+00> : vector<1xf32>
    %76 = vector.multi_reduction <add>, %75, %cst_34 [1] : vector<1x16xf32> to vector<1xf32>
    %77 = vector.shape_cast %76 : vector<1xf32> to vector<1x1xf32>
    %cst_35 = arith.constant 2.500000e-01 : f32
    %78 = vector.broadcast %cst_35 : f32 to vector<1x1xf32>
    %79 = arith.mulf %77, %78 : vector<1x1xf32>
    %80 = arith.negf %79 : vector<1x1xf32>
    %81 = math.exp %80 : vector<1x1xf32>
    %cst_36 = arith.constant 1.000000e+00 : f32
    %82 = vector.broadcast %cst_36 : f32 to vector<1x1xf32>
    %83 = arith.addf %82, %81 : vector<1x1xf32>
    %84 = arith.divf %82, %83 : vector<1x1xf32>
    %85 = vector.broadcast %84 : vector<1x1xf32> to vector<1x8xf32>
    %86 = arith.mulf %85, %49 : vector<1x8xf32>
    %87 = vector.extract_strided_slice %38 {offsets = [0, 64], sizes = [8, 1], strides = [1, 1]} : vector<16x128xf32> to vector<8x1xf32>
    %88 = vector.extract_strided_slice %41 {offsets = [0, 64], sizes = [1, 1], strides = [1, 1]} : vector<2x128xf32> to vector<1x1xf32>
    %89 = vector.broadcast %88 : vector<1x1xf32> to vector<8x1xf32>
    %90 = arith.addf %87, %89 : vector<8x1xf32>
    %91 = arith.negf %90 : vector<8x1xf32>
    %92 = math.exp %91 : vector<8x1xf32>
    %cst_37 = arith.constant 1.000000e+00 : f32
    %93 = vector.broadcast %cst_37 : f32 to vector<8x1xf32>
    %94 = arith.addf %93, %92 : vector<8x1xf32>
    %95 = arith.divf %93, %94 : vector<8x1xf32>
    %96 = vector.extract_strided_slice %38 {offsets = [0, 66], sizes = [8, 1], strides = [1, 1]} : vector<16x128xf32> to vector<8x1xf32>
    %97 = vector.extract_strided_slice %41 {offsets = [0, 66], sizes = [1, 1], strides = [1, 1]} : vector<2x128xf32> to vector<1x1xf32>
    %98 = vector.broadcast %97 : vector<1x1xf32> to vector<8x1xf32>
    %99 = arith.addf %96, %98 : vector<8x1xf32>
    %100 = arith.negf %99 : vector<8x1xf32>
    %101 = math.exp %100 : vector<8x1xf32>
    %cst_38 = arith.constant 1.000000e+00 : f32
    %102 = vector.broadcast %cst_38 : f32 to vector<8x1xf32>
    %103 = arith.addf %102, %101 : vector<8x1xf32>
    %104 = arith.divf %102, %103 : vector<8x1xf32>
    %105 = arith.addf %50, %72 : vector<8x8xf32>
    %106 = arith.addf %95, %104 : vector<8x1xf32>
    %cst_39 = arith.constant 1.000000e+00 : f32
    %107 = vector.broadcast %cst_39 : f32 to vector<8x1xf32>
    %108 = arith.subf %107, %106 : vector<8x1xf32>
    %109 = vector.broadcast %108 : vector<8x1xf32> to vector<8x8xf32>
    %110 = vector.broadcast %86 : vector<1x8xf32> to vector<8x8xf32>
    %111 = arith.mulf %109, %110 : vector<8x8xf32>
    %112 = arith.addf %105, %111 : vector<8x8xf32>
    %113 = vector.extract_strided_slice %38 {offsets = [0, 16], sizes = [8, 16], strides = [1, 1]} : vector<16x128xf32> to vector<8x16xf32>
    %114 = vector.extract_strided_slice %38 {offsets = [0, 48], sizes = [8, 16], strides = [1, 1]} : vector<16x128xf32> to vector<8x16xf32>
    %cst_40 = arith.constant dense<0.000000e+00> : vector<8x8xf32>
    %115 = tpu.matmul %113, %114, %cst_40 {dimension_numbers = #tpu.dot_dimension_numbers<[1], [1], [0], [0], [0, 0, 1, 0], [], []>} : vector<8x16xf32>, vector<8x16xf32>, vector<8x8xf32> -> vector<8x8xf32>
    %cst_41 = arith.constant 2.500000e-01 : f32
    %116 = vector.broadcast %cst_41 : f32 to vector<8x8xf32>
    %117 = arith.mulf %115, %116 : vector<8x8xf32>
    %cst_42 = arith.constant 0.000000e+00 : f32
    %118 = vector.broadcast %cst_42 : f32 to vector<1x8xf32>
    %119 = arith.cmpf oeq, %49, %118 : vector<1x8xf32>
    %cst_43 = arith.constant -1.000000e+09 : f32
    %120 = vector.shape_cast %119 : vector<1x8xi1> to vector<1x8xi1>
    %121 = vector.broadcast %120 : vector<1x8xi1> to vector<8x8xi1>
    %122 = vector.broadcast %cst_43 : f32 to vector<8x8xf32>
    %123 = arith.select %121, %122, %117 : vector<8x8xi1>, vector<8x8xf32>
    %cst_44 = arith.constant dense<0xFF800000> : vector<8xf32>
    %124 = vector.multi_reduction <maximumf>, %123, %cst_44 [1] : vector<8x8xf32> to vector<8xf32>
    %cst_45 = arith.constant 0xFF800000 : f32
    %125 = vector.broadcast %cst_45 : f32 to vector<8xf32>
    %126 = arith.maximumf %125, %124 : vector<8xf32>
    %127 = vector.shape_cast %126 : vector<8xf32> to vector<8x1xf32>
    %128 = vector.broadcast %127 : vector<8x1xf32> to vector<8x8xf32>
    %129 = arith.subf %123, %128 : vector<8x8xf32>
    %130 = math.exp %129 : vector<8x8xf32>
    %cst_46 = arith.constant dense<0.000000e+00> : vector<8xf32>
    %131 = vector.multi_reduction <add>, %130, %cst_46 [1] : vector<8x8xf32> to vector<8xf32>
    %132 = vector.shape_cast %131 : vector<8xf32> to vector<8x1xf32>
    %133 = vector.broadcast %132 : vector<8x1xf32> to vector<8x8xf32>
    %134 = arith.divf %130, %133 : vector<8x8xf32>
    %135 = vector.extract_strided_slice %41 {offsets = [0, 16], sizes = [1, 16], strides = [1, 1]} : vector<2x128xf32> to vector<1x16xf32>
    %136 = vector.extract_strided_slice %41 {offsets = [0, 48], sizes = [1, 16], strides = [1, 1]} : vector<2x128xf32> to vector<1x16xf32>
    %137 = arith.mulf %135, %136 : vector<1x16xf32>
    %cst_47 = arith.constant dense<0.000000e+00> : vector<1xf32>
    %138 = vector.multi_reduction <add>, %137, %cst_47 [1] : vector<1x16xf32> to vector<1xf32>
    %139 = vector.shape_cast %138 : vector<1xf32> to vector<1x1xf32>
    %cst_48 = arith.constant 2.500000e-01 : f32
    %140 = vector.broadcast %cst_48 : f32 to vector<1x1xf32>
    %141 = arith.mulf %139, %140 : vector<1x1xf32>
    %142 = arith.negf %141 : vector<1x1xf32>
    %143 = math.exp %142 : vector<1x1xf32>
    %cst_49 = arith.constant 1.000000e+00 : f32
    %144 = vector.broadcast %cst_49 : f32 to vector<1x1xf32>
    %145 = arith.addf %144, %143 : vector<1x1xf32>
    %146 = arith.divf %144, %145 : vector<1x1xf32>
    %147 = vector.broadcast %146 : vector<1x1xf32> to vector<1x8xf32>
    %148 = arith.mulf %147, %49 : vector<1x8xf32>
    %149 = vector.extract_strided_slice %38 {offsets = [0, 65], sizes = [8, 1], strides = [1, 1]} : vector<16x128xf32> to vector<8x1xf32>
    %150 = vector.extract_strided_slice %41 {offsets = [0, 65], sizes = [1, 1], strides = [1, 1]} : vector<2x128xf32> to vector<1x1xf32>
    %151 = vector.broadcast %150 : vector<1x1xf32> to vector<8x1xf32>
    %152 = arith.addf %149, %151 : vector<8x1xf32>
    %153 = arith.negf %152 : vector<8x1xf32>
    %154 = math.exp %153 : vector<8x1xf32>
    %cst_50 = arith.constant 1.000000e+00 : f32
    %155 = vector.broadcast %cst_50 : f32 to vector<8x1xf32>
    %156 = arith.addf %155, %154 : vector<8x1xf32>
    %157 = arith.divf %155, %156 : vector<8x1xf32>
    %158 = vector.extract_strided_slice %38 {offsets = [0, 67], sizes = [8, 1], strides = [1, 1]} : vector<16x128xf32> to vector<8x1xf32>
    %159 = vector.extract_strided_slice %41 {offsets = [0, 67], sizes = [1, 1], strides = [1, 1]} : vector<2x128xf32> to vector<1x1xf32>
    %160 = vector.broadcast %159 : vector<1x1xf32> to vector<8x1xf32>
    %161 = arith.addf %158, %160 : vector<8x1xf32>
    %162 = arith.negf %161 : vector<8x1xf32>
    %163 = math.exp %162 : vector<8x1xf32>
    %cst_51 = arith.constant 1.000000e+00 : f32
    %164 = vector.broadcast %cst_51 : f32 to vector<8x1xf32>
    %165 = arith.addf %164, %163 : vector<8x1xf32>
    %166 = arith.divf %164, %165 : vector<8x1xf32>
    %167 = arith.addf %112, %134 : vector<8x8xf32>
    %168 = arith.addf %157, %166 : vector<8x1xf32>
    %cst_52 = arith.constant 1.000000e+00 : f32
    %169 = vector.broadcast %cst_52 : f32 to vector<8x1xf32>
    %170 = arith.subf %169, %168 : vector<8x1xf32>
    %171 = vector.broadcast %170 : vector<8x1xf32> to vector<8x8xf32>
    %172 = vector.broadcast %148 : vector<1x8xf32> to vector<8x8xf32>
    %173 = arith.mulf %171, %172 : vector<8x8xf32>
    %174 = arith.addf %167, %173 : vector<8x8xf32>
    %175 = vector.extract_strided_slice %174 {offsets = [0, 0], sizes = [1, 8], strides = [1, 1]} : vector<8x8xf32> to vector<1x8xf32>
    %176 = vector.extract_strided_slice %174 {offsets = [1, 0], sizes = [1, 8], strides = [1, 1]} : vector<8x8xf32> to vector<1x8xf32>
    %177 = vector.extract_strided_slice %174 {offsets = [2, 0], sizes = [1, 8], strides = [1, 1]} : vector<8x8xf32> to vector<1x8xf32>
    %178 = vector.extract_strided_slice %174 {offsets = [3, 0], sizes = [1, 8], strides = [1, 1]} : vector<8x8xf32> to vector<1x8xf32>
    %179 = vector.extract_strided_slice %174 {offsets = [4, 0], sizes = [1, 8], strides = [1, 1]} : vector<8x8xf32> to vector<1x8xf32>
    %180 = vector.extract_strided_slice %174 {offsets = [5, 0], sizes = [1, 8], strides = [1, 1]} : vector<8x8xf32> to vector<1x8xf32>
    %181 = vector.extract_strided_slice %174 {offsets = [6, 0], sizes = [1, 8], strides = [1, 1]} : vector<8x8xf32> to vector<1x8xf32>
    %182 = vector.extract_strided_slice %174 {offsets = [7, 0], sizes = [1, 8], strides = [1, 1]} : vector<8x8xf32> to vector<1x8xf32>
    %183 = tpu.concatenate %175, %176, %177, %178, %179, %180, %181, %182 in 1 : vector<1x8xf32>, vector<1x8xf32>, vector<1x8xf32>, vector<1x8xf32>, vector<1x8xf32>, vector<1x8xf32>, vector<1x8xf32>, vector<1x8xf32> -> vector<1x64xf32>
    %184 = vector.extract_strided_slice %174 {offsets = [0, 0], sizes = [8, 1], strides = [1, 1]} : vector<8x8xf32> to vector<8x1xf32>
    %185 = vector.extract_strided_slice %174 {offsets = [0, 1], sizes = [8, 1], strides = [1, 1]} : vector<8x8xf32> to vector<8x1xf32>
    %186 = vector.extract_strided_slice %174 {offsets = [0, 2], sizes = [8, 1], strides = [1, 1]} : vector<8x8xf32> to vector<8x1xf32>
    %187 = vector.extract_strided_slice %174 {offsets = [0, 3], sizes = [8, 1], strides = [1, 1]} : vector<8x8xf32> to vector<8x1xf32>
    %188 = vector.extract_strided_slice %174 {offsets = [0, 4], sizes = [8, 1], strides = [1, 1]} : vector<8x8xf32> to vector<8x1xf32>
    %189 = vector.extract_strided_slice %174 {offsets = [0, 5], sizes = [8, 1], strides = [1, 1]} : vector<8x8xf32> to vector<8x1xf32>
    %190 = vector.extract_strided_slice %174 {offsets = [0, 6], sizes = [8, 1], strides = [1, 1]} : vector<8x8xf32> to vector<8x1xf32>
    %191 = vector.extract_strided_slice %174 {offsets = [0, 7], sizes = [8, 1], strides = [1, 1]} : vector<8x8xf32> to vector<8x1xf32>
    %192 = tpu.concatenate %184, %185, %186, %187, %188, %189, %190, %191 in 0 : vector<8x1xf32>, vector<8x1xf32>, vector<8x1xf32>, vector<8x1xf32>, vector<8x1xf32>, vector<8x1xf32>, vector<8x1xf32>, vector<8x1xf32> -> vector<64x1xf32>
    %193 = vector.broadcast %183 : vector<1x64xf32> to vector<64x64xf32>
    %194 = vector.broadcast %192 : vector<64x1xf32> to vector<64x64xf32>
    %195 = arith.cmpf oge, %193, %194 : vector<64x64xf32>
    %196 = arith.extui %195 : vector<64x64xi1> to vector<64x64xi32>
    %197 = arith.sitofp %196 : vector<64x64xi32> to vector<64x64xf32>
    %cst_53 = arith.constant dense<0.000000e+00> : vector<64xf32>
    %198 = vector.multi_reduction <add>, %197, %cst_53 [1] : vector<64x64xf32> to vector<64xf32>
    %199 = vector.shape_cast %198 : vector<64xf32> to vector<64x1xf32>
    %cst_54 = arith.constant 4.000000e+00 : f32
    %200 = vector.broadcast %cst_54 : f32 to vector<64x1xf32>
    %201 = arith.cmpf oge, %199, %200 : vector<64x1xf32>
    %cst_55 = arith.constant -1.000000e+30 : f32
    %202 = vector.broadcast %cst_55 : f32 to vector<64x1xf32>
    %203 = arith.select %201, %192, %202 : vector<64x1xi1>, vector<64x1xf32>
    %cst_56 = arith.constant dense<0xFF800000> : vector<1xf32>
    %204 = vector.multi_reduction <maximumf>, %203, %cst_56 [0] : vector<64x1xf32> to vector<1xf32>
    %205 = vector.shape_cast %204 : vector<1xf32> to vector<1x1xf32>
    %206 = vector.broadcast %205 : vector<1x1xf32> to vector<8x8xf32>
    %207 = arith.cmpf oge, %174, %206 : vector<8x8xf32>
    %208 = arith.extui %207 : vector<8x8xi1> to vector<8x8xi32>
    %209 = arith.sitofp %208 : vector<8x8xi32> to vector<8x8xf32>
    %210 = tpu.transpose %209, [1, 0] : vector<8x8xf32> -> vector<8x8xf32>
    %211 = arith.addf %209, %210 : vector<8x8xf32>
    %cst_57 = arith.constant 1.000000e+00 : f32
    %212 = vector.broadcast %cst_57 : f32 to vector<8x8xf32>
    %213 = arith.subf %212, %46 : vector<8x8xf32>
    %214 = arith.mulf %211, %213 : vector<8x8xf32>
    %215 = arith.addf %214, %46 : vector<8x8xf32>
    %216 = arith.mulf %215, %209 : vector<8x8xf32>
    %cst_58 = arith.constant dense<0.000000e+00> : vector<8xf32>
    %217 = vector.multi_reduction <add>, %48, %cst_58 [1] : vector<8x8xf32> to vector<8xf32>
    %218 = vector.shape_cast %217 : vector<8xf32> to vector<8x1xf32>
    %cst_59 = arith.constant 1.000000e+00 : f32
    %219 = vector.broadcast %cst_59 : f32 to vector<8x1xf32>
    %220 = arith.addf %218, %219 : vector<8x1xf32>
    %cst_60 = arith.constant dense<0.000000e+00> : vector<8x32xf32>
    %221 = tpu.matmul %48, %47, %cst_60 {dimension_numbers = #tpu.dot_dimension_numbers<[1], [0], [0], [1], [0, 0, 1, 1], [], []>} : vector<8x8xf32>, vector<8x32xf32>, vector<8x32xf32> -> vector<8x32xf32>
    %cst_61 = arith.constant dense<0.000000e+00> : vector<8x32xf32>
    %222 = tpu.matmul %216, %47, %cst_61 {dimension_numbers = #tpu.dot_dimension_numbers<[1], [0], [0], [1], [0, 0, 1, 1], [], []>} : vector<8x8xf32>, vector<8x32xf32>, vector<8x32xf32> -> vector<8x32xf32>
    %223 = vector.extract_strided_slice %0 {offsets = [8, 0], sizes = [8, 32], strides = [1, 1]} : vector<16x32xf32> to vector<8x32xf32>
    %224 = vector.extract_strided_slice %1 {offsets = [8, 0], sizes = [8, 8], strides = [1, 1]} : vector<16x8xf32> to vector<8x8xf32>
    %225 = vector.extract_strided_slice %3 {offsets = [1, 0], sizes = [1, 8], strides = [1, 1]} : vector<2x8xf32> to vector<1x8xf32>
    %cst_62 = arith.constant 0.000000e+00 : f32
    %226 = vector.broadcast %cst_62 : f32 to vector<8x8xf32>
    %227 = vector.extract_strided_slice %38 {offsets = [8, 0], sizes = [8, 16], strides = [1, 1]} : vector<16x128xf32> to vector<8x16xf32>
    %228 = vector.extract_strided_slice %38 {offsets = [8, 32], sizes = [8, 16], strides = [1, 1]} : vector<16x128xf32> to vector<8x16xf32>
    %cst_63 = arith.constant dense<0.000000e+00> : vector<8x8xf32>
    %229 = tpu.matmul %227, %228, %cst_63 {dimension_numbers = #tpu.dot_dimension_numbers<[1], [1], [0], [0], [0, 0, 1, 0], [], []>} : vector<8x16xf32>, vector<8x16xf32>, vector<8x8xf32> -> vector<8x8xf32>
    %cst_64 = arith.constant 2.500000e-01 : f32
    %230 = vector.broadcast %cst_64 : f32 to vector<8x8xf32>
    %231 = arith.mulf %229, %230 : vector<8x8xf32>
    %cst_65 = arith.constant 0.000000e+00 : f32
    %232 = vector.broadcast %cst_65 : f32 to vector<1x8xf32>
    %233 = arith.cmpf oeq, %225, %232 : vector<1x8xf32>
    %cst_66 = arith.constant -1.000000e+09 : f32
    %234 = vector.shape_cast %233 : vector<1x8xi1> to vector<1x8xi1>
    %235 = vector.broadcast %234 : vector<1x8xi1> to vector<8x8xi1>
    %236 = vector.broadcast %cst_66 : f32 to vector<8x8xf32>
    %237 = arith.select %235, %236, %231 : vector<8x8xi1>, vector<8x8xf32>
    %cst_67 = arith.constant dense<0xFF800000> : vector<8xf32>
    %238 = vector.multi_reduction <maximumf>, %237, %cst_67 [1] : vector<8x8xf32> to vector<8xf32>
    %cst_68 = arith.constant 0xFF800000 : f32
    %239 = vector.broadcast %cst_68 : f32 to vector<8xf32>
    %240 = arith.maximumf %239, %238 : vector<8xf32>
    %241 = vector.shape_cast %240 : vector<8xf32> to vector<8x1xf32>
    %242 = vector.broadcast %241 : vector<8x1xf32> to vector<8x8xf32>
    %243 = arith.subf %237, %242 : vector<8x8xf32>
    %244 = math.exp %243 : vector<8x8xf32>
    %cst_69 = arith.constant dense<0.000000e+00> : vector<8xf32>
    %245 = vector.multi_reduction <add>, %244, %cst_69 [1] : vector<8x8xf32> to vector<8xf32>
    %246 = vector.shape_cast %245 : vector<8xf32> to vector<8x1xf32>
    %247 = vector.broadcast %246 : vector<8x1xf32> to vector<8x8xf32>
    %248 = arith.divf %244, %247 : vector<8x8xf32>
    %249 = vector.extract_strided_slice %41 {offsets = [1, 0], sizes = [1, 16], strides = [1, 1]} : vector<2x128xf32> to vector<1x16xf32>
    %250 = vector.extract_strided_slice %41 {offsets = [1, 32], sizes = [1, 16], strides = [1, 1]} : vector<2x128xf32> to vector<1x16xf32>
    %251 = arith.mulf %249, %250 : vector<1x16xf32>
    %cst_70 = arith.constant dense<0.000000e+00> : vector<1xf32>
    %252 = vector.multi_reduction <add>, %251, %cst_70 [1] : vector<1x16xf32> to vector<1xf32>
    %253 = vector.shape_cast %252 : vector<1xf32> to vector<1x1xf32>
    %cst_71 = arith.constant 2.500000e-01 : f32
    %254 = vector.broadcast %cst_71 : f32 to vector<1x1xf32>
    %255 = arith.mulf %253, %254 : vector<1x1xf32>
    %256 = arith.negf %255 : vector<1x1xf32>
    %257 = math.exp %256 : vector<1x1xf32>
    %cst_72 = arith.constant 1.000000e+00 : f32
    %258 = vector.broadcast %cst_72 : f32 to vector<1x1xf32>
    %259 = arith.addf %258, %257 : vector<1x1xf32>
    %260 = arith.divf %258, %259 : vector<1x1xf32>
    %261 = vector.broadcast %260 : vector<1x1xf32> to vector<1x8xf32>
    %262 = arith.mulf %261, %225 : vector<1x8xf32>
    %263 = vector.extract_strided_slice %38 {offsets = [8, 64], sizes = [8, 1], strides = [1, 1]} : vector<16x128xf32> to vector<8x1xf32>
    %264 = vector.extract_strided_slice %41 {offsets = [1, 64], sizes = [1, 1], strides = [1, 1]} : vector<2x128xf32> to vector<1x1xf32>
    %265 = vector.broadcast %264 : vector<1x1xf32> to vector<8x1xf32>
    %266 = arith.addf %263, %265 : vector<8x1xf32>
    %267 = arith.negf %266 : vector<8x1xf32>
    %268 = math.exp %267 : vector<8x1xf32>
    %cst_73 = arith.constant 1.000000e+00 : f32
    %269 = vector.broadcast %cst_73 : f32 to vector<8x1xf32>
    %270 = arith.addf %269, %268 : vector<8x1xf32>
    %271 = arith.divf %269, %270 : vector<8x1xf32>
    %272 = vector.extract_strided_slice %38 {offsets = [8, 66], sizes = [8, 1], strides = [1, 1]} : vector<16x128xf32> to vector<8x1xf32>
    %273 = vector.extract_strided_slice %41 {offsets = [1, 66], sizes = [1, 1], strides = [1, 1]} : vector<2x128xf32> to vector<1x1xf32>
    %274 = vector.broadcast %273 : vector<1x1xf32> to vector<8x1xf32>
    %275 = arith.addf %272, %274 : vector<8x1xf32>
    %276 = arith.negf %275 : vector<8x1xf32>
    %277 = math.exp %276 : vector<8x1xf32>
    %cst_74 = arith.constant 1.000000e+00 : f32
    %278 = vector.broadcast %cst_74 : f32 to vector<8x1xf32>
    %279 = arith.addf %278, %277 : vector<8x1xf32>
    %280 = arith.divf %278, %279 : vector<8x1xf32>
    %281 = arith.addf %226, %248 : vector<8x8xf32>
    %282 = arith.addf %271, %280 : vector<8x1xf32>
    %cst_75 = arith.constant 1.000000e+00 : f32
    %283 = vector.broadcast %cst_75 : f32 to vector<8x1xf32>
    %284 = arith.subf %283, %282 : vector<8x1xf32>
    %285 = vector.broadcast %284 : vector<8x1xf32> to vector<8x8xf32>
    %286 = vector.broadcast %262 : vector<1x8xf32> to vector<8x8xf32>
    %287 = arith.mulf %285, %286 : vector<8x8xf32>
    %288 = arith.addf %281, %287 : vector<8x8xf32>
    %289 = vector.extract_strided_slice %38 {offsets = [8, 16], sizes = [8, 16], strides = [1, 1]} : vector<16x128xf32> to vector<8x16xf32>
    %290 = vector.extract_strided_slice %38 {offsets = [8, 48], sizes = [8, 16], strides = [1, 1]} : vector<16x128xf32> to vector<8x16xf32>
    %cst_76 = arith.constant dense<0.000000e+00> : vector<8x8xf32>
    %291 = tpu.matmul %289, %290, %cst_76 {dimension_numbers = #tpu.dot_dimension_numbers<[1], [1], [0], [0], [0, 0, 1, 0], [], []>} : vector<8x16xf32>, vector<8x16xf32>, vector<8x8xf32> -> vector<8x8xf32>
    %cst_77 = arith.constant 2.500000e-01 : f32
    %292 = vector.broadcast %cst_77 : f32 to vector<8x8xf32>
    %293 = arith.mulf %291, %292 : vector<8x8xf32>
    %cst_78 = arith.constant 0.000000e+00 : f32
    %294 = vector.broadcast %cst_78 : f32 to vector<1x8xf32>
    %295 = arith.cmpf oeq, %225, %294 : vector<1x8xf32>
    %cst_79 = arith.constant -1.000000e+09 : f32
    %296 = vector.shape_cast %295 : vector<1x8xi1> to vector<1x8xi1>
    %297 = vector.broadcast %296 : vector<1x8xi1> to vector<8x8xi1>
    %298 = vector.broadcast %cst_79 : f32 to vector<8x8xf32>
    %299 = arith.select %297, %298, %293 : vector<8x8xi1>, vector<8x8xf32>
    %cst_80 = arith.constant dense<0xFF800000> : vector<8xf32>
    %300 = vector.multi_reduction <maximumf>, %299, %cst_80 [1] : vector<8x8xf32> to vector<8xf32>
    %cst_81 = arith.constant 0xFF800000 : f32
    %301 = vector.broadcast %cst_81 : f32 to vector<8xf32>
    %302 = arith.maximumf %301, %300 : vector<8xf32>
    %303 = vector.shape_cast %302 : vector<8xf32> to vector<8x1xf32>
    %304 = vector.broadcast %303 : vector<8x1xf32> to vector<8x8xf32>
    %305 = arith.subf %299, %304 : vector<8x8xf32>
    %306 = math.exp %305 : vector<8x8xf32>
    %cst_82 = arith.constant dense<0.000000e+00> : vector<8xf32>
    %307 = vector.multi_reduction <add>, %306, %cst_82 [1] : vector<8x8xf32> to vector<8xf32>
    %308 = vector.shape_cast %307 : vector<8xf32> to vector<8x1xf32>
    %309 = vector.broadcast %308 : vector<8x1xf32> to vector<8x8xf32>
    %310 = arith.divf %306, %309 : vector<8x8xf32>
    %311 = vector.extract_strided_slice %41 {offsets = [1, 16], sizes = [1, 16], strides = [1, 1]} : vector<2x128xf32> to vector<1x16xf32>
    %312 = vector.extract_strided_slice %41 {offsets = [1, 48], sizes = [1, 16], strides = [1, 1]} : vector<2x128xf32> to vector<1x16xf32>
    %313 = arith.mulf %311, %312 : vector<1x16xf32>
    %cst_83 = arith.constant dense<0.000000e+00> : vector<1xf32>
    %314 = vector.multi_reduction <add>, %313, %cst_83 [1] : vector<1x16xf32> to vector<1xf32>
    %315 = vector.shape_cast %314 : vector<1xf32> to vector<1x1xf32>
    %cst_84 = arith.constant 2.500000e-01 : f32
    %316 = vector.broadcast %cst_84 : f32 to vector<1x1xf32>
    %317 = arith.mulf %315, %316 : vector<1x1xf32>
    %318 = arith.negf %317 : vector<1x1xf32>
    %319 = math.exp %318 : vector<1x1xf32>
    %cst_85 = arith.constant 1.000000e+00 : f32
    %320 = vector.broadcast %cst_85 : f32 to vector<1x1xf32>
    %321 = arith.addf %320, %319 : vector<1x1xf32>
    %322 = arith.divf %320, %321 : vector<1x1xf32>
    %323 = vector.broadcast %322 : vector<1x1xf32> to vector<1x8xf32>
    %324 = arith.mulf %323, %225 : vector<1x8xf32>
    %325 = vector.extract_strided_slice %38 {offsets = [8, 65], sizes = [8, 1], strides = [1, 1]} : vector<16x128xf32> to vector<8x1xf32>
    %326 = vector.extract_strided_slice %41 {offsets = [1, 65], sizes = [1, 1], strides = [1, 1]} : vector<2x128xf32> to vector<1x1xf32>
    %327 = vector.broadcast %326 : vector<1x1xf32> to vector<8x1xf32>
    %328 = arith.addf %325, %327 : vector<8x1xf32>
    %329 = arith.negf %328 : vector<8x1xf32>
    %330 = math.exp %329 : vector<8x1xf32>
    %cst_86 = arith.constant 1.000000e+00 : f32
    %331 = vector.broadcast %cst_86 : f32 to vector<8x1xf32>
    %332 = arith.addf %331, %330 : vector<8x1xf32>
    %333 = arith.divf %331, %332 : vector<8x1xf32>
    %334 = vector.extract_strided_slice %38 {offsets = [8, 67], sizes = [8, 1], strides = [1, 1]} : vector<16x128xf32> to vector<8x1xf32>
    %335 = vector.extract_strided_slice %41 {offsets = [1, 67], sizes = [1, 1], strides = [1, 1]} : vector<2x128xf32> to vector<1x1xf32>
    %336 = vector.broadcast %335 : vector<1x1xf32> to vector<8x1xf32>
    %337 = arith.addf %334, %336 : vector<8x1xf32>
    %338 = arith.negf %337 : vector<8x1xf32>
    %339 = math.exp %338 : vector<8x1xf32>
    %cst_87 = arith.constant 1.000000e+00 : f32
    %340 = vector.broadcast %cst_87 : f32 to vector<8x1xf32>
    %341 = arith.addf %340, %339 : vector<8x1xf32>
    %342 = arith.divf %340, %341 : vector<8x1xf32>
    %343 = arith.addf %288, %310 : vector<8x8xf32>
    %344 = arith.addf %333, %342 : vector<8x1xf32>
    %cst_88 = arith.constant 1.000000e+00 : f32
    %345 = vector.broadcast %cst_88 : f32 to vector<8x1xf32>
    %346 = arith.subf %345, %344 : vector<8x1xf32>
    %347 = vector.broadcast %346 : vector<8x1xf32> to vector<8x8xf32>
    %348 = vector.broadcast %324 : vector<1x8xf32> to vector<8x8xf32>
    %349 = arith.mulf %347, %348 : vector<8x8xf32>
    %350 = arith.addf %343, %349 : vector<8x8xf32>
    %351 = vector.extract_strided_slice %350 {offsets = [0, 0], sizes = [1, 8], strides = [1, 1]} : vector<8x8xf32> to vector<1x8xf32>
    %352 = vector.extract_strided_slice %350 {offsets = [1, 0], sizes = [1, 8], strides = [1, 1]} : vector<8x8xf32> to vector<1x8xf32>
    %353 = vector.extract_strided_slice %350 {offsets = [2, 0], sizes = [1, 8], strides = [1, 1]} : vector<8x8xf32> to vector<1x8xf32>
    %354 = vector.extract_strided_slice %350 {offsets = [3, 0], sizes = [1, 8], strides = [1, 1]} : vector<8x8xf32> to vector<1x8xf32>
    %355 = vector.extract_strided_slice %350 {offsets = [4, 0], sizes = [1, 8], strides = [1, 1]} : vector<8x8xf32> to vector<1x8xf32>
    %356 = vector.extract_strided_slice %350 {offsets = [5, 0], sizes = [1, 8], strides = [1, 1]} : vector<8x8xf32> to vector<1x8xf32>
    %357 = vector.extract_strided_slice %350 {offsets = [6, 0], sizes = [1, 8], strides = [1, 1]} : vector<8x8xf32> to vector<1x8xf32>
    %358 = vector.extract_strided_slice %350 {offsets = [7, 0], sizes = [1, 8], strides = [1, 1]} : vector<8x8xf32> to vector<1x8xf32>
    %359 = tpu.concatenate %351, %352, %353, %354, %355, %356, %357, %358 in 1 : vector<1x8xf32>, vector<1x8xf32>, vector<1x8xf32>, vector<1x8xf32>, vector<1x8xf32>, vector<1x8xf32>, vector<1x8xf32>, vector<1x8xf32> -> vector<1x64xf32>
    %360 = vector.extract_strided_slice %350 {offsets = [0, 0], sizes = [8, 1], strides = [1, 1]} : vector<8x8xf32> to vector<8x1xf32>
    %361 = vector.extract_strided_slice %350 {offsets = [0, 1], sizes = [8, 1], strides = [1, 1]} : vector<8x8xf32> to vector<8x1xf32>
    %362 = vector.extract_strided_slice %350 {offsets = [0, 2], sizes = [8, 1], strides = [1, 1]} : vector<8x8xf32> to vector<8x1xf32>
    %363 = vector.extract_strided_slice %350 {offsets = [0, 3], sizes = [8, 1], strides = [1, 1]} : vector<8x8xf32> to vector<8x1xf32>
    %364 = vector.extract_strided_slice %350 {offsets = [0, 4], sizes = [8, 1], strides = [1, 1]} : vector<8x8xf32> to vector<8x1xf32>
    %365 = vector.extract_strided_slice %350 {offsets = [0, 5], sizes = [8, 1], strides = [1, 1]} : vector<8x8xf32> to vector<8x1xf32>
    %366 = vector.extract_strided_slice %350 {offsets = [0, 6], sizes = [8, 1], strides = [1, 1]} : vector<8x8xf32> to vector<8x1xf32>
    %367 = vector.extract_strided_slice %350 {offsets = [0, 7], sizes = [8, 1], strides = [1, 1]} : vector<8x8xf32> to vector<8x1xf32>
    %368 = tpu.concatenate %360, %361, %362, %363, %364, %365, %366, %367 in 0 : vector<8x1xf32>, vector<8x1xf32>, vector<8x1xf32>, vector<8x1xf32>, vector<8x1xf32>, vector<8x1xf32>, vector<8x1xf32>, vector<8x1xf32> -> vector<64x1xf32>
    %369 = vector.broadcast %359 : vector<1x64xf32> to vector<64x64xf32>
    %370 = vector.broadcast %368 : vector<64x1xf32> to vector<64x64xf32>
    %371 = arith.cmpf oge, %369, %370 : vector<64x64xf32>
    %372 = arith.extui %371 : vector<64x64xi1> to vector<64x64xi32>
    %373 = arith.sitofp %372 : vector<64x64xi32> to vector<64x64xf32>
    %cst_89 = arith.constant dense<0.000000e+00> : vector<64xf32>
    %374 = vector.multi_reduction <add>, %373, %cst_89 [1] : vector<64x64xf32> to vector<64xf32>
    %375 = vector.shape_cast %374 : vector<64xf32> to vector<64x1xf32>
    %cst_90 = arith.constant 4.000000e+00 : f32
    %376 = vector.broadcast %cst_90 : f32 to vector<64x1xf32>
    %377 = arith.cmpf oge, %375, %376 : vector<64x1xf32>
    %cst_91 = arith.constant -1.000000e+30 : f32
    %378 = vector.broadcast %cst_91 : f32 to vector<64x1xf32>
    %379 = arith.select %377, %368, %378 : vector<64x1xi1>, vector<64x1xf32>
    %cst_92 = arith.constant dense<0xFF800000> : vector<1xf32>
    %380 = vector.multi_reduction <maximumf>, %379, %cst_92 [0] : vector<64x1xf32> to vector<1xf32>
    %381 = vector.shape_cast %380 : vector<1xf32> to vector<1x1xf32>
    %382 = vector.broadcast %381 : vector<1x1xf32> to vector<8x8xf32>
    %383 = arith.cmpf oge, %350, %382 : vector<8x8xf32>
    %384 = arith.extui %383 : vector<8x8xi1> to vector<8x8xi32>
    %385 = arith.sitofp %384 : vector<8x8xi32> to vector<8x8xf32>
    %386 = tpu.transpose %385, [1, 0] : vector<8x8xf32> -> vector<8x8xf32>
    %387 = arith.addf %385, %386 : vector<8x8xf32>
    %cst_93 = arith.constant 1.000000e+00 : f32
    %388 = vector.broadcast %cst_93 : f32 to vector<8x8xf32>
    %389 = arith.subf %388, %46 : vector<8x8xf32>
    %390 = arith.mulf %387, %389 : vector<8x8xf32>
    %391 = arith.addf %390, %46 : vector<8x8xf32>
    %392 = arith.mulf %391, %385 : vector<8x8xf32>
    %cst_94 = arith.constant dense<0.000000e+00> : vector<8xf32>
    %393 = vector.multi_reduction <add>, %224, %cst_94 [1] : vector<8x8xf32> to vector<8xf32>
    %394 = vector.shape_cast %393 : vector<8xf32> to vector<8x1xf32>
    %cst_95 = arith.constant 1.000000e+00 : f32
    %395 = vector.broadcast %cst_95 : f32 to vector<8x1xf32>
    %396 = arith.addf %394, %395 : vector<8x1xf32>
    %cst_96 = arith.constant dense<0.000000e+00> : vector<8x32xf32>
    %397 = tpu.matmul %224, %223, %cst_96 {dimension_numbers = #tpu.dot_dimension_numbers<[1], [0], [0], [1], [0, 0, 1, 1], [], []>} : vector<8x8xf32>, vector<8x32xf32>, vector<8x32xf32> -> vector<8x32xf32>
    %cst_97 = arith.constant dense<0.000000e+00> : vector<8x32xf32>
    %398 = tpu.matmul %392, %223, %cst_97 {dimension_numbers = #tpu.dot_dimension_numbers<[1], [0], [0], [1], [0, 0, 1, 1], [], []>} : vector<8x8xf32>, vector<8x32xf32>, vector<8x32xf32> -> vector<8x32xf32>
    %399 = tpu.concatenate %221, %397 in 0 : vector<8x32xf32>, vector<8x32xf32> -> vector<16x32xf32>
    %400 = tpu.concatenate %222, %398 in 0 : vector<8x32xf32>, vector<8x32xf32> -> vector<16x32xf32>
    %401 = tpu.concatenate %220, %396 in 0 : vector<8x1xf32>, vector<8x1xf32> -> vector<16x1xf32>
    %cst_98 = arith.constant dense<0.000000e+00> : vector<16x128xf32>
    %402 = tpu.matmul %399, %10, %cst_98 {dimension_numbers = #tpu.dot_dimension_numbers<[1], [0], [0], [1], [0, 0, 1, 1], [], []>} : vector<16x32xf32>, vector<32x128xf32>, vector<16x128xf32> -> vector<16x128xf32>
    %cst_99 = arith.constant dense<0.000000e+00> : vector<16x128xf32>
    %403 = tpu.matmul %400, %11, %cst_99 {dimension_numbers = #tpu.dot_dimension_numbers<[1], [0], [0], [1], [0, 0, 1, 1], [], []>} : vector<16x32xf32>, vector<32x128xf32>, vector<16x128xf32> -> vector<16x128xf32>
    %404 = arith.addf %402, %403 : vector<16x128xf32>
    %405 = vector.broadcast %12 : vector<1x128xf32> to vector<16x128xf32>
    %406 = arith.addf %404, %405 : vector<16x128xf32>
    %407 = vector.broadcast %401 : vector<16x1xf32> to vector<16x128xf32>
    %408 = arith.divf %406, %407 : vector<16x128xf32>
    %cst_100 = arith.constant 0.000000e+00 : f32
    %409 = vector.broadcast %cst_100 : f32 to vector<16x128xf32>
    %410 = arith.maximumf %408, %409 : vector<16x128xf32>
    %cst_101 = arith.constant 0.000000e+00 : f32
    %411 = vector.broadcast %cst_101 : f32 to vector<1x1xf32>
    %cst_102 = arith.constant 0.000000e+00 : f32
    %412 = vector.broadcast %cst_102 : f32 to vector<1x1xf32>
    %413 = vector.extract_strided_slice %410 {offsets = [0, 0], sizes = [8, 128], strides = [1, 1]} : vector<16x128xf32> to vector<8x128xf32>
    %414 = arith.mulf %413, %413 : vector<8x128xf32>
    %cst_103 = arith.constant dense<0.000000e+00> : vector<128xf32>
    %415 = vector.multi_reduction <add>, %414, %cst_103 [0] : vector<8x128xf32> to vector<128xf32>
    %416 = vector.shape_cast %415 : vector<128xf32> to vector<1x128xf32>
    %417 = math.sqrt %416 : vector<1x128xf32>
    %cst_104 = arith.constant 9.99999996E-13 : f32
    %418 = vector.broadcast %cst_104 : f32 to vector<1x128xf32>
    %419 = arith.maximumf %417, %418 : vector<1x128xf32>
    %420 = vector.broadcast %419 : vector<1x128xf32> to vector<8x128xf32>
    %421 = arith.divf %413, %420 : vector<8x128xf32>
    %422 = vector.extract_strided_slice %421 {offsets = [0, 64], sizes = [8, 32], strides = [1, 1]} : vector<8x128xf32> to vector<8x32xf32>
    %423 = vector.extract_strided_slice %421 {offsets = [0, 0], sizes = [8, 32], strides = [1, 1]} : vector<8x128xf32> to vector<8x32xf32>
    %424 = arith.subf %422, %423 : vector<8x32xf32>
    %425 = vector.extract_strided_slice %421 {offsets = [0, 64], sizes = [8, 32], strides = [1, 1]} : vector<8x128xf32> to vector<8x32xf32>
    %426 = vector.extract_strided_slice %421 {offsets = [0, 32], sizes = [8, 32], strides = [1, 1]} : vector<8x128xf32> to vector<8x32xf32>
    %427 = arith.subf %425, %426 : vector<8x32xf32>
    %428 = arith.mulf %424, %424 : vector<8x32xf32>
    %cst_105 = arith.constant dense<0.000000e+00> : vector<8xf32>
    %429 = vector.multi_reduction <add>, %428, %cst_105 [1] : vector<8x32xf32> to vector<8xf32>
    %430 = vector.shape_cast %429 : vector<8xf32> to vector<8x1xf32>
    %cst_106 = arith.constant dense<0.000000e+00> : vector<1xf32>
    %431 = vector.multi_reduction <add>, %430, %cst_106 [0] : vector<8x1xf32> to vector<1xf32>
    %432 = vector.shape_cast %431 : vector<1xf32> to vector<1x1xf32>
    %433 = arith.addf %411, %432 : vector<1x1xf32>
    %434 = arith.mulf %427, %427 : vector<8x32xf32>
    %cst_107 = arith.constant dense<0.000000e+00> : vector<8xf32>
    %435 = vector.multi_reduction <add>, %434, %cst_107 [1] : vector<8x32xf32> to vector<8xf32>
    %436 = vector.shape_cast %435 : vector<8xf32> to vector<8x1xf32>
    %cst_108 = arith.constant dense<0.000000e+00> : vector<1xf32>
    %437 = vector.multi_reduction <add>, %436, %cst_108 [0] : vector<8x1xf32> to vector<1xf32>
    %438 = vector.shape_cast %437 : vector<1xf32> to vector<1x1xf32>
    %439 = arith.addf %412, %438 : vector<1x1xf32>
    %440 = vector.extract_strided_slice %410 {offsets = [8, 0], sizes = [8, 128], strides = [1, 1]} : vector<16x128xf32> to vector<8x128xf32>
    %441 = arith.mulf %440, %440 : vector<8x128xf32>
    %cst_109 = arith.constant dense<0.000000e+00> : vector<128xf32>
    %442 = vector.multi_reduction <add>, %441, %cst_109 [0] : vector<8x128xf32> to vector<128xf32>
    %443 = vector.shape_cast %442 : vector<128xf32> to vector<1x128xf32>
    %444 = math.sqrt %443 : vector<1x128xf32>
    %cst_110 = arith.constant 9.99999996E-13 : f32
    %445 = vector.broadcast %cst_110 : f32 to vector<1x128xf32>
    %446 = arith.maximumf %444, %445 : vector<1x128xf32>
    %447 = vector.broadcast %446 : vector<1x128xf32> to vector<8x128xf32>
    %448 = arith.divf %440, %447 : vector<8x128xf32>
    %449 = vector.extract_strided_slice %448 {offsets = [0, 64], sizes = [8, 32], strides = [1, 1]} : vector<8x128xf32> to vector<8x32xf32>
    %450 = vector.extract_strided_slice %448 {offsets = [0, 0], sizes = [8, 32], strides = [1, 1]} : vector<8x128xf32> to vector<8x32xf32>
    %451 = arith.subf %449, %450 : vector<8x32xf32>
    %452 = vector.extract_strided_slice %448 {offsets = [0, 64], sizes = [8, 32], strides = [1, 1]} : vector<8x128xf32> to vector<8x32xf32>
    %453 = vector.extract_strided_slice %448 {offsets = [0, 32], sizes = [8, 32], strides = [1, 1]} : vector<8x128xf32> to vector<8x32xf32>
    %454 = arith.subf %452, %453 : vector<8x32xf32>
    %455 = arith.mulf %451, %451 : vector<8x32xf32>
    %cst_111 = arith.constant dense<0.000000e+00> : vector<8xf32>
    %456 = vector.multi_reduction <add>, %455, %cst_111 [1] : vector<8x32xf32> to vector<8xf32>
    %457 = vector.shape_cast %456 : vector<8xf32> to vector<8x1xf32>
    %cst_112 = arith.constant dense<0.000000e+00> : vector<1xf32>
    %458 = vector.multi_reduction <add>, %457, %cst_112 [0] : vector<8x1xf32> to vector<1xf32>
    %459 = vector.shape_cast %458 : vector<1xf32> to vector<1x1xf32>
    %460 = arith.addf %433, %459 : vector<1x1xf32>
    %461 = arith.mulf %454, %454 : vector<8x32xf32>
    %cst_113 = arith.constant dense<0.000000e+00> : vector<8xf32>
    %462 = vector.multi_reduction <add>, %461, %cst_113 [1] : vector<8x32xf32> to vector<8xf32>
    %463 = vector.shape_cast %462 : vector<8xf32> to vector<8x1xf32>
    %cst_114 = arith.constant dense<0.000000e+00> : vector<1xf32>
    %464 = vector.multi_reduction <add>, %463, %cst_114 [0] : vector<8x1xf32> to vector<1xf32>
    %465 = vector.shape_cast %464 : vector<1xf32> to vector<1x1xf32>
    %466 = arith.addf %439, %465 : vector<1x1xf32>
    %cst_115 = arith.constant dense<0.000000e+00> : vector<2x128xf32>
    %467 = tpu.matmul %32, %410, %cst_115 {dimension_numbers = #tpu.dot_dimension_numbers<[1], [0], [0], [1], [0, 0, 1, 1], [], []>} : vector<2x16xf32>, vector<16x128xf32>, vector<2x128xf32> -> vector<2x128xf32>
    %468 = vector.broadcast %18 : vector<2x1xf32> to vector<2x128xf32>
    %469 = arith.divf %467, %468 : vector<2x128xf32>
    %470 = vector.extract_strided_slice %469 {offsets = [0, 0], sizes = [2, 96], strides = [1, 1]} : vector<2x128xf32> to vector<2x96xf32>
    %cst_116 = arith.constant dense<0.000000e+00> : vector<2x128xf32>
    %471 = tpu.matmul %470, %13, %cst_116 {dimension_numbers = #tpu.dot_dimension_numbers<[1], [0], [0], [1], [0, 0, 1, 1], [], []>} : vector<2x96xf32>, vector<96x128xf32>, vector<2x128xf32> -> vector<2x128xf32>
    %472 = vector.broadcast %14 : vector<1x128xf32> to vector<2x128xf32>
    %473 = arith.addf %471, %472 : vector<2x128xf32>
    %cst_117 = arith.constant 0.000000e+00 : f32
    %474 = vector.broadcast %cst_117 : f32 to vector<2x128xf32>
    %475 = arith.maximumf %473, %474 : vector<2x128xf32>
    %476 = vector.extract_strided_slice %475 {offsets = [0, 0], sizes = [2, 32], strides = [1, 1]} : vector<2x128xf32> to vector<2x32xf32>
    %477 = tpu.concatenate %476, %2 in 1 : vector<2x32xf32>, vector<2x32xf32> -> vector<2x64xf32>
    %cst_118 = arith.constant dense<0.000000e+00> : vector<2x128xf32>
    %478 = tpu.matmul %477, %15, %cst_118 {dimension_numbers = #tpu.dot_dimension_numbers<[1], [0], [0], [1], [0, 0, 1, 1], [], []>} : vector<2x64xf32>, vector<64x128xf32>, vector<2x128xf32> -> vector<2x128xf32>
    %479 = vector.broadcast %16 : vector<1x128xf32> to vector<2x128xf32>
    %480 = arith.addf %478, %479 : vector<2x128xf32>
    %481 = tpu.iota {dimensions = array<i32: 1>} : vector<2x128xi32>
    %482 = arith.fptosi %5 : vector<2x1xf32> to vector<2x1xi32>
    %483 = vector.broadcast %482 : vector<2x1xi32> to vector<2x128xi32>
    %484 = arith.cmpi eq, %481, %483 : vector<2x128xi32>
    %485 = arith.extui %484 : vector<2x128xi1> to vector<2x128xi32>
    %486 = arith.sitofp %485 : vector<2x128xi32> to vector<2x128xf32>
    %c3_i32 = arith.constant 3 : i32
    %487 = vector.broadcast %c3_i32 : i32 to vector<2x128xi32>
    %488 = arith.cmpi slt, %481, %487 : vector<2x128xi32>
    %cst_119 = arith.constant -1.000000e+30 : f32
    %489 = vector.broadcast %cst_119 : f32 to vector<2x128xf32>
    %490 = arith.select %488, %480, %489 : vector<2x128xi1>, vector<2x128xf32>
    %cst_120 = arith.constant dense<0xFF800000> : vector<2xf32>
    %491 = vector.multi_reduction <maximumf>, %490, %cst_120 [1] : vector<2x128xf32> to vector<2xf32>
    %492 = vector.shape_cast %491 : vector<2xf32> to vector<2x1xf32>
    %493 = vector.broadcast %492 : vector<2x1xf32> to vector<2x128xf32>
    %494 = arith.subf %490, %493 : vector<2x128xf32>
    %495 = math.exp %494 : vector<2x128xf32>
    %cst_121 = arith.constant dense<0.000000e+00> : vector<2xf32>
    %496 = vector.multi_reduction <add>, %495, %cst_121 [1] : vector<2x128xf32> to vector<2xf32>
    %497 = vector.shape_cast %496 : vector<2xf32> to vector<2x1xf32>
    %498 = math.log %497 : vector<2x1xf32>
    %499 = arith.addf %492, %498 : vector<2x1xf32>
    %500 = arith.mulf %480, %486 : vector<2x128xf32>
    %cst_122 = arith.constant dense<0.000000e+00> : vector<2xf32>
    %501 = vector.multi_reduction <add>, %500, %cst_122 [1] : vector<2x128xf32> to vector<2xf32>
    %502 = vector.shape_cast %501 : vector<2xf32> to vector<2x1xf32>
    %503 = arith.subf %499, %502 : vector<2x1xf32>
    %cst_123 = arith.constant dense<0.000000e+00> : vector<1xf32>
    %504 = vector.multi_reduction <add>, %503, %cst_123 [0] : vector<2x1xf32> to vector<1xf32>
    %505 = vector.shape_cast %504 : vector<1xf32> to vector<1x1xf32>
    %cst_124 = arith.constant 5.000000e-01 : f32
    %506 = vector.broadcast %cst_124 : f32 to vector<1x1xf32>
    %507 = arith.mulf %505, %506 : vector<1x1xf32>
    %cst_125 = arith.constant 0.001953125 : f32
    %508 = vector.broadcast %cst_125 : f32 to vector<1x1xf32>
    %509 = arith.mulf %460, %508 : vector<1x1xf32>
    %cst_126 = arith.constant 0.001953125 : f32
    %510 = vector.broadcast %cst_126 : f32 to vector<1x1xf32>
    %511 = arith.mulf %466, %510 : vector<1x1xf32>
    %512 = vector.extract_strided_slice %481 {offsets = [0, 0], sizes = [1, 128], strides = [1, 1]} : vector<2x128xi32> to vector<1x128xi32>
    %c0_i32_127 = arith.constant 0 : i32
    %513 = vector.broadcast %c0_i32_127 : i32 to vector<1x128xi32>
    %514 = arith.cmpi eq, %512, %513 : vector<1x128xi32>
    %cst_128 = arith.constant 0.000000e+00 : f32
    %515 = vector.shape_cast %507 : vector<1x1xf32> to vector<1x1xf32>
    %516 = vector.broadcast %515 : vector<1x1xf32> to vector<1x128xf32>
    %517 = vector.broadcast %cst_128 : f32 to vector<1x128xf32>
    %518 = arith.select %514, %516, %517 : vector<1x128xi1>, vector<1x128xf32>
    %c1_i32_129 = arith.constant 1 : i32
    %519 = vector.broadcast %c1_i32_129 : i32 to vector<1x128xi32>
    %520 = arith.cmpi eq, %512, %519 : vector<1x128xi32>
    %cst_130 = arith.constant 0.000000e+00 : f32
    %521 = vector.shape_cast %509 : vector<1x1xf32> to vector<1x1xf32>
    %522 = vector.broadcast %521 : vector<1x1xf32> to vector<1x128xf32>
    %523 = vector.broadcast %cst_130 : f32 to vector<1x128xf32>
    %524 = arith.select %520, %522, %523 : vector<1x128xi1>, vector<1x128xf32>
    %525 = arith.addf %518, %524 : vector<1x128xf32>
    %c2_i32 = arith.constant 2 : i32
    %526 = vector.broadcast %c2_i32 : i32 to vector<1x128xi32>
    %527 = arith.cmpi eq, %512, %526 : vector<1x128xi32>
    %cst_131 = arith.constant 0.000000e+00 : f32
    %528 = vector.shape_cast %511 : vector<1x1xf32> to vector<1x1xf32>
    %529 = vector.broadcast %528 : vector<1x1xf32> to vector<1x128xf32>
    %530 = vector.broadcast %cst_131 : f32 to vector<1x128xf32>
    %531 = arith.select %527, %529, %530 : vector<1x128xi1>, vector<1x128xf32>
    %532 = arith.addf %525, %531 : vector<1x128xf32>
    %cst_132 = arith.constant 0.000000e+00 : f32
    %533 = vector.broadcast %cst_132 : f32 to vector<5x128xf32>
    %534 = tpu.concatenate %480, %532, %533 in 0 : vector<2x128xf32>, vector<1x128xf32>, vector<5x128xf32> -> vector<8x128xf32>
    %c0_133 = arith.constant 0 : index
    %c0_134 = arith.constant 0 : index
    %535 = vector.load %arg3[%c0_133, %c0_134] : memref<8x128xf32, #tpu.memory_space<vmem>>, vector<8x128xf32>
    tpu.vector_store %arg3[%c0_133, %c0_134], %534 {strides = array<i32>} : memref<8x128xf32, #tpu.memory_space<vmem>>, vector<8x128xf32>,
    return
  }
}

</mosaic_0001>

<llo_original>
// kernel: rgat_absa_forward.1
$region0: #{rgat_absa_forward.1}
  #allocation0 [shape = 'u32[]', space=smem, size = 0x4, offset = 0x4, fixed_abs, tag = 'smem constant byte address 0x4 - core index']
  #allocation1 [shape = 'u32[144,128]{1,0:T(1,128)}', space=vmem, size = 0x12000, scoped, tag = 'internal scratch']
  %s0 = inlined_call_operand.hbm [shape: f32[328,128], index: 0, kind: input, shape index: {}]
  %s1 = inlined_call_operand.vmem [shape: f32[16,32], index: 1, kind: input, shape index: {}]
  %s2 = inlined_call_operand.vmem [shape: f32[24,128], index: 2, kind: input, shape index: {}]
  %s3 = inlined_call_operand.vmem [shape: f32[8,128], index: 3, kind: output, shape index: {}]
  %s4 = sld [smem:[#allocation0]]
  $region26: #{rgat_absa_forward.1} parent=0
    _
  %s6 = ssub.s32 1, %s4
  %s7 = scalar_select 0, %s6, %s4
  $region1: #{rgat_absa_forward.1} parent=0
    #allocation2 [shape = 'u8[167936]{0}', space=vmem, size = 0x29000, scoped, tag = 'input window, operand 0, single buffered']
    #allocation3 [shape = 's32[1]{0}', space=sflag, size = 0x4, scoped, tag = 'scoped memory for rgat_absa_forward.1']
    %8 = vsyncpa [#allocation3], 0
    // Predicated region
    $region2: #{rgat_absa_forward.1} parent=1 // pred_check
      _
    $region3: #{rgat_absa_forward.1} parent=1 // pred_check_branch
      %10 = sbr.rel (0) target = $region5
    $region4: #{rgat_absa_forward.1} parent=1 // pred_region
      %s12 = ssub.s32 5248, 5248
      %13 = vsyncadd [#allocation3], %s12
      %s14 = sshll.u32 [#allocation2], 4
      %s15 = int_to_ptr.vmem [resolvable:$true] %s14
      %20 = dma.hbm_to_vmem [thread:$0]  %s0, 5248, %s15, [#allocation3], 128, 128, 8
    $region5: #{rgat_absa_forward.1} parent=1 // pred_fallthru
      _
    // Predicated region
    $region6: #{rgat_absa_forward.1} parent=1 // pred_check
      _
    $region7: #{rgat_absa_forward.1} parent=1 // pred_check_branch
      %22 = sbr.rel (0) target = $region9
    $region8: #{rgat_absa_forward.1} parent=1 // pred_region
      _
    $region9: #{rgat_absa_forward.1} parent=1 // pred_fallthru
      _
    // Predicated region
    $region10: #{rgat_absa_forward.1} parent=1 // pred_check
      _
    $region11: #{rgat_absa_forward.1} parent=1 // pred_check_branch
      %24 = sbr.rel (0) target = $region13
    $region12: #{rgat_absa_forward.1} parent=1 // pred_region
      _
    $region13: #{rgat_absa_forward.1} parent=1 // pred_fallthru
      _
    // Predicated region
    $region14: #{rgat_absa_forward.1} parent=1 // pred_check
      _
    $region15: #{rgat_absa_forward.1} parent=1 // pred_check_branch
      %26 = sbr.rel (0) target = $region17
    $region16: #{rgat_absa_forward.1} parent=1 // pred_region
      %27 = dma.done [#allocation3], 5248
    $region17: #{rgat_absa_forward.1} parent=1 // pred_fallthru
      _
    %v28 = vld [vmem:[%s1] sm:$0xff]
    %v29 = vld [vmem:[%s1 + $0x8] sm:$0xff]
    %v30 = vld [vmem:[%s2] sm:$0xff]
    %v31 = vld [vmem:[%s2 + $0x8] sm:$0xff]
    %v32 = vld [vmem:[%s2 + $0x10] sm:$0x3]
    %v33 = vld [vmem:[#allocation2] sm:$0xff]
    %v34 = vld [vmem:[#allocation2 + $0x8] sm:$0xff]
    %v35 = vld [vmem:[#allocation2 + $0x10] sm:$0xff]
    %v36 = vld [vmem:[#allocation2 + $0x18] sm:$0xff]
    %v37 = vld [vmem:[#allocation2 + $0x20] sm:$0x1]
    %v38 = vld [vmem:[#allocation2 + $0x28] sm:$0xff]
    %v39 = vld [vmem:[#allocation2 + $0x30] sm:$0xff]
    %v40 = vld [vmem:[#allocation2 + $0x38] sm:$0xff]
    %v41 = vld [vmem:[#allocation2 + $0x40] sm:$0xff]
    %v42 = vld [vmem:[#allocation2 + $0x48] sm:$0x1]
    %v43 = vld [vmem:[#allocation2 + $0x50] sm:$0xff]
    %v44 = vld [vmem:[#allocation2 + $0x58] sm:$0xff]
    %v45 = vld [vmem:[#allocation2 + $0x60] sm:$0xff]
    %v46 = vld [vmem:[#allocation2 + $0x68] sm:$0xff]
    %v47 = vld [vmem:[#allocation2 + $0x70] sm:$0xff]
    %v48 = vld [vmem:[#allocation2 + $0x78] sm:$0xff]
    %v49 = vld [vmem:[#allocation2 + $0x80] sm:$0xff]
    %v50 = vld [vmem:[#allocation2 + $0x88] sm:$0xff]
    %v51 = vld [vmem:[#allocation2 + $0x90] sm:$0x1]
    %v52 = vld [vmem:[#allocation2 + $0x98] sm:$0xff]
    %v53 = vld [vmem:[#allocation2 + $0xa0] sm:$0xff]
    %v54 = vld [vmem:[#allocation2 + $0xa8] sm:$0xff]
    %v55 = vld [vmem:[#allocation2 + $0xb0] sm:$0xff]
    %v56 = vld [vmem:[#allocation2 + $0xb8] sm:$0xff]
    %v57 = vld [vmem:[#allocation2 + $0xc0] sm:$0xff]
    %v58 = vld [vmem:[#allocation2 + $0xc8] sm:$0xff]
    %v59 = vld [vmem:[#allocation2 + $0xd0] sm:$0xff]
    %v60 = vld [vmem:[#allocation2 + $0xd8] sm:$0xff]
    %v61 = vld [vmem:[#allocation2 + $0xe0] sm:$0xff]
    %v62 = vld [vmem:[#allocation2 + $0xe8] sm:$0xff]
    %v63 = vld [vmem:[#allocation2 + $0xf0] sm:$0xff]
    %v64 = vld [vmem:[#allocation2 + $0xf8] sm:$0x1]
    %v65 = vld [vmem:[#allocation2 + $0x100] sm:$0xff]
    %v66 = vld [vmem:[#allocation2 + $0x108] sm:$0xff]
    %v67 = vld [vmem:[#allocation2 + $0x110] sm:$0xff]
    %v68 = vld [vmem:[#allocation2 + $0x118] sm:$0xff]
    %v69 = vld [vmem:[#allocation2 + $0x120] sm:$0xff]
    %v70 = vld [vmem:[#allocation2 + $0x128] sm:$0xff]
    %v71 = vld [vmem:[#allocation2 + $0x130] sm:$0xff]
    %v72 = vld [vmem:[#allocation2 + $0x138] sm:$0xff]
    %v73 = vld [vmem:[#allocation2 + $0x140] sm:$0x1]
    %75 = vrot.lane.b32.xlu0 %v32, 88
    %v76 = vpop.permute.xlu0 %75
    %vm78 = vcmask 58368
    %v79 = vsel %vm78, %v76, 0.0
    %80 = vadd.xlane.f32.xlu0 %v79
    %v81 = vpop.xlane.xlu0 %80
    %v82 = vlaneseq
    %v83 = vshrl.u32 %v82, 7
    %vm84 = vcmp.eq.s32.totalorder %v83, 0
    %v85 = vsel %vm84, 1, 0
    %vm86 = vcmp.eq.s32.totalorder %v85, 1
    %v87 = vsel %vm86, %v32, 0.0
    %vm88 = vcmp.eq.s32.totalorder %v83, 1
    %v89 = vsel %vm88, 1, 0
    %vm90 = vcmp.eq.s32.totalorder %v89, 1
    %v91 = vsel %vm90, %v32, 0.0
    %93 = vrot.lane.b32.xlu0 %v87, 88
    %v94 = vpop.permute.xlu0 %93
    %97 = vrot.lane.b32.xlu0 %v91, 96
    %v98 = vpop.permute.xlu0 %97
    %vm100 = vcmask 64512
    %v101 = vsel %vm100, %v94, %v98
    %vm102 = vcmask 130048
    %v104 = vsel %vm102, %v101, 0
    %106 = vmatprep.subr.mxu0 0.0
    %107 = vmatpush1.msra.mxu0 0.0
    %108 = vmatprep.subr.mxu0 0.0
    %109 = vmatpush1.msra.mxu0 0.0
    %110 = vmatprep.subr.mxu0 0.0
    %111 = vmatpush1.msra.mxu0 0.0
    %112 = vmatprep.subr.mxu0 0.0
    %113 = vmatpush1.msra.mxu0 0.0
    %114 = vmatprep.subr.mxu0 0.0
    %115 = vmatpush1.msra.mxu0 0.0
    %116 = vmatprep.subr.mxu0 0.0
    %117 = vmatpush1.msra.mxu0 0.0
    %118 = vmatprep.subr.mxu0 0.0
    %119 = vmatpush1.msra.mxu0 0.0
    %120 = vmatprep.subr.mxu0 0.0
    %121 = vmatpush1.msra.mxu0 0.0
    %122 = vmatprep.subr.mxu0 0.0
    %123 = vmatpush1.msra.mxu0 0.0
    %124 = vmatprep.subr.mxu0 0.0
    %125 = vmatpush1.msra.mxu0 0.0
    %126 = vmatprep.subr.mxu0 0.0
    %127 = vmatpush1.msra.mxu0 0.0
    %128 = vmatprep.subr.mxu0 0.0
    %129 = vmatpush1.msra.mxu0 0.0
    %130 = vmatprep.subr.mxu0 0.0
    %131 = vmatpush1.msra.mxu0 0.0
    %132 = vmatprep.subr.mxu0 0.0
    %133 = vmatpush1.msra.mxu0 0.0
    %134 = vmatprep.subr.mxu0 0.0
    %135 = vmatpush1.msra.mxu0 %v29
    %136 = vmatprep.subr.mxu0 0.0
    %137 = vmatpush1.msra.mxu0 %v28
    %138 = vmatprep.subr.mxu0 0.0
    %139 = vmatpush2.msra.mxu0 0.0
    %140 = vmatprep.subr.mxu0 0.0
    %141 = vmatpush2.msra.mxu0 0.0
    %142 = vmatprep.subr.mxu0 0.0
    %143 = vmatpush2.msra.mxu0 0.0
    %144 = vmatprep.subr.mxu0 0.0
    %145 = vmatpush2.msra.mxu0 0.0
    %146 = vmatprep.subr.mxu0 0.0
    %147 = vmatpush2.msra.mxu0 0.0
    %148 = vmatprep.subr.mxu0 0.0
    %149 = vmatpush2.msra.mxu0 0.0
    %150 = vmatprep.subr.mxu0 0.0
    %151 = vmatpush2.msra.mxu0 0.0
    %152 = vmatprep.subr.mxu0 0.0
    %153 = vmatpush2.msra.mxu0 0.0
    %154 = vmatprep.subr.mxu0 0.0
    %155 = vmatpush2.msra.mxu0 0.0
    %156 = vmatprep.subr.mxu0 0.0
    %157 = vmatpush2.msra.mxu0 0.0
    %158 = vmatprep.subr.mxu0 0.0
    %159 = vmatpush2.msra.mxu0 0.0
    %160 = vmatprep.subr.mxu0 0.0
    %161 = vmatpush2.msra.mxu0 0.0
    %162 = vmatprep.subr.mxu0 0.0
    %163 = vmatpush2.msra.mxu0 0.0
    %164 = vmatprep.subr.mxu0 0.0
    %165 = vmatpush2.msra.mxu0 0.0
    %166 = vmatprep.subr.mxu0 0.0
    %167 = vmatpush2.msra.mxu0 0.0
    %168 = vmatprep.subr.mxu0 0.0
    %169 = vmatpush2.msra.mxu0 0.0
    %170 = vmatprep.mubr.f32.mxu0 0.0
    %171 = vmatmul.mubr.f32.gmra.mxu0 %v104
    %v172 = vpop.f32.mrf.mxu0
    %v173 = vadd.f32 0.0, %v172
    %v174 = vpop.f32.mrf.mxu0
    %175 = vdwg.mxu0
    %v176 = vrcp.pop %v81
    %v177 = vmul.f32 %v173, %v176
    %v178 = vlaneseq
    %v179 = vshrl.u32 %v178, 7
    %v180 = vsub.s32 0, %v179
    %v181 = vrot.slane %v37, %v180
    %vm182 = vcmask 261120
    %v184 = vsel %vm182, %v28, 0
    %v187 = vsel %vm182, %v29, 0
    %189 = vmatprep.subr.mxu0 0.0
    %190 = vmatpush1.msra.mxu0 0.0
    %191 = vmatprep.subr.mxu0 0.0
    %192 = vmatpush1.msra.mxu0 0.0
    %193 = vmatprep.subr.mxu0 0.0
    %194 = vmatpush1.msra.mxu0 0.0
    %195 = vmatprep.subr.mxu0 0.0
    %196 = vmatpush1.msra.mxu0 0.0
    %197 = vmatprep.subr.mxu0 0.0
    %198 = vmatpush1.msra.mxu0 0.0
    %199 = vmatprep.subr.mxu0 0.0
    %200 = vmatpush1.msra.mxu0 0.0
    %201 = vmatprep.subr.mxu0 0.0
    %202 = vmatpush1.msra.mxu0 0.0
    %203 = vmatprep.subr.mxu0 0.0
    %204 = vmatpush1.msra.mxu0 0.0
    %205 = vmatprep.subr.mxu0 0.0
    %206 = vmatpush1.msra.mxu0 0.0
    %207 = vmatprep.subr.mxu0 0.0
    %208 = vmatpush1.msra.mxu0 0.0
    %209 = vmatprep.subr.mxu0 0.0
    %210 = vmatpush1.msra.mxu0 0.0
    %211 = vmatprep.subr.mxu0 0.0
    %212 = vmatpush1.msra.mxu0 0.0
    %213 = vmatprep.subr.mxu0 0.0
    %214 = vmatpush1.msra.mxu0 %v36
    %215 = vmatprep.subr.mxu0 0.0
    %216 = vmatpush1.msra.mxu0 %v35
    %217 = vmatprep.subr.mxu0 0.0
    %218 = vmatpush1.msra.mxu0 %v34
    %219 = vmatprep.subr.mxu0 0.0
    %220 = vmatpush1.msra.mxu0 %v33
    %221 = vmatprep.subr.mxu0 0.0
    %222 = vmatpush2.msra.mxu0 0.0
    %223 = vmatprep.subr.mxu0 0.0
    %224 = vmatpush2.msra.mxu0 0.0
    %225 = vmatprep.subr.mxu0 0.0
    %226 = vmatpush2.msra.mxu0 0.0
    %227 = vmatprep.subr.mxu0 0.0
    %228 = vmatpush2.msra.mxu0 0.0
    %229 = vmatprep.subr.mxu0 0.0
    %230 = vmatpush2.msra.mxu0 0.0
    %231 = vmatprep.subr.mxu0 0.0
    %232 = vmatpush2.msra.mxu0 0.0
    %233 = vmatprep.subr.mxu0 0.0
    %234 = vmatpush2.msra.mxu0 0.0
    %235 = vmatprep.subr.mxu0 0.0
    %236 = vmatpush2.msra.mxu0 0.0
    %237 = vmatprep.subr.mxu0 0.0
    %238 = vmatpush2.msra.mxu0 0.0
    %239 = vmatprep.subr.mxu0 0.0
    %240 = vmatpush2.msra.mxu0 0.0
    %241 = vmatprep.subr.mxu0 0.0
    %242 = vmatpush2.msra.mxu0 0.0
    %243 = vmatprep.subr.mxu0 0.0
    %244 = vmatpush2.msra.mxu0 0.0
    %245 = vmatprep.subr.mxu0 0.0
    %246 = vmatpush2.msra.mxu0 0.0
    %247 = vmatprep.subr.mxu0 0.0
    %248 = vmatpush2.msra.mxu0 0.0
    %249 = vmatprep.subr.mxu0 0.0
    %250 = vmatpush2.msra.mxu0 0.0
    %251 = vmatprep.subr.mxu0 0.0
    %252 = vmatpush2.msra.mxu0 0.0
    %253 = vmatprep.mubr.f32.mxu0 0.0
    %254 = vmatmul.mubr.f32.gmra.mxu0 %v184
    %v255 = vpop.f32.mrf.mxu0
    %v256 = vadd.f32 %v181, %v255
    %v257 = vpop.f32.mrf.mxu0
    %258 = vmatprep.mubr.f32.mxu0 0.0
    %259 = vmatmul.mubr.f32.gmra.mxu0 %v187
    %v260 = vpop.f32.mrf.mxu0
    %v261 = vadd.f32 %v181, %v260
    %v262 = vpop.f32.mrf.mxu0
    %263 = vdwg.mxu0
    %v264 = vlaneseq
    %v265 = vshrl.u32 %v264, 7
    %v266 = vsub.s32 0, %v265
    %v267 = vrot.slane %v42, %v266
    %v269 = vsel %vm182, %v177, 0
    %271 = vmatprep.subr.mxu0 0.0
    %272 = vmatpush1.msra.mxu0 0.0
    %273 = vmatprep.subr.mxu0 0.0
    %274 = vmatpush1.msra.mxu0 0.0
    %275 = vmatprep.subr.mxu0 0.0
    %276 = vmatpush1.msra.mxu0 0.0
    %277 = vmatprep.subr.mxu0 0.0
    %278 = vmatpush1.msra.mxu0 0.0
    %279 = vmatprep.subr.mxu0 0.0
    %280 = vmatpush1.msra.mxu0 0.0
    %281 = vmatprep.subr.mxu0 0.0
    %282 = vmatpush1.msra.mxu0 0.0
    %283 = vmatprep.subr.mxu0 0.0
    %284 = vmatpush1.msra.mxu0 0.0
    %285 = vmatprep.subr.mxu0 0.0
    %286 = vmatpush1.msra.mxu0 0.0
    %287 = vmatprep.subr.mxu0 0.0
    %288 = vmatpush1.msra.mxu0 0.0
    %289 = vmatprep.subr.mxu0 0.0
    %290 = vmatpush1.msra.mxu0 0.0
    %291 = vmatprep.subr.mxu0 0.0
    %292 = vmatpush1.msra.mxu0 0.0
    %293 = vmatprep.subr.mxu0 0.0
    %294 = vmatpush1.msra.mxu0 0.0
    %295 = vmatprep.subr.mxu0 0.0
    %296 = vmatpush1.msra.mxu0 %v41
    %297 = vmatprep.subr.mxu0 0.0
    %298 = vmatpush1.msra.mxu0 %v40
    %299 = vmatprep.subr.mxu0 0.0
    %300 = vmatpush1.msra.mxu0 %v39
    %301 = vmatprep.subr.mxu0 0.0
    %302 = vmatpush1.msra.mxu0 %v38
    %303 = vmatprep.subr.mxu0 0.0
    %304 = vmatpush2.msra.mxu0 0.0
    %305 = vmatprep.subr.mxu0 0.0
    %306 = vmatpush2.msra.mxu0 0.0
    %307 = vmatprep.subr.mxu0 0.0
    %308 = vmatpush2.msra.mxu0 0.0
    %309 = vmatprep.subr.mxu0 0.0
    %310 = vmatpush2.msra.mxu0 0.0
    %311 = vmatprep.subr.mxu0 0.0
    %312 = vmatpush2.msra.mxu0 0.0
    %313 = vmatprep.subr.mxu0 0.0
    %314 = vmatpush2.msra.mxu0 0.0
    %315 = vmatprep.subr.mxu0 0.0
    %316 = vmatpush2.msra.mxu0 0.0
    %317 = vmatprep.subr.mxu0 0.0
    %318 = vmatpush2.msra.mxu0 0.0
    %319 = vmatprep.subr.mxu0 0.0
    %320 = vmatpush2.msra.mxu0 0.0
    %321 = vmatprep.subr.mxu0 0.0
    %322 = vmatpush2.msra.mxu0 0.0
    %323 = vmatprep.subr.mxu0 0.0
    %324 = vmatpush2.msra.mxu0 0.0
    %325 = vmatprep.subr.mxu0 0.0
    %326 = vmatpush2.msra.mxu0 0.0
    %327 = vmatprep.subr.mxu0 0.0
    %328 = vmatpush2.msra.mxu0 0.0
    %329 = vmatprep.subr.mxu0 0.0
    %330 = vmatpush2.msra.mxu0 0.0
    %331 = vmatprep.subr.mxu0 0.0
    %332 = vmatpush2.msra.mxu0 0.0
    %333 = vmatprep.subr.mxu0 0.0
    %334 = vmatpush2.msra.mxu0 0.0
    %335 = vmatprep.mubr.f32.mxu0 0.0
    %336 = vmatmul.mubr.f32.gmra.mxu0 %v269
    %v337 = vpop.f32.mrf.mxu0
    %v338 = vadd.f32 %v267, %v337
    %v339 = vpop.f32.mrf.mxu0
    %340 = vdwg.mxu0
    %v341 = vlaneseq
    %v342 = vand.u32 %v341, 127
    %vm343 = vcmp.eq.s32.totalorder %v83, %v342
    %v344 = vsel %vm343, 1, 0
    %v345 = vcvt.s32.f32 %v344
    %347 = vrot.lane.b32.xlu0 %v256, 96
    %v348 = vpop.permute.xlu0 %347
    %v349 = vsel %vm102, %v256, 0
    %v351 = vsel %vm102, %v348, 0
    %353 = vmatprep.subr.mxu0 0.0
    %354 = vmatpush1.xpose.msra.mxu0 0.0
    %355 = vmatprep.subr.mxu0 0.0
    %356 = vmatpush1.xpose.msra.mxu0 0.0
    %357 = vmatprep.subr.mxu0 0.0
    %358 = vmatpush1.xpose.msra.mxu0 0.0
    %359 = vmatprep.subr.mxu0 0.0
    %360 = vmatpush1.xpose.msra.mxu0 0.0
    %361 = vmatprep.subr.mxu0 0.0
    %362 = vmatpush1.xpose.msra.mxu0 0.0
    %363 = vmatprep.subr.mxu0 0.0
    %364 = vmatpush1.xpose.msra.mxu0 0.0
    %365 = vmatprep.subr.mxu0 0.0
    %366 = vmatpush1.xpose.msra.mxu0 0.0
    %367 = vmatprep.subr.mxu0 0.0
    %368 = vmatpush1.xpose.msra.mxu0 0.0
    %369 = vmatprep.subr.mxu0 0.0
    %370 = vmatpush1.xpose.msra.mxu0 0.0
    %371 = vmatprep.subr.mxu0 0.0
    %372 = vmatpush1.xpose.msra.mxu0 0.0
    %373 = vmatprep.subr.mxu0 0.0
    %374 = vmatpush1.xpose.msra.mxu0 0.0
    %375 = vmatprep.subr.mxu0 0.0
    %376 = vmatpush1.xpose.msra.mxu0 0.0
    %377 = vmatprep.subr.mxu0 0.0
    %378 = vmatpush1.xpose.msra.mxu0 0.0
    %379 = vmatprep.subr.mxu0 0.0
    %380 = vmatpush1.xpose.msra.mxu0 0.0
    %381 = vmatprep.subr.mxu0 0.0
    %382 = vmatpush1.xpose.msra.mxu0 0.0
    %383 = vmatprep.subr.mxu0 0.0
    %384 = vmatpush1.xpose.msra.mxu0 %v351
    %385 = vmatprep.subr.mxu0 0.0
    %386 = vmatpush2.xpose.msra.mxu0 0.0
    %387 = vmatprep.subr.mxu0 0.0
    %388 = vmatpush2.xpose.msra.mxu0 0.0
    %389 = vmatprep.subr.mxu0 0.0
    %390 = vmatpush2.xpose.msra.mxu0 0.0
    %391 = vmatprep.subr.mxu0 0.0
    %392 = vmatpush2.xpose.msra.mxu0 0.0
    %393 = vmatprep.subr.mxu0 0.0
    %394 = vmatpush2.xpose.msra.mxu0 0.0
    %395 = vmatprep.subr.mxu0 0.0
    %396 = vmatpush2.xpose.msra.mxu0 0.0
    %397 = vmatprep.subr.mxu0 0.0
    %398 = vmatpush2.xpose.msra.mxu0 0.0
    %399 = vmatprep.subr.mxu0 0.0
    %400 = vmatpush2.xpose.msra.mxu0 0.0
    %401 = vmatprep.subr.mxu0 0.0
    %402 = vmatpush2.xpose.msra.mxu0 0.0
    %403 = vmatprep.subr.mxu0 0.0
    %404 = vmatpush2.xpose.msra.mxu0 0.0
    %405 = vmatprep.subr.mxu0 0.0
    %406 = vmatpush2.xpose.msra.mxu0 0.0
    %407 = vmatprep.subr.mxu0 0.0
    %408 = vmatpush2.xpose.msra.mxu0 0.0
    %409 = vmatprep.subr.mxu0 0.0
    %410 = vmatpush2.xpose.msra.mxu0 0.0
    %411 = vmatprep.subr.mxu0 0.0
    %412 = vmatpush2.xpose.msra.mxu0 0.0
    %413 = vmatprep.subr.mxu0 0.0
    %414 = vmatpush2.xpose.msra.mxu0 0.0
    %415 = vmatprep.subr.mxu0 0.0
    %416 = vmatpush2.xpose.msra.mxu0 0.0
    %417 = vmatprep.mubr.f32.mxu0 0.0
    %418 = vmatmul.mubr.f32.gmra.mxu0 %v349
    %v419 = vpop.f32.mrf.mxu0
    %v420 = vadd.f32 0.0, %v419
    %v421 = vpop.f32.mrf.mxu0
    %422 = vdwg.mxu0
    %v423 = vmul.f32 %v420, 0.25
    %vm424 = vcmp.eq.f32.partialorder %v32, 0.0
    %v425 = vsel %vm424, 1, 0
    %v426 = vlaneseq
    %v427 = vshrl.u32 %v426, 7
    %v428 = vsub.s32 0, %v427
    %v429 = vrot.slane %v425, %v428
    %vm430 = vcmp.eq.s32.totalorder %v429, 1
    %432 = vrot.lane.b32.xlu0 %v423, 32
    %v433 = vpop.permute.xlu0 %432
    %v435 = vsel %vm430, -1e+09, %v433
    %vm436 = vcmask 326912
    %v437 = vsel %vm436, %v435, -inf
    %438 = vmax.xlane.f32.xlu0 %v437
    %v439 = vpop.xlane.xlu0 %438
    %v440 = vsub.f32 %v435, %v439
    %v441 = vmul.f32 %v440, 1.442695
    %v442 = vpow.pop %v441
    %444 = vrot.lane.b32.xlu0 %v442, 96
    %v445 = vpop.permute.xlu0 %444
    %v447 = vsel %vm100, %v445, 0.0
    %448 = vadd.xlane.f32.xlu0 %v447
    %v449 = vpop.xlane.xlu0 %448
    %v450 = vrcp.pop %v449
    %v451 = vmul.f32 %v442, %v450
    %453 = vrot.lane.b32.xlu0 %v338, 96
    %v454 = vpop.permute.xlu0 %453
    %v456 = vmul.f32 %v338, %v454
    %vm457 = vcmask 122880
    %v458 = vsel %vm457, %v456, 0.0
    %459 = vadd.xlane.f32.xlu0 %v458
    %v460 = vpop.xlane.xlu0 %459
    %v461 = vmul.f32 %v460, 0.25
    %v462 = vxor.u32 %v461, 2147483648
    %v463 = vmul.f32 %v462, 1.442695
    %v464 = vpow.pop %v463
    %v465 = vadd.f32 %v464, 1.0
    %v466 = vrcp.pop %v465
    %v467 = vmul.f32 1.0, %v466
    %v468 = vmul.f32 %v467, %v32
    %v469 = vlaneseq
    %v470 = vshrl.u32 %v469, 7
    %v471 = vsub.s32 0, %v470
    %v472 = vrot.slane %v338, %v471
    %v473 = vadd.f32 %v256, %v472
    %v474 = vxor.u32 %v473, 2147483648
    %v475 = vmul.f32 %v474, 1.442695
    %v476 = vpow.pop %v475
    %v477 = vadd.f32 %v476, 1.0
    %v478 = vrcp.pop %v477
    %v479 = vmul.f32 1.0, %v478
    %v480 = vadd.f32 %v451, 0.0
    %482 = vrot.lane.b32.xlu0 %v479, 126
    %v483 = vpop.permute.xlu0 %482
    %v485 = vadd.f32 %v479, %v483
    %v486 = vsub.f32 1.0, %v485
    %488 = vset.pattern.permute.xlu0 64
    %489 = vperm.xlu0 %488, %v486
    %v490 = vpop.permute.xlu0 %489
    %v492 = vlaneseq
    %v493 = vshrl.u32 %v492, 7
    %v494 = vsub.s32 0, %v493
    %v495 = vrot.slane %v468, %v494
    %v496 = vmul.f32 %v490, %v495
    %v497 = vadd.f32 %v480, %v496
    %498 = vrot.lane.b32.xlu0 %v256, 112
    %v499 = vpop.permute.xlu0 %498
    %500 = vrot.lane.b32.xlu0 %v256, 80
    %v501 = vpop.permute.xlu0 %500
    %v502 = vsel %vm102, %v499, 0
    %v504 = vsel %vm102, %v501, 0
    %506 = vmatprep.subr.mxu0 0.0
    %507 = vmatpush1.xpose.msra.mxu0 0.0
    %508 = vmatprep.subr.mxu0 0.0
    %509 = vmatpush1.xpose.msra.mxu0 0.0
    %510 = vmatprep.subr.mxu0 0.0
    %511 = vmatpush1.xpose.msra.mxu0 0.0
    %512 = vmatprep.subr.mxu0 0.0
    %513 = vmatpush1.xpose.msra.mxu0 0.0
    %514 = vmatprep.subr.mxu0 0.0
    %515 = vmatpush1.xpose.msra.mxu0 0.0
    %516 = vmatprep.subr.mxu0 0.0
    %517 = vmatpush1.xpose.msra.mxu0 0.0
    %518 = vmatprep.subr.mxu0 0.0
    %519 = vmatpush1.xpose.msra.mxu0 0.0
    %520 = vmatprep.subr.mxu0 0.0
    %521 = vmatpush1.xpose.msra.mxu0 0.0
    %522 = vmatprep.subr.mxu0 0.0
    %523 = vmatpush1.xpose.msra.mxu0 0.0
    %524 = vmatprep.subr.mxu0 0.0
    %525 = vmatpush1.xpose.msra.mxu0 0.0
    %526 = vmatprep.subr.mxu0 0.0
    %527 = vmatpush1.xpose.msra.mxu0 0.0
    %528 = vmatprep.subr.mxu0 0.0
    %529 = vmatpush1.xpose.msra.mxu0 0.0
    %530 = vmatprep.subr.mxu0 0.0
    %531 = vmatpush1.xpose.msra.mxu0 0.0
    %532 = vmatprep.subr.mxu0 0.0
    %533 = vmatpush1.xpose.msra.mxu0 0.0
    %534 = vmatprep.subr.mxu0 0.0
    %535 = vmatpush1.xpose.msra.mxu0 0.0
    %536 = vmatprep.subr.mxu0 0.0
    %537 = vmatpush1.xpose.msra.mxu0 %v504
    %538 = vmatprep.subr.mxu0 0.0
    %539 = vmatpush2.xpose.msra.mxu0 0.0
    %540 = vmatprep.subr.mxu0 0.0
    %541 = vmatpush2.xpose.msra.mxu0 0.0
    %542 = vmatprep.subr.mxu0 0.0
    %543 = vmatpush2.xpose.msra.mxu0 0.0
    %544 = vmatprep.subr.mxu0 0.0
    %545 = vmatpush2.xpose.msra.mxu0 0.0
    %546 = vmatprep.subr.mxu0 0.0
    %547 = vmatpush2.xpose.msra.mxu0 0.0
    %548 = vmatprep.subr.mxu0 0.0
    %549 = vmatpush2.xpose.msra.mxu0 0.0
    %550 = vmatprep.subr.mxu0 0.0
    %551 = vmatpush2.xpose.msra.mxu0 0.0
    %552 = vmatprep.subr.mxu0 0.0
    %553 = vmatpush2.xpose.msra.mxu0 0.0
    %554 = vmatprep.subr.mxu0 0.0
    %555 = vmatpush2.xpose.msra.mxu0 0.0
    %556 = vmatprep.subr.mxu0 0.0
    %557 = vmatpush2.xpose.msra.mxu0 0.0
    %558 = vmatprep.subr.mxu0 0.0
    %559 = vmatpush2.xpose.msra.mxu0 0.0
    %560 = vmatprep.subr.mxu0 0.0
    %561 = vmatpush2.xpose.msra.mxu0 0.0
    %562 = vmatprep.subr.mxu0 0.0
    %563 = vmatpush2.xpose.msra.mxu0 0.0
    %564 = vmatprep.subr.mxu0 0.0
    %565 = vmatpush2.xpose.msra.mxu0 0.0
    %566 = vmatprep.subr.mxu0 0.0
    %567 = vmatpush2.xpose.msra.mxu0 0.0
    %568 = vmatprep.subr.mxu0 0.0
    %569 = vmatpush2.xpose.msra.mxu0 0.0
    %570 = vmatprep.mubr.f32.mxu0 0.0
    %571 = vmatmul.mubr.f32.gmra.mxu0 %v502
    %v572 = vpop.f32.mrf.mxu0
    %v573 = vadd.f32 0.0, %v572
    %v574 = vpop.f32.mrf.mxu0
    %575 = vdwg.mxu0
    %v576 = vmul.f32 %v573, 0.25
    %578 = vrot.lane.b32.xlu0 %v576, 32
    %v579 = vpop.permute.xlu0 %578
    %v581 = vsel %vm430, -1e+09, %v579
    %v582 = vsel %vm436, %v581, -inf
    %583 = vmax.xlane.f32.xlu0 %v582
    %v584 = vpop.xlane.xlu0 %583
    %v585 = vsub.f32 %v581, %v584
    %v586 = vmul.f32 %v585, 1.442695
    %v587 = vpow.pop %v586
    %589 = vrot.lane.b32.xlu0 %v587, 96
    %v590 = vpop.permute.xlu0 %589
    %v592 = vsel %vm100, %v590, 0.0
    %593 = vadd.xlane.f32.xlu0 %v592
    %v594 = vpop.xlane.xlu0 %593
    %v595 = vrcp.pop %v594
    %v596 = vmul.f32 %v587, %v595
    %598 = vrot.lane.b32.xlu0 %v456, 112
    %v599 = vpop.permute.xlu0 %598
    %v601 = vsel %vm457, %v599, 0.0
    %602 = vadd.xlane.f32.xlu0 %v601
    %v603 = vpop.xlane.xlu0 %602
    %v604 = vmul.f32 %v603, 0.25
    %v605 = vxor.u32 %v604, 2147483648
    %v606 = vmul.f32 %v605, 1.442695
    %v607 = vpow.pop %v606
    %v608 = vadd.f32 %v607, 1.0
    %v609 = vrcp.pop %v608
    %v610 = vmul.f32 1.0, %v609
    %v611 = vmul.f32 %v610, %v32
    %v612 = vadd.f32 %v497, %v596
    %613 = vset.pattern.permute.xlu0 65
    %614 = vperm.xlu0 %613, %v486
    %v615 = vpop.permute.xlu0 %614
    %v617 = vlaneseq
    %v618 = vshrl.u32 %v617, 7
    %v619 = vsub.s32 0, %v618
    %v620 = vrot.slane %v611, %v619
    %v621 = vmul.f32 %v615, %v620
    %v622 = vadd.f32 %v612, %v621
    %624 = vrot.lane.b32.xlu0 %v622, 96
    %v625 = vpop.permute.xlu0 %624
    %v627 = vrot.slane %v622, 1
    %628 = vrot.lane.b32.xlu0 %v627, 104
    %v629 = vpop.permute.xlu0 %628
    %v631 = vrot.slane %v622, 2
    %632 = vrot.lane.b32.xlu0 %v631, 112
    %v633 = vpop.permute.xlu0 %632
    %v635 = vrot.slane %v622, 3
    %636 = vrot.lane.b32.xlu0 %v635, 120
    %v637 = vpop.permute.xlu0 %636
    %v639 = vrot.slane %v622, 4
    %v641 = vrot.slane %v622, 5
    %642 = vrot.lane.b32.xlu0 %v641, 8
    %v643 = vpop.permute.xlu0 %642
    %v645 = vrot.slane %v622, 6
    %646 = vrot.lane.b32.xlu0 %v645, 16
    %v647 = vpop.permute.xlu0 %646
    %v649 = vrot.slane %v622, 7
    %650 = vrot.lane.b32.xlu0 %v649, 24
    %v651 = vpop.permute.xlu0 %650
    %v653 = vsel %vm100, %v625, %v629
    %v654 = vsel %vm102, %v653, %v633
    %vm655 = vcmask 195584
    %v656 = vsel %vm655, %v654, %v637
    %v657 = vsel %vm182, %v656, %v639
    %vm658 = vcmask 326656
    %v659 = vsel %vm658, %v657, %v643
    %vm660 = vcmask 392192
    %v661 = vsel %vm660, %v659, %v647
    %vm662 = vcmask 457728
    %v663 = vsel %vm662, %v661, %v651
    %664 = vrot.lane.b32.xlu0 %v622, 127
    %v665 = vpop.permute.xlu0 %664
    %667 = vrot.lane.b32.xlu0 %v622, 126
    %v668 = vpop.permute.xlu0 %667
    %670 = vrot.lane.b32.xlu0 %v622, 125
    %v671 = vpop.permute.xlu0 %670
    %673 = vrot.lane.b32.xlu0 %v622, 124
    %v674 = vpop.permute.xlu0 %673
    %676 = vrot.lane.b32.xlu0 %v622, 123
    %v677 = vpop.permute.xlu0 %676
    %679 = vrot.lane.b32.xlu0 %v622, 122
    %v680 = vpop.permute.xlu0 %679
    %682 = vrot.lane.b32.xlu0 %v622, 121
    %v683 = vpop.permute.xlu0 %682
    %v685 = vlaneseq
    %v686 = vshrl.u32 %v685, 7
    %v687 = vsub.s32 0, %v686
    %v688 = vrot.slane %v663, %v687
    %689 = vset.pattern.permute.xlu0 32
    %690 = vperm.xlu0 %689, %v622
    %v691 = vpop.permute.xlu0 %690
    %693 = vset.pattern.permute.xlu0 32
    %694 = vperm.xlu0 %693, %v665
    %v695 = vpop.permute.xlu0 %694
    %697 = vset.pattern.permute.xlu0 32
    %698 = vperm.xlu0 %697, %v668
    %v699 = vpop.permute.xlu0 %698
    %701 = vset.pattern.permute.xlu0 32
    %702 = vperm.xlu0 %701, %v671
    %v703 = vpop.permute.xlu0 %702
    %705 = vset.pattern.permute.xlu0 32
    %706 = vperm.xlu0 %705, %v674
    %v707 = vpop.permute.xlu0 %706
    %709 = vset.pattern.permute.xlu0 32
    %710 = vperm.xlu0 %709, %v677
    %v711 = vpop.permute.xlu0 %710
    %713 = vset.pattern.permute.xlu0 32
    %714 = vperm.xlu0 %713, %v680
    %v715 = vpop.permute.xlu0 %714
    %717 = vset.pattern.permute.xlu0 32
    %718 = vperm.xlu0 %717, %v683
    %v719 = vpop.permute.xlu0 %718
    %vm721 = vcmp.ge.f32.partialorder %v688, %v691
    %vm722 = vcmp.ge.f32.partialorder %v688, %v695
    %vm723 = vcmp.ge.f32.partialorder %v688, %v699
    %vm724 = vcmp.ge.f32.partialorder %v688, %v703
    %vm725 = vcmp.ge.f32.partialorder %v688, %v707
    %vm726 = vcmp.ge.f32.partialorder %v688, %v711
    %vm727 = vcmp.ge.f32.partialorder %v688, %v715
    %vm728 = vcmp.ge.f32.partialorder %v688, %v719
    %v729 = vsel %vm721, 1, 0
    %v730 = vsel %vm722, 1, 0
    %v731 = vsel %vm723, 1, 0
    %v732 = vsel %vm724, 1, 0
    %v733 = vsel %vm725, 1, 0
    %v734 = vsel %vm726, 1, 0
    %v735 = vsel %vm727, 1, 0
    %v736 = vsel %vm728, 1, 0
    %v737 = vcvt.s32.f32 %v729
    %v738 = vcvt.s32.f32 %v730
    %v739 = vcvt.s32.f32 %v731
    %v740 = vcvt.s32.f32 %v732
    %v741 = vcvt.s32.f32 %v733
    %v742 = vcvt.s32.f32 %v734
    %v743 = vcvt.s32.f32 %v735
    %v744 = vcvt.s32.f32 %v736
    %vm745 = vcmask 523264
    %v746 = vsel %vm745, %v737, 0.0
    %747 = vadd.xlane.f32.xlu0 %v746
    %v748 = vpop.xlane.xlu0 %747
    %v749 = vsel %vm745, %v738, 0.0
    %750 = vadd.xlane.f32.xlu0 %v749
    %v751 = vpop.xlane.xlu0 %750
    %v752 = vsel %vm745, %v739, 0.0
    %753 = vadd.xlane.f32.xlu0 %v752
    %v754 = vpop.xlane.xlu0 %753
    %v755 = vsel %vm745, %v740, 0.0
    %756 = vadd.xlane.f32.xlu0 %v755
    %v757 = vpop.xlane.xlu0 %756
    %v758 = vsel %vm745, %v741, 0.0
    %759 = vadd.xlane.f32.xlu0 %v758
    %v760 = vpop.xlane.xlu0 %759
    %v761 = vsel %vm745, %v742, 0.0
    %762 = vadd.xlane.f32.xlu0 %v761
    %v763 = vpop.xlane.xlu0 %762
    %v764 = vsel %vm745, %v743, 0.0
    %765 = vadd.xlane.f32.xlu0 %v764
    %v766 = vpop.xlane.xlu0 %765
    %v767 = vsel %vm745, %v744, 0.0
    %768 = vadd.xlane.f32.xlu0 %v767
    %v769 = vpop.xlane.xlu0 %768
    %vm770 = vcmp.ge.f32.partialorder %v748, 4.0
    %vm771 = vcmp.ge.f32.partialorder %v751, 4.0
    %vm772 = vcmp.ge.f32.partialorder %v754, 4.0
    %vm773 = vcmp.ge.f32.partialorder %v757, 4.0
    %vm774 = vcmp.ge.f32.partialorder %v760, 4.0
    %vm775 = vcmp.ge.f32.partialorder %v763, 4.0
    %vm776 = vcmp.ge.f32.partialorder %v766, 4.0
    %vm777 = vcmp.ge.f32.partialorder %v769, 4.0
    %v778 = vsel %vm770, %v622, -1e+30
    %v779 = vsel %vm771, %v665, -1e+30
    %v780 = vsel %vm772, %v668, -1e+30
    %v781 = vsel %vm773, %v671, -1e+30
    %v782 = vsel %vm774, %v674, -1e+30
    %v783 = vsel %vm775, %v677, -1e+30
    %v784 = vsel %vm776, %v680, -1e+30
    %v785 = vsel %vm777, %v683, -1e+30
    %vm786 = vcmask 269568
    %v787 = vsel %vm786, %v778, -inf
    %v788 = vsel %vm786, %v779, -inf
    %v789 = vsel %vm786, %v780, -inf
    %v790 = vsel %vm786, %v781, -inf
    %v791 = vsel %vm786, %v782, -inf
    %v792 = vmax.f32 %v787, %v791
    %v793 = vsel %vm786, %v783, -inf
    %v794 = vmax.f32 %v788, %v793
    %v795 = vsel %vm786, %v784, -inf
    %v796 = vmax.f32 %v789, %v795
    %v797 = vsel %vm786, %v785, -inf
    %v798 = vmax.f32 %v790, %v797
    %v799 = vmax.f32 %v792, %v794
    %v800 = vmax.f32 %v796, %v798
    %v801 = vmax.f32 %v799, %v800
    %v802 = vrot.slane %v801, 4
    %v803 = vmax.f32 %v801, %v802
    %v804 = vrot.slane %v803, 2
    %v805 = vmax.f32 %v803, %v804
    %v806 = vrot.slane %v805, 1
    %v807 = vmax.f32 %v805, %v806
    %809 = vset.pattern.permute.xlu0 32
    %810 = vperm.xlu0 %809, %v807
    %v811 = vpop.permute.xlu0 %810
    %vm813 = vcmp.ge.f32.partialorder %v622, %v811
    %v814 = vsel %vm813, 1, 0
    %v815 = vcvt.s32.f32 %v814
    %817 = vrot.lane.b32.xlu0 %v815, 96
    %v818 = vpop.permute.xlu0 %817
    %820 = vxpose.xlu0.b32.start [1/16] %v818, 128
    %821 = vxpose.xlu0.b32.cont [2/16] 0.0, 128
    %822 = vxpose.xlu0.b32.cont [3/16] 0.0, 128
    %823 = vxpose.xlu0.b32.cont [4/16] 0.0, 128
    %824 = vxpose.xlu0.b32.cont [5/16] 0.0, 128
    %825 = vxpose.xlu0.b32.cont [6/16] 0.0, 128
    %826 = vxpose.xlu0.b32.cont [7/16] 0.0, 128
    %827 = vxpose.xlu0.b32.cont [8/16] 0.0, 128
    %828 = vxpose.xlu0.b32.cont [9/16] 0.0, 128
    %829 = vxpose.xlu0.b32.cont [10/16] 0.0, 128
    %830 = vxpose.xlu0.b32.cont [11/16] 0.0, 128
    %831 = vxpose.xlu0.b32.cont [12/16] 0.0, 128
    %832 = vxpose.xlu0.b32.cont [13/16] 0.0, 128
    %833 = vxpose.xlu0.b32.cont [14/16] 0.0, 128
    %834 = vxpose.xlu0.b32.cont [15/16] 0.0, 128
    %835 = vxpose.xlu0.b32.end [16/16] 0.0, 128
    %v836 = vpop.trf.xlu0
    %v837 = vpop.trf.xlu0
    %v838 = vpop.trf.xlu0
    %v839 = vpop.trf.xlu0
    %v840 = vpop.trf.xlu0
    %v841 = vpop.trf.xlu0
    %v842 = vpop.trf.xlu0
    %v843 = vpop.trf.xlu0
    %v844 = vpop.trf.xlu0
    %v845 = vpop.trf.xlu0
    %v846 = vpop.trf.xlu0
    %v847 = vpop.trf.xlu0
    %v848 = vpop.trf.xlu0
    %v849 = vpop.trf.xlu0
    %v850 = vpop.trf.xlu0
    %v851 = vpop.trf.xlu0
    %853 = vrot.lane.b32.xlu0 %v836, 32
    %v854 = vpop.permute.xlu0 %853
    %v856 = vadd.f32 %v815, %v854
    %v857 = vsub.f32 1.0, %v345
    %859 = vrot.lane.b32.xlu0 %v857, 32
    %v860 = vpop.permute.xlu0 %859
    %v862 = vmul.f32 %v856, %v860
    %864 = vrot.lane.b32.xlu0 %v345, 32
    %v865 = vpop.permute.xlu0 %864
    %v867 = vadd.f32 %v862, %v865
    %v868 = vmul.f32 %v867, %v815
    %v869 = vsel %vm100, %v30, 0.0
    %870 = vadd.xlane.f32.xlu0 %v869
    %v871 = vpop.xlane.xlu0 %870
    %v872 = vadd.f32 %v871, 1.0
    %v874 = vsel %vm100, %v30, 0
    %876 = vmatprep.subr.mxu0 0.0
    %877 = vmatpush1.msra.mxu0 0.0
    %878 = vmatprep.subr.mxu0 0.0
    %879 = vmatpush1.msra.mxu0 0.0
    %880 = vmatprep.subr.mxu0 0.0
    %881 = vmatpush1.msra.mxu0 0.0
    %882 = vmatprep.subr.mxu0 0.0
    %883 = vmatpush1.msra.mxu0 0.0
    %884 = vmatprep.subr.mxu0 0.0
    %885 = vmatpush1.msra.mxu0 0.0
    %886 = vmatprep.subr.mxu0 0.0
    %887 = vmatpush1.msra.mxu0 0.0
    %888 = vmatprep.subr.mxu0 0.0
    %889 = vmatpush1.msra.mxu0 0.0
    %890 = vmatprep.subr.mxu0 0.0
    %891 = vmatpush1.msra.mxu0 0.0
    %892 = vmatprep.subr.mxu0 0.0
    %893 = vmatpush1.msra.mxu0 0.0
    %894 = vmatprep.subr.mxu0 0.0
    %895 = vmatpush1.msra.mxu0 0.0
    %896 = vmatprep.subr.mxu0 0.0
    %897 = vmatpush1.msra.mxu0 0.0
    %898 = vmatprep.subr.mxu0 0.0
    %899 = vmatpush1.msra.mxu0 0.0
    %900 = vmatprep.subr.mxu0 0.0
    %901 = vmatpush1.msra.mxu0 0.0
    %902 = vmatprep.subr.mxu0 0.0
    %903 = vmatpush1.msra.mxu0 0.0
    %904 = vmatprep.subr.mxu0 0.0
    %905 = vmatpush1.msra.mxu0 0.0
    %906 = vmatprep.subr.mxu0 0.0
    %907 = vmatpush1.msra.mxu0 %v28
    %908 = vmatprep.subr.mxu0 0.0
    %909 = vmatpush2.msra.mxu0 0.0
    %910 = vmatprep.subr.mxu0 0.0
    %911 = vmatpush2.msra.mxu0 0.0
    %912 = vmatprep.subr.mxu0 0.0
    %913 = vmatpush2.msra.mxu0 0.0
    %914 = vmatprep.subr.mxu0 0.0
    %915 = vmatpush2.msra.mxu0 0.0
    %916 = vmatprep.subr.mxu0 0.0
    %917 = vmatpush2.msra.mxu0 0.0
    %918 = vmatprep.subr.mxu0 0.0
    %919 = vmatpush2.msra.mxu0 0.0
    %920 = vmatprep.subr.mxu0 0.0
    %921 = vmatpush2.msra.mxu0 0.0
    %922 = vmatprep.subr.mxu0 0.0
    %923 = vmatpush2.msra.mxu0 0.0
    %924 = vmatprep.subr.mxu0 0.0
    %925 = vmatpush2.msra.mxu0 0.0
    %926 = vmatprep.subr.mxu0 0.0
    %927 = vmatpush2.msra.mxu0 0.0
    %928 = vmatprep.subr.mxu0 0.0
    %929 = vmatpush2.msra.mxu0 0.0
    %930 = vmatprep.subr.mxu0 0.0
    %931 = vmatpush2.msra.mxu0 0.0
    %932 = vmatprep.subr.mxu0 0.0
    %933 = vmatpush2.msra.mxu0 0.0
    %934 = vmatprep.subr.mxu0 0.0
    %935 = vmatpush2.msra.mxu0 0.0
    %936 = vmatprep.subr.mxu0 0.0
    %937 = vmatpush2.msra.mxu0 0.0
    %938 = vmatprep.subr.mxu0 0.0
    %939 = vmatpush2.msra.mxu0 0.0
    %940 = vmatprep.mubr.f32.mxu0 0.0
    %941 = vmatmul.mubr.f32.gmra.mxu0 %v874
    %v942 = vpop.f32.mrf.mxu0
    %v943 = vadd.f32 0.0, %v942
    %v944 = vpop.f32.mrf.mxu0
    %945 = vdwg.mxu0
    %947 = vrot.lane.b32.xlu0 %v868, 96
    %v948 = vpop.permute.xlu0 %947
    %v949 = vsel %vm100, %v948, 0
    %951 = vmatprep.subr.mxu0 0.0
    %952 = vmatpush1.msra.mxu0 0.0
    %953 = vmatprep.subr.mxu0 0.0
    %954 = vmatpush1.msra.mxu0 0.0
    %955 = vmatprep.subr.mxu0 0.0
    %956 = vmatpush1.msra.mxu0 0.0
    %957 = vmatprep.subr.mxu0 0.0
    %958 = vmatpush1.msra.mxu0 0.0
    %959 = vmatprep.subr.mxu0 0.0
    %960 = vmatpush1.msra.mxu0 0.0
    %961 = vmatprep.subr.mxu0 0.0
    %962 = vmatpush1.msra.mxu0 0.0
    %963 = vmatprep.subr.mxu0 0.0
    %964 = vmatpush1.msra.mxu0 0.0
    %965 = vmatprep.subr.mxu0 0.0
    %966 = vmatpush1.msra.mxu0 0.0
    %967 = vmatprep.subr.mxu0 0.0
    %968 = vmatpush1.msra.mxu0 0.0
    %969 = vmatprep.subr.mxu0 0.0
    %970 = vmatpush1.msra.mxu0 0.0
    %971 = vmatprep.subr.mxu0 0.0
    %972 = vmatpush1.msra.mxu0 0.0
    %973 = vmatprep.subr.mxu0 0.0
    %974 = vmatpush1.msra.mxu0 0.0
    %975 = vmatprep.subr.mxu0 0.0
    %976 = vmatpush1.msra.mxu0 0.0
    %977 = vmatprep.subr.mxu0 0.0
    %978 = vmatpush1.msra.mxu0 0.0
    %979 = vmatprep.subr.mxu0 0.0
    %980 = vmatpush1.msra.mxu0 0.0
    %981 = vmatprep.subr.mxu0 0.0
    %982 = vmatpush1.msra.mxu0 %v28
    %983 = vmatprep.subr.mxu0 0.0
    %984 = vmatpush2.msra.mxu0 0.0
    %985 = vmatprep.subr.mxu0 0.0
    %986 = vmatpush2.msra.mxu0 0.0
    %987 = vmatprep.subr.mxu0 0.0
    %988 = vmatpush2.msra.mxu0 0.0
    %989 = vmatprep.subr.mxu0 0.0
    %990 = vmatpush2.msra.mxu0 0.0
    %991 = vmatprep.subr.mxu0 0.0
    %992 = vmatpush2.msra.mxu0 0.0
    %993 = vmatprep.subr.mxu0 0.0
    %994 = vmatpush2.msra.mxu0 0.0
    %995 = vmatprep.subr.mxu0 0.0
    %996 = vmatpush2.msra.mxu0 0.0
    %997 = vmatprep.subr.mxu0 0.0
    %998 = vmatpush2.msra.mxu0 0.0
    %999 = vmatprep.subr.mxu0 0.0
    %1000 = vmatpush2.msra.mxu0 0.0
    %1001 = vmatprep.subr.mxu0 0.0
    %1002 = vmatpush2.msra.mxu0 0.0
    %1003 = vmatprep.subr.mxu0 0.0
    %1004 = vmatpush2.msra.mxu0 0.0
    %1005 = vmatprep.subr.mxu0 0.0
    %1006 = vmatpush2.msra.mxu0 0.0
    %1007 = vmatprep.subr.mxu0 0.0
    %1008 = vmatpush2.msra.mxu0 0.0
    %1009 = vmatprep.subr.mxu0 0.0
    %1010 = vmatpush2.msra.mxu0 0.0
    %1011 = vmatprep.subr.mxu0 0.0
    %1012 = vmatpush2.msra.mxu0 0.0
    %1013 = vmatprep.subr.mxu0 0.0
    %1014 = vmatpush2.msra.mxu0 0.0
    %1015 = vmatprep.mubr.f32.mxu0 0.0
    %1016 = vmatmul.mubr.f32.gmra.mxu0 %v949
    %v1017 = vpop.f32.mrf.mxu0
    %v1018 = vadd.f32 0.0, %v1017
    %v1019 = vpop.f32.mrf.mxu0
    %1020 = vdwg.mxu0
    %1022 = vrot.lane.b32.xlu0 %v261, 96
    %v1023 = vpop.permute.xlu0 %1022
    %v1024 = vsel %vm102, %v261, 0
    %v1026 = vsel %vm102, %v1023, 0
    %1028 = vmatprep.subr.mxu0 0.0
    %1029 = vmatpush1.xpose.msra.mxu0 0.0
    %1030 = vmatprep.subr.mxu0 0.0
    %1031 = vmatpush1.xpose.msra.mxu0 0.0
    %1032 = vmatprep.subr.mxu0 0.0
    %1033 = vmatpush1.xpose.msra.mxu0 0.0
    %1034 = vmatprep.subr.mxu0 0.0
    %1035 = vmatpush1.xpose.msra.mxu0 0.0
    %1036 = vmatprep.subr.mxu0 0.0
    %1037 = vmatpush1.xpose.msra.mxu0 0.0
    %1038 = vmatprep.subr.mxu0 0.0
    %1039 = vmatpush1.xpose.msra.mxu0 0.0
    %1040 = vmatprep.subr.mxu0 0.0
    %1041 = vmatpush1.xpose.msra.mxu0 0.0
    %1042 = vmatprep.subr.mxu0 0.0
    %1043 = vmatpush1.xpose.msra.mxu0 0.0
    %1044 = vmatprep.subr.mxu0 0.0
    %1045 = vmatpush1.xpose.msra.mxu0 0.0
    %1046 = vmatprep.subr.mxu0 0.0
    %1047 = vmatpush1.xpose.msra.mxu0 0.0
    %1048 = vmatprep.subr.mxu0 0.0
    %1049 = vmatpush1.xpose.msra.mxu0 0.0
    %1050 = vmatprep.subr.mxu0 0.0
    %1051 = vmatpush1.xpose.msra.mxu0 0.0
    %1052 = vmatprep.subr.mxu0 0.0
    %1053 = vmatpush1.xpose.msra.mxu0 0.0
    %1054 = vmatprep.subr.mxu0 0.0
    %1055 = vmatpush1.xpose.msra.mxu0 0.0
    %1056 = vmatprep.subr.mxu0 0.0
    %1057 = vmatpush1.xpose.msra.mxu0 0.0
    %1058 = vmatprep.subr.mxu0 0.0
    %1059 = vmatpush1.xpose.msra.mxu0 %v1026
    %1060 = vmatprep.subr.mxu0 0.0
    %1061 = vmatpush2.xpose.msra.mxu0 0.0
    %1062 = vmatprep.subr.mxu0 0.0
    %1063 = vmatpush2.xpose.msra.mxu0 0.0
    %1064 = vmatprep.subr.mxu0 0.0
    %1065 = vmatpush2.xpose.msra.mxu0 0.0
    %1066 = vmatprep.subr.mxu0 0.0
    %1067 = vmatpush2.xpose.msra.mxu0 0.0
    %1068 = vmatprep.subr.mxu0 0.0
    %1069 = vmatpush2.xpose.msra.mxu0 0.0
    %1070 = vmatprep.subr.mxu0 0.0
    %1071 = vmatpush2.xpose.msra.mxu0 0.0
    %1072 = vmatprep.subr.mxu0 0.0
    %1073 = vmatpush2.xpose.msra.mxu0 0.0
    %1074 = vmatprep.subr.mxu0 0.0
    %1075 = vmatpush2.xpose.msra.mxu0 0.0
    %1076 = vmatprep.subr.mxu0 0.0
    %1077 = vmatpush2.xpose.msra.mxu0 0.0
    %1078 = vmatprep.subr.mxu0 0.0
    %1079 = vmatpush2.xpose.msra.mxu0 0.0
    %1080 = vmatprep.subr.mxu0 0.0
    %1081 = vmatpush2.xpose.msra.mxu0 0.0
    %1082 = vmatprep.subr.mxu0 0.0
    %1083 = vmatpush2.xpose.msra.mxu0 0.0
    %1084 = vmatprep.subr.mxu0 0.0
    %1085 = vmatpush2.xpose.msra.mxu0 0.0
    %1086 = vmatprep.subr.mxu0 0.0
    %1087 = vmatpush2.xpose.msra.mxu0 0.0
    %1088 = vmatprep.subr.mxu0 0.0
    %1089 = vmatpush2.xpose.msra.mxu0 0.0
    %1090 = vmatprep.subr.mxu0 0.0
    %1091 = vmatpush2.xpose.msra.mxu0 0.0
    %1092 = vmatprep.mubr.f32.mxu0 0.0
    %1093 = vmatmul.mubr.f32.gmra.mxu0 %v1024
    %v1094 = vpop.f32.mrf.mxu0
    %v1095 = vadd.f32 0.0, %v1094
    %v1096 = vpop.f32.mrf.mxu0
    %1097 = vdwg.mxu0
    %v1098 = vmul.f32 %v1095, 0.25
    %v1099 = vlaneseq
    %v1100 = vshrl.u32 %v1099, 7
    %v1101 = vsub.s32 1, %v1100
    %v1102 = vrot.slane %v425, %v1101
    %vm1103 = vcmp.eq.s32.totalorder %v1102, 1
    %1105 = vrot.lane.b32.xlu0 %v1098, 32
    %v1106 = vpop.permute.xlu0 %1105
    %v1108 = vsel %vm1103, -1e+09, %v1106
    %v1109 = vsel %vm436, %v1108, -inf
    %1110 = vmax.xlane.f32.xlu0 %v1109
    %v1111 = vpop.xlane.xlu0 %1110
    %v1112 = vsub.f32 %v1108, %v1111
    %v1113 = vmul.f32 %v1112, 1.442695
    %v1114 = vpow.pop %v1113
    %1116 = vrot.lane.b32.xlu0 %v1114, 96
    %v1117 = vpop.permute.xlu0 %1116
    %v1119 = vsel %vm100, %v1117, 0.0
    %1120 = vadd.xlane.f32.xlu0 %v1119
    %v1121 = vpop.xlane.xlu0 %1120
    %v1122 = vrcp.pop %v1121
    %v1123 = vmul.f32 %v1114, %v1122
    %vm1124 = vcmask 123905
    %v1125 = vsel %vm1124, %v456, 0.0
    %1126 = vadd.xlane.f32.xlu0 %v1125
    %v1127 = vpop.xlane.xlu0 %1126
    %v1128 = vmul.f32 %v1127, 0.25
    %v1129 = vxor.u32 %v1128, 2147483648
    %v1130 = vmul.f32 %v1129, 1.442695
    %v1131 = vpow.pop %v1130
    %v1132 = vadd.f32 %v1131, 1.0
    %v1133 = vrcp.pop %v1132
    %v1134 = vmul.f32 1.0, %v1133
    %v1135 = vmul.f32 %v1134, %v32
    %v1136 = vlaneseq
    %v1137 = vshrl.u32 %v1136, 7
    %v1138 = vsub.s32 1, %v1137
    %v1139 = vrot.slane %v338, %v1138
    %v1140 = vadd.f32 %v261, %v1139
    %v1141 = vxor.u32 %v1140, 2147483648
    %v1142 = vmul.f32 %v1141, 1.442695
    %v1143 = vpow.pop %v1142
    %v1144 = vadd.f32 %v1143, 1.0
    %v1145 = vrcp.pop %v1144
    %v1146 = vmul.f32 1.0, %v1145
    %v1147 = vadd.f32 %v1123, 0.0
    %1149 = vrot.lane.b32.xlu0 %v1146, 126
    %v1150 = vpop.permute.xlu0 %1149
    %v1152 = vadd.f32 %v1146, %v1150
    %v1153 = vsub.f32 1.0, %v1152
    %1155 = vset.pattern.permute.xlu0 64
    %1156 = vperm.xlu0 %1155, %v1153
    %v1157 = vpop.permute.xlu0 %1156
    %v1159 = vlaneseq
    %v1160 = vshrl.u32 %v1159, 7
    %v1161 = vsub.s32 1, %v1160
    %v1162 = vrot.slane %v1135, %v1161
    %v1163 = vmul.f32 %v1157, %v1162
    %v1164 = vadd.f32 %v1147, %v1163
    %1165 = vrot.lane.b32.xlu0 %v261, 112
    %v1166 = vpop.permute.xlu0 %1165
    %1167 = vrot.lane.b32.xlu0 %v261, 80
    %v1168 = vpop.permute.xlu0 %1167
    %v1169 = vsel %vm102, %v1166, 0
    %v1171 = vsel %vm102, %v1168, 0
    %1173 = vmatprep.subr.mxu0 0.0
    %1174 = vmatpush1.xpose.msra.mxu0 0.0
    %1175 = vmatprep.subr.mxu0 0.0
    %1176 = vmatpush1.xpose.msra.mxu0 0.0
    %1177 = vmatprep.subr.mxu0 0.0
    %1178 = vmatpush1.xpose.msra.mxu0 0.0
    %1179 = vmatprep.subr.mxu0 0.0
    %1180 = vmatpush1.xpose.msra.mxu0 0.0
    %1181 = vmatprep.subr.mxu0 0.0
    %1182 = vmatpush1.xpose.msra.mxu0 0.0
    %1183 = vmatprep.subr.mxu0 0.0
    %1184 = vmatpush1.xpose.msra.mxu0 0.0
    %1185 = vmatprep.subr.mxu0 0.0
    %1186 = vmatpush1.xpose.msra.mxu0 0.0
    %1187 = vmatprep.subr.mxu0 0.0
    %1188 = vmatpush1.xpose.msra.mxu0 0.0
    %1189 = vmatprep.subr.mxu0 0.0
    %1190 = vmatpush1.xpose.msra.mxu0 0.0
    %1191 = vmatprep.subr.mxu0 0.0
    %1192 = vmatpush1.xpose.msra.mxu0 0.0
    %1193 = vmatprep.subr.mxu0 0.0
    %1194 = vmatpush1.xpose.msra.mxu0 0.0
    %1195 = vmatprep.subr.mxu0 0.0
    %1196 = vmatpush1.xpose.msra.mxu0 0.0
    %1197 = vmatprep.subr.mxu0 0.0
    %1198 = vmatpush1.xpose.msra.mxu0 0.0
    %1199 = vmatprep.subr.mxu0 0.0
    %1200 = vmatpush1.xpose.msra.mxu0 0.0
    %1201 = vmatprep.subr.mxu0 0.0
    %1202 = vmatpush1.xpose.msra.mxu0 0.0
    %1203 = vmatprep.subr.mxu0 0.0
    %1204 = vmatpush1.xpose.msra.mxu0 %v1171
    %1205 = vmatprep.subr.mxu0 0.0
    %1206 = vmatpush2.xpose.msra.mxu0 0.0
    %1207 = vmatprep.subr.mxu0 0.0
    %1208 = vmatpush2.xpose.msra.mxu0 0.0
    %1209 = vmatprep.subr.mxu0 0.0
    %1210 = vmatpush2.xpose.msra.mxu0 0.0
    %1211 = vmatprep.subr.mxu0 0.0
    %1212 = vmatpush2.xpose.msra.mxu0 0.0
    %1213 = vmatprep.subr.mxu0 0.0
    %1214 = vmatpush2.xpose.msra.mxu0 0.0
    %1215 = vmatprep.subr.mxu0 0.0
    %1216 = vmatpush2.xpose.msra.mxu0 0.0
    %1217 = vmatprep.subr.mxu0 0.0
    %1218 = vmatpush2.xpose.msra.mxu0 0.0
    %1219 = vmatprep.subr.mxu0 0.0
    %1220 = vmatpush2.xpose.msra.mxu0 0.0
    %1221 = vmatprep.subr.mxu0 0.0
    %1222 = vmatpush2.xpose.msra.mxu0 0.0
    %1223 = vmatprep.subr.mxu0 0.0
    %1224 = vmatpush2.xpose.msra.mxu0 0.0
    %1225 = vmatprep.subr.mxu0 0.0
    %1226 = vmatpush2.xpose.msra.mxu0 0.0
    %1227 = vmatprep.subr.mxu0 0.0
    %1228 = vmatpush2.xpose.msra.mxu0 0.0
    %1229 = vmatprep.subr.mxu0 0.0
    %1230 = vmatpush2.xpose.msra.mxu0 0.0
    %1231 = vmatprep.subr.mxu0 0.0
    %1232 = vmatpush2.xpose.msra.mxu0 0.0
    %1233 = vmatprep.subr.mxu0 0.0
    %1234 = vmatpush2.xpose.msra.mxu0 0.0
    %1235 = vmatprep.subr.mxu0 0.0
    %1236 = vmatpush2.xpose.msra.mxu0 0.0
    %1237 = vmatprep.mubr.f32.mxu0 0.0
    %1238 = vmatmul.mubr.f32.gmra.mxu0 %v1169
    %v1239 = vpop.f32.mrf.mxu0
    %v1240 = vadd.f32 0.0, %v1239
    %v1241 = vpop.f32.mrf.mxu0
    %1242 = vdwg.mxu0
    %v1243 = vmul.f32 %v1240, 0.25
    %1245 = vrot.lane.b32.xlu0 %v1243, 32
    %v1246 = vpop.permute.xlu0 %1245
    %v1248 = vsel %vm1103, -1e+09, %v1246
    %v1249 = vsel %vm436, %v1248, -inf
    %1250 = vmax.xlane.f32.xlu0 %v1249
    %v1251 = vpop.xlane.xlu0 %1250
    %v1252 = vsub.f32 %v1248, %v1251
    %v1253 = vmul.f32 %v1252, 1.442695
    %v1254 = vpow.pop %v1253
    %1256 = vrot.lane.b32.xlu0 %v1254, 96
    %v1257 = vpop.permute.xlu0 %1256
    %v1259 = vsel %vm100, %v1257, 0.0
    %1260 = vadd.xlane.f32.xlu0 %v1259
    %v1261 = vpop.xlane.xlu0 %1260
    %v1262 = vrcp.pop %v1261
    %v1263 = vmul.f32 %v1254, %v1262
    %v1264 = vsel %vm1124, %v599, 0.0
    %1265 = vadd.xlane.f32.xlu0 %v1264
    %v1266 = vpop.xlane.xlu0 %1265
    %v1267 = vmul.f32 %v1266, 0.25
    %v1268 = vxor.u32 %v1267, 2147483648
    %v1269 = vmul.f32 %v1268, 1.442695
    %v1270 = vpow.pop %v1269
    %v1271 = vadd.f32 %v1270, 1.0
    %v1272 = vrcp.pop %v1271
    %v1273 = vmul.f32 1.0, %v1272
    %v1274 = vmul.f32 %v1273, %v32
    %v1275 = vadd.f32 %v1164, %v1263
    %1276 = vset.pattern.permute.xlu0 65
    %1277 = vperm.xlu0 %1276, %v1153
    %v1278 = vpop.permute.xlu0 %1277
    %v1280 = vlaneseq
    %v1281 = vshrl.u32 %v1280, 7
    %v1282 = vsub.s32 1, %v1281
    %v1283 = vrot.slane %v1274, %v1282
    %v1284 = vmul.f32 %v1278, %v1283
    %v1285 = vadd.f32 %v1275, %v1284
    %1287 = vrot.lane.b32.xlu0 %v1285, 96
    %v1288 = vpop.permute.xlu0 %1287
    %v1290 = vrot.slane %v1285, 1
    %1291 = vrot.lane.b32.xlu0 %v1290, 104
    %v1292 = vpop.permute.xlu0 %1291
    %v1294 = vrot.slane %v1285, 2
    %1295 = vrot.lane.b32.xlu0 %v1294, 112
    %v1296 = vpop.permute.xlu0 %1295
    %v1298 = vrot.slane %v1285, 3
    %1299 = vrot.lane.b32.xlu0 %v1298, 120
    %v1300 = vpop.permute.xlu0 %1299
    %v1302 = vrot.slane %v1285, 4
    %v1304 = vrot.slane %v1285, 5
    %1305 = vrot.lane.b32.xlu0 %v1304, 8
    %v1306 = vpop.permute.xlu0 %1305
    %v1308 = vrot.slane %v1285, 6
    %1309 = vrot.lane.b32.xlu0 %v1308, 16
    %v1310 = vpop.permute.xlu0 %1309
    %v1312 = vrot.slane %v1285, 7
    %1313 = vrot.lane.b32.xlu0 %v1312, 24
    %v1314 = vpop.permute.xlu0 %1313
    %v1316 = vsel %vm100, %v1288, %v1292
    %v1317 = vsel %vm102, %v1316, %v1296
    %v1318 = vsel %vm655, %v1317, %v1300
    %v1319 = vsel %vm182, %v1318, %v1302
    %v1320 = vsel %vm658, %v1319, %v1306
    %v1321 = vsel %vm660, %v1320, %v1310
    %v1322 = vsel %vm662, %v1321, %v1314
    %1323 = vrot.lane.b32.xlu0 %v1285, 127
    %v1324 = vpop.permute.xlu0 %1323
    %1326 = vrot.lane.b32.xlu0 %v1285, 126
    %v1327 = vpop.permute.xlu0 %1326
    %1329 = vrot.lane.b32.xlu0 %v1285, 125
    %v1330 = vpop.permute.xlu0 %1329
    %1332 = vrot.lane.b32.xlu0 %v1285, 124
    %v1333 = vpop.permute.xlu0 %1332
    %1335 = vrot.lane.b32.xlu0 %v1285, 123
    %v1336 = vpop.permute.xlu0 %1335
    %1338 = vrot.lane.b32.xlu0 %v1285, 122
    %v1339 = vpop.permute.xlu0 %1338
    %1341 = vrot.lane.b32.xlu0 %v1285, 121
    %v1342 = vpop.permute.xlu0 %1341
    %v1344 = vlaneseq
    %v1345 = vshrl.u32 %v1344, 7
    %v1346 = vsub.s32 0, %v1345
    %v1347 = vrot.slane %v1322, %v1346
    %1348 = vset.pattern.permute.xlu0 32
    %1349 = vperm.xlu0 %1348, %v1285
    %v1350 = vpop.permute.xlu0 %1349
    %1352 = vset.pattern.permute.xlu0 32
    %1353 = vperm.xlu0 %1352, %v1324
    %v1354 = vpop.permute.xlu0 %1353
    %1356 = vset.pattern.permute.xlu0 32
    %1357 = vperm.xlu0 %1356, %v1327
    %v1358 = vpop.permute.xlu0 %1357
    %1360 = vset.pattern.permute.xlu0 32
    %1361 = vperm.xlu0 %1360, %v1330
    %v1362 = vpop.permute.xlu0 %1361
    %1364 = vset.pattern.permute.xlu0 32
    %1365 = vperm.xlu0 %1364, %v1333
    %v1366 = vpop.permute.xlu0 %1365
    %1368 = vset.pattern.permute.xlu0 32
    %1369 = vperm.xlu0 %1368, %v1336
    %v1370 = vpop.permute.xlu0 %1369
    %1372 = vset.pattern.permute.xlu0 32
    %1373 = vperm.xlu0 %1372, %v1339
    %v1374 = vpop.permute.xlu0 %1373
    %1376 = vset.pattern.permute.xlu0 32
    %1377 = vperm.xlu0 %1376, %v1342
    %v1378 = vpop.permute.xlu0 %1377
    %vm1380 = vcmp.ge.f32.partialorder %v1347, %v1350
    %vm1381 = vcmp.ge.f32.partialorder %v1347, %v1354
    %vm1382 = vcmp.ge.f32.partialorder %v1347, %v1358
    %vm1383 = vcmp.ge.f32.partialorder %v1347, %v1362
    %vm1384 = vcmp.ge.f32.partialorder %v1347, %v1366
    %vm1385 = vcmp.ge.f32.partialorder %v1347, %v1370
    %vm1386 = vcmp.ge.f32.partialorder %v1347, %v1374
    %vm1387 = vcmp.ge.f32.partialorder %v1347, %v1378
    %v1388 = vsel %vm1380, 1, 0
    %v1389 = vsel %vm1381, 1, 0
    %v1390 = vsel %vm1382, 1, 0
    %v1391 = vsel %vm1383, 1, 0
    %v1392 = vsel %vm1384, 1, 0
    %v1393 = vsel %vm1385, 1, 0
    %v1394 = vsel %vm1386, 1, 0
    %v1395 = vsel %vm1387, 1, 0
    %v1396 = vcvt.s32.f32 %v1388
    %v1397 = vcvt.s32.f32 %v1389
    %v1398 = vcvt.s32.f32 %v1390
    %v1399 = vcvt.s32.f32 %v1391
    %v1400 = vcvt.s32.f32 %v1392
    %v1401 = vcvt.s32.f32 %v1393
    %v1402 = vcvt.s32.f32 %v1394
    %v1403 = vcvt.s32.f32 %v1395
    %v1404 = vsel %vm745, %v1396, 0.0
    %1405 = vadd.xlane.f32.xlu0 %v1404
    %v1406 = vpop.xlane.xlu0 %1405
    %v1407 = vsel %vm745, %v1397, 0.0
    %1408 = vadd.xlane.f32.xlu0 %v1407
    %v1409 = vpop.xlane.xlu0 %1408
    %v1410 = vsel %vm745, %v1398, 0.0
    %1411 = vadd.xlane.f32.xlu0 %v1410
    %v1412 = vpop.xlane.xlu0 %1411
    %v1413 = vsel %vm745, %v1399, 0.0
    %1414 = vadd.xlane.f32.xlu0 %v1413
    %v1415 = vpop.xlane.xlu0 %1414
    %v1416 = vsel %vm745, %v1400, 0.0
    %1417 = vadd.xlane.f32.xlu0 %v1416
    %v1418 = vpop.xlane.xlu0 %1417
    %v1419 = vsel %vm745, %v1401, 0.0
    %1420 = vadd.xlane.f32.xlu0 %v1419
    %v1421 = vpop.xlane.xlu0 %1420
    %v1422 = vsel %vm745, %v1402, 0.0
    %1423 = vadd.xlane.f32.xlu0 %v1422
    %v1424 = vpop.xlane.xlu0 %1423
    %v1425 = vsel %vm745, %v1403, 0.0
    %1426 = vadd.xlane.f32.xlu0 %v1425
    %v1427 = vpop.xlane.xlu0 %1426
    %vm1428 = vcmp.ge.f32.partialorder %v1406, 4.0
    %vm1429 = vcmp.ge.f32.partialorder %v1409, 4.0
    %vm1430 = vcmp.ge.f32.partialorder %v1412, 4.0
    %vm1431 = vcmp.ge.f32.partialorder %v1415, 4.0
    %vm1432 = vcmp.ge.f32.partialorder %v1418, 4.0
    %vm1433 = vcmp.ge.f32.partialorder %v1421, 4.0
    %vm1434 = vcmp.ge.f32.partialorder %v1424, 4.0
    %vm1435 = vcmp.ge.f32.partialorder %v1427, 4.0
    %v1436 = vsel %vm1428, %v1285, -1e+30
    %v1437 = vsel %vm1429, %v1324, -1e+30
    %v1438 = vsel %vm1430, %v1327, -1e+30
    %v1439 = vsel %vm1431, %v1330, -1e+30
    %v1440 = vsel %vm1432, %v1333, -1e+30
    %v1441 = vsel %vm1433, %v1336, -1e+30
    %v1442 = vsel %vm1434, %v1339, -1e+30
    %v1443 = vsel %vm1435, %v1342, -1e+30
    %v1444 = vsel %vm786, %v1436, -inf
    %v1445 = vsel %vm786, %v1437, -inf
    %v1446 = vsel %vm786, %v1438, -inf
    %v1447 = vsel %vm786, %v1439, -inf
    %v1448 = vsel %vm786, %v1440, -inf
    %v1449 = vmax.f32 %v1444, %v1448
    %v1450 = vsel %vm786, %v1441, -inf
    %v1451 = vmax.f32 %v1445, %v1450
    %v1452 = vsel %vm786, %v1442, -inf
    %v1453 = vmax.f32 %v1446, %v1452
    %v1454 = vsel %vm786, %v1443, -inf
    %v1455 = vmax.f32 %v1447, %v1454
    %v1456 = vmax.f32 %v1449, %v1451
    %v1457 = vmax.f32 %v1453, %v1455
    %v1458 = vmax.f32 %v1456, %v1457
    %v1459 = vrot.slane %v1458, 4
    %v1460 = vmax.f32 %v1458, %v1459
    %v1461 = vrot.slane %v1460, 2
    %v1462 = vmax.f32 %v1460, %v1461
    %v1463 = vrot.slane %v1462, 1
    %v1464 = vmax.f32 %v1462, %v1463
    %1466 = vset.pattern.permute.xlu0 32
    %1467 = vperm.xlu0 %1466, %v1464
    %v1468 = vpop.permute.xlu0 %1467
    %vm1470 = vcmp.ge.f32.partialorder %v1285, %v1468
    %v1471 = vsel %vm1470, 1, 0
    %v1472 = vcvt.s32.f32 %v1471
    %1474 = vrot.lane.b32.xlu0 %v1472, 96
    %v1475 = vpop.permute.xlu0 %1474
    %1477 = vxpose.xlu0.b32.start [1/16] %v1475, 128
    %1478 = vxpose.xlu0.b32.cont [2/16] 0.0, 128
    %1479 = vxpose.xlu0.b32.cont [3/16] 0.0, 128
    %1480 = vxpose.xlu0.b32.cont [4/16] 0.0, 128
    %1481 = vxpose.xlu0.b32.cont [5/16] 0.0, 128
    %1482 = vxpose.xlu0.b32.cont [6/16] 0.0, 128
    %1483 = vxpose.xlu0.b32.cont [7/16] 0.0, 128
    %1484 = vxpose.xlu0.b32.cont [8/16] 0.0, 128
    %1485 = vxpose.xlu0.b32.cont [9/16] 0.0, 128
    %1486 = vxpose.xlu0.b32.cont [10/16] 0.0, 128
    %1487 = vxpose.xlu0.b32.cont [11/16] 0.0, 128
    %1488 = vxpose.xlu0.b32.cont [12/16] 0.0, 128
    %1489 = vxpose.xlu0.b32.cont [13/16] 0.0, 128
    %1490 = vxpose.xlu0.b32.cont [14/16] 0.0, 128
    %1491 = vxpose.xlu0.b32.cont [15/16] 0.0, 128
    %1492 = vxpose.xlu0.b32.end [16/16] 0.0, 128
    %v1493 = vpop.trf.xlu0
    %v1494 = vpop.trf.xlu0
    %v1495 = vpop.trf.xlu0
    %v1496 = vpop.trf.xlu0
    %v1497 = vpop.trf.xlu0
    %v1498 = vpop.trf.xlu0
    %v1499 = vpop.trf.xlu0
    %v1500 = vpop.trf.xlu0
    %v1501 = vpop.trf.xlu0
    %v1502 = vpop.trf.xlu0
    %v1503 = vpop.trf.xlu0
    %v1504 = vpop.trf.xlu0
    %v1505 = vpop.trf.xlu0
    %v1506 = vpop.trf.xlu0
    %v1507 = vpop.trf.xlu0
    %v1508 = vpop.trf.xlu0
    %1510 = vrot.lane.b32.xlu0 %v1493, 32
    %v1511 = vpop.permute.xlu0 %1510
    %v1513 = vadd.f32 %v1472, %v1511
    %v1514 = vmul.f32 %v1513, %v860
    %v1515 = vadd.f32 %v1514, %v865
    %v1516 = vmul.f32 %v1515, %v1472
    %v1517 = vsel %vm100, %v31, 0.0
    %1518 = vadd.xlane.f32.xlu0 %v1517
    %v1519 = vpop.xlane.xlu0 %1518
    %v1520 = vadd.f32 %v1519, 1.0
    %v1522 = vsel %vm100, %v31, 0
    %1524 = vmatprep.subr.mxu0 0.0
    %1525 = vmatpush1.msra.mxu0 0.0
    %1526 = vmatprep.subr.mxu0 0.0
    %1527 = vmatpush1.msra.mxu0 0.0
    %1528 = vmatprep.subr.mxu0 0.0
    %1529 = vmatpush1.msra.mxu0 0.0
    %1530 = vmatprep.subr.mxu0 0.0
    %1531 = vmatpush1.msra.mxu0 0.0
    %1532 = vmatprep.subr.mxu0 0.0
    %1533 = vmatpush1.msra.mxu0 0.0
    %1534 = vmatprep.subr.mxu0 0.0
    %1535 = vmatpush1.msra.mxu0 0.0
    %1536 = vmatprep.subr.mxu0 0.0
    %1537 = vmatpush1.msra.mxu0 0.0
    %1538 = vmatprep.subr.mxu0 0.0
    %1539 = vmatpush1.msra.mxu0 0.0
    %1540 = vmatprep.subr.mxu0 0.0
    %1541 = vmatpush1.msra.mxu0 0.0
    %1542 = vmatprep.subr.mxu0 0.0
    %1543 = vmatpush1.msra.mxu0 0.0
    %1544 = vmatprep.subr.mxu0 0.0
    %1545 = vmatpush1.msra.mxu0 0.0
    %1546 = vmatprep.subr.mxu0 0.0
    %1547 = vmatpush1.msra.mxu0 0.0
    %1548 = vmatprep.subr.mxu0 0.0
    %1549 = vmatpush1.msra.mxu0 0.0
    %1550 = vmatprep.subr.mxu0 0.0
    %1551 = vmatpush1.msra.mxu0 0.0
    %1552 = vmatprep.subr.mxu0 0.0
    %1553 = vmatpush1.msra.mxu0 0.0
    %1554 = vmatprep.subr.mxu0 0.0
    %1555 = vmatpush1.msra.mxu0 %v29
    %1556 = vmatprep.subr.mxu0 0.0
    %1557 = vmatpush2.msra.mxu0 0.0
    %1558 = vmatprep.subr.mxu0 0.0
    %1559 = vmatpush2.msra.mxu0 0.0
    %1560 = vmatprep.subr.mxu0 0.0
    %1561 = vmatpush2.msra.mxu0 0.0
    %1562 = vmatprep.subr.mxu0 0.0
    %1563 = vmatpush2.msra.mxu0 0.0
    %1564 = vmatprep.subr.mxu0 0.0
    %1565 = vmatpush2.msra.mxu0 0.0
    %1566 = vmatprep.subr.mxu0 0.0
    %1567 = vmatpush2.msra.mxu0 0.0
    %1568 = vmatprep.subr.mxu0 0.0
    %1569 = vmatpush2.msra.mxu0 0.0
    %1570 = vmatprep.subr.mxu0 0.0
    %1571 = vmatpush2.msra.mxu0 0.0
    %1572 = vmatprep.subr.mxu0 0.0
    %1573 = vmatpush2.msra.mxu0 0.0
    %1574 = vmatprep.subr.mxu0 0.0
    %1575 = vmatpush2.msra.mxu0 0.0
    %1576 = vmatprep.subr.mxu0 0.0
    %1577 = vmatpush2.msra.mxu0 0.0
    %1578 = vmatprep.subr.mxu0 0.0
    %1579 = vmatpush2.msra.mxu0 0.0
    %1580 = vmatprep.subr.mxu0 0.0
    %1581 = vmatpush2.msra.mxu0 0.0
    %1582 = vmatprep.subr.mxu0 0.0
    %1583 = vmatpush2.msra.mxu0 0.0
    %1584 = vmatprep.subr.mxu0 0.0
    %1585 = vmatpush2.msra.mxu0 0.0
    %1586 = vmatprep.subr.mxu0 0.0
    %1587 = vmatpush2.msra.mxu0 0.0
    %1588 = vmatprep.mubr.f32.mxu0 0.0
    %1589 = vmatmul.mubr.f32.gmra.mxu0 %v1522
    %v1590 = vpop.f32.mrf.mxu0
    %v1591 = vadd.f32 0.0, %v1590
    %v1592 = vpop.f32.mrf.mxu0
    %1593 = vdwg.mxu0
    %1595 = vrot.lane.b32.xlu0 %v1516, 96
    %v1596 = vpop.permute.xlu0 %1595
    %v1597 = vsel %vm100, %v1596, 0
    %1599 = vmatprep.subr.mxu0 0.0
    %1600 = vmatpush1.msra.mxu0 0.0
    %1601 = vmatprep.subr.mxu0 0.0
    %1602 = vmatpush1.msra.mxu0 0.0
    %1603 = vmatprep.subr.mxu0 0.0
    %1604 = vmatpush1.msra.mxu0 0.0
    %1605 = vmatprep.subr.mxu0 0.0
    %1606 = vmatpush1.msra.mxu0 0.0
    %1607 = vmatprep.subr.mxu0 0.0
    %1608 = vmatpush1.msra.mxu0 0.0
    %1609 = vmatprep.subr.mxu0 0.0
    %1610 = vmatpush1.msra.mxu0 0.0
    %1611 = vmatprep.subr.mxu0 0.0
    %1612 = vmatpush1.msra.mxu0 0.0
    %1613 = vmatprep.subr.mxu0 0.0
    %1614 = vmatpush1.msra.mxu0 0.0
    %1615 = vmatprep.subr.mxu0 0.0
    %1616 = vmatpush1.msra.mxu0 0.0
    %1617 = vmatprep.subr.mxu0 0.0
    %1618 = vmatpush1.msra.mxu0 0.0
    %1619 = vmatprep.subr.mxu0 0.0
    %1620 = vmatpush1.msra.mxu0 0.0
    %1621 = vmatprep.subr.mxu0 0.0
    %1622 = vmatpush1.msra.mxu0 0.0
    %1623 = vmatprep.subr.mxu0 0.0
    %1624 = vmatpush1.msra.mxu0 0.0
    %1625 = vmatprep.subr.mxu0 0.0
    %1626 = vmatpush1.msra.mxu0 0.0
    %1627 = vmatprep.subr.mxu0 0.0
    %1628 = vmatpush1.msra.mxu0 0.0
    %1629 = vmatprep.subr.mxu0 0.0
    %1630 = vmatpush1.msra.mxu0 %v29
    %1631 = vmatprep.subr.mxu0 0.0
    %1632 = vmatpush2.msra.mxu0 0.0
    %1633 = vmatprep.subr.mxu0 0.0
    %1634 = vmatpush2.msra.mxu0 0.0
    %1635 = vmatprep.subr.mxu0 0.0
    %1636 = vmatpush2.msra.mxu0 0.0
    %1637 = vmatprep.subr.mxu0 0.0
    %1638 = vmatpush2.msra.mxu0 0.0
    %1639 = vmatprep.subr.mxu0 0.0
    %1640 = vmatpush2.msra.mxu0 0.0
    %1641 = vmatprep.subr.mxu0 0.0
    %1642 = vmatpush2.msra.mxu0 0.0
    %1643 = vmatprep.subr.mxu0 0.0
    %1644 = vmatpush2.msra.mxu0 0.0
    %1645 = vmatprep.subr.mxu0 0.0
    %1646 = vmatpush2.msra.mxu0 0.0
    %1647 = vmatprep.subr.mxu0 0.0
    %1648 = vmatpush2.msra.mxu0 0.0
    %1649 = vmatprep.subr.mxu0 0.0
    %1650 = vmatpush2.msra.mxu0 0.0
    %1651 = vmatprep.subr.mxu0 0.0
    %1652 = vmatpush2.msra.mxu0 0.0
    %1653 = vmatprep.subr.mxu0 0.0
    %1654 = vmatpush2.msra.mxu0 0.0
    %1655 = vmatprep.subr.mxu0 0.0
    %1656 = vmatpush2.msra.mxu0 0.0
    %1657 = vmatprep.subr.mxu0 0.0
    %1658 = vmatpush2.msra.mxu0 0.0
    %1659 = vmatprep.subr.mxu0 0.0
    %1660 = vmatpush2.msra.mxu0 0.0
    %1661 = vmatprep.subr.mxu0 0.0
    %1662 = vmatpush2.msra.mxu0 0.0
    %1663 = vmatprep.mubr.f32.mxu0 0.0
    %1664 = vmatmul.mubr.f32.gmra.mxu0 %v1597
    %v1665 = vpop.f32.mrf.mxu0
    %v1666 = vadd.f32 0.0, %v1665
    %v1667 = vpop.f32.mrf.mxu0
    %1668 = vdwg.mxu0
    %v1670 = vsel %vm182, %v1018, 0
    %v1673 = vsel %vm182, %v1666, 0
    %1675 = vmatprep.subr.mxu0 0.0
    %1676 = vmatpush1.msra.mxu0 0.0
    %1677 = vmatprep.subr.mxu0 0.0
    %1678 = vmatpush1.msra.mxu0 0.0
    %1679 = vmatprep.subr.mxu0 0.0
    %1680 = vmatpush1.msra.mxu0 0.0
    %1681 = vmatprep.subr.mxu0 0.0
    %1682 = vmatpush1.msra.mxu0 0.0
    %1683 = vmatprep.subr.mxu0 0.0
    %1684 = vmatpush1.msra.mxu0 0.0
    %1685 = vmatprep.subr.mxu0 0.0
    %1686 = vmatpush1.msra.mxu0 0.0
    %1687 = vmatprep.subr.mxu0 0.0
    %1688 = vmatpush1.msra.mxu0 0.0
    %1689 = vmatprep.subr.mxu0 0.0
    %1690 = vmatpush1.msra.mxu0 0.0
    %1691 = vmatprep.subr.mxu0 0.0
    %1692 = vmatpush1.msra.mxu0 0.0
    %1693 = vmatprep.subr.mxu0 0.0
    %1694 = vmatpush1.msra.mxu0 0.0
    %1695 = vmatprep.subr.mxu0 0.0
    %1696 = vmatpush1.msra.mxu0 0.0
    %1697 = vmatprep.subr.mxu0 0.0
    %1698 = vmatpush1.msra.mxu0 0.0
    %1699 = vmatprep.subr.mxu0 0.0
    %1700 = vmatpush1.msra.mxu0 %v50
    %1701 = vmatprep.subr.mxu0 0.0
    %1702 = vmatpush1.msra.mxu0 %v49
    %1703 = vmatprep.subr.mxu0 0.0
    %1704 = vmatpush1.msra.mxu0 %v48
    %1705 = vmatprep.subr.mxu0 0.0
    %1706 = vmatpush1.msra.mxu0 %v47
    %1707 = vmatprep.subr.mxu0 0.0
    %1708 = vmatpush2.msra.mxu0 0.0
    %1709 = vmatprep.subr.mxu0 0.0
    %1710 = vmatpush2.msra.mxu0 0.0
    %1711 = vmatprep.subr.mxu0 0.0
    %1712 = vmatpush2.msra.mxu0 0.0
    %1713 = vmatprep.subr.mxu0 0.0
    %1714 = vmatpush2.msra.mxu0 0.0
    %1715 = vmatprep.subr.mxu0 0.0
    %1716 = vmatpush2.msra.mxu0 0.0
    %1717 = vmatprep.subr.mxu0 0.0
    %1718 = vmatpush2.msra.mxu0 0.0
    %1719 = vmatprep.subr.mxu0 0.0
    %1720 = vmatpush2.msra.mxu0 0.0
    %1721 = vmatprep.subr.mxu0 0.0
    %1722 = vmatpush2.msra.mxu0 0.0
    %1723 = vmatprep.subr.mxu0 0.0
    %1724 = vmatpush2.msra.mxu0 0.0
    %1725 = vmatprep.subr.mxu0 0.0
    %1726 = vmatpush2.msra.mxu0 0.0
    %1727 = vmatprep.subr.mxu0 0.0
    %1728 = vmatpush2.msra.mxu0 0.0
    %1729 = vmatprep.subr.mxu0 0.0
    %1730 = vmatpush2.msra.mxu0 0.0
    %1731 = vmatprep.subr.mxu0 0.0
    %1732 = vmatpush2.msra.mxu0 0.0
    %1733 = vmatprep.subr.mxu0 0.0
    %1734 = vmatpush2.msra.mxu0 0.0
    %1735 = vmatprep.subr.mxu0 0.0
    %1736 = vmatpush2.msra.mxu0 0.0
    %1737 = vmatprep.subr.mxu0 0.0
    %1738 = vmatpush2.msra.mxu0 0.0
    %1739 = vmatprep.mubr.f32.mxu0 0.0
    %1740 = vmatmul.mubr.f32.gmra.mxu0 %v1670
    %v1741 = vpop.f32.mrf.mxu0
    %v1742 = vadd.f32 0.0, %v1741
    %v1743 = vpop.f32.mrf.mxu0
    %1744 = vmatprep.mubr.f32.mxu0 0.0
    %1745 = vmatmul.mubr.f32.gmra.mxu0 %v1673
    %v1746 = vpop.f32.mrf.mxu0
    %v1747 = vadd.f32 0.0, %v1746
    %v1748 = vpop.f32.mrf.mxu0
    %1749 = vdwg.mxu0
    %v1751 = vsel %vm182, %v943, 0
    %v1754 = vsel %vm182, %v1591, 0
    %1756 = vmatprep.subr.mxu0 0.0
    %1757 = vmatpush1.msra.mxu0 0.0
    %1758 = vmatprep.subr.mxu0 0.0
    %1759 = vmatpush1.msra.mxu0 0.0
    %1760 = vmatprep.subr.mxu0 0.0
    %1761 = vmatpush1.msra.mxu0 0.0
    %1762 = vmatprep.subr.mxu0 0.0
    %1763 = vmatpush1.msra.mxu0 0.0
    %1764 = vmatprep.subr.mxu0 0.0
    %1765 = vmatpush1.msra.mxu0 0.0
    %1766 = vmatprep.subr.mxu0 0.0
    %1767 = vmatpush1.msra.mxu0 0.0
    %1768 = vmatprep.subr.mxu0 0.0
    %1769 = vmatpush1.msra.mxu0 0.0
    %1770 = vmatprep.subr.mxu0 0.0
    %1771 = vmatpush1.msra.mxu0 0.0
    %1772 = vmatprep.subr.mxu0 0.0
    %1773 = vmatpush1.msra.mxu0 0.0
    %1774 = vmatprep.subr.mxu0 0.0
    %1775 = vmatpush1.msra.mxu0 0.0
    %1776 = vmatprep.subr.mxu0 0.0
    %1777 = vmatpush1.msra.mxu0 0.0
    %1778 = vmatprep.subr.mxu0 0.0
    %1779 = vmatpush1.msra.mxu0 0.0
    %1780 = vmatprep.subr.mxu0 0.0
    %1781 = vmatpush1.msra.mxu0 %v46
    %1782 = vmatprep.subr.mxu0 0.0
    %1783 = vmatpush1.msra.mxu0 %v45
    %1784 = vmatprep.subr.mxu0 0.0
    %1785 = vmatpush1.msra.mxu0 %v44
    %1786 = vmatprep.subr.mxu0 0.0
    %1787 = vmatpush1.msra.mxu0 %v43
    %1788 = vmatprep.subr.mxu0 0.0
    %1789 = vmatpush2.msra.mxu0 0.0
    %1790 = vmatprep.subr.mxu0 0.0
    %1791 = vmatpush2.msra.mxu0 0.0
    %1792 = vmatprep.subr.mxu0 0.0
    %1793 = vmatpush2.msra.mxu0 0.0
    %1794 = vmatprep.subr.mxu0 0.0
    %1795 = vmatpush2.msra.mxu0 0.0
    %1796 = vmatprep.subr.mxu0 0.0
    %1797 = vmatpush2.msra.mxu0 0.0
    %1798 = vmatprep.subr.mxu0 0.0
    %1799 = vmatpush2.msra.mxu0 0.0
    %1800 = vmatprep.subr.mxu0 0.0
    %1801 = vmatpush2.msra.mxu0 0.0
    %1802 = vmatprep.subr.mxu0 0.0
    %1803 = vmatpush2.msra.mxu0 0.0
    %1804 = vmatprep.subr.mxu0 0.0
    %1805 = vmatpush2.msra.mxu0 0.0
    %1806 = vmatprep.subr.mxu0 0.0
    %1807 = vmatpush2.msra.mxu0 0.0
    %1808 = vmatprep.subr.mxu0 0.0
    %1809 = vmatpush2.msra.mxu0 0.0
    %1810 = vmatprep.subr.mxu0 0.0
    %1811 = vmatpush2.msra.mxu0 0.0
    %1812 = vmatprep.subr.mxu0 0.0
    %1813 = vmatpush2.msra.mxu0 0.0
    %1814 = vmatprep.subr.mxu0 0.0
    %1815 = vmatpush2.msra.mxu0 0.0
    %1816 = vmatprep.subr.mxu0 0.0
    %1817 = vmatpush2.msra.mxu0 0.0
    %1818 = vmatprep.subr.mxu0 0.0
    %1819 = vmatpush2.msra.mxu0 0.0
    %1820 = vmatprep.mubr.f32.mxu0 0.0
    %1821 = vmatmul.mubr.f32.gmra.mxu0 %v1751
    %v1822 = vpop.f32.mrf.mxu0
    %v1823 = vadd.f32 %v1742, %v1822
    %v1824 = vpop.f32.mrf.mxu0
    %1825 = vmatprep.mubr.f32.mxu0 0.0
    %1826 = vmatmul.mubr.f32.gmra.mxu0 %v1754
    %v1827 = vpop.f32.mrf.mxu0
    %v1828 = vadd.f32 %v1747, %v1827
    %v1829 = vpop.f32.mrf.mxu0
    %1830 = vdwg.mxu0
    %v1831 = vlaneseq
    %v1832 = vshrl.u32 %v1831, 7
    %v1833 = vsub.s32 0, %v1832
    %v1834 = vrot.slane %v51, %v1833
    %v1835 = vadd.f32 %v1823, %v1834
    %v1836 = vadd.f32 %v1828, %v1834
    %1838 = vset.pattern.permute.xlu0 0
    %1839 = vperm.xlu0 %1838, %v872
    %v1840 = vpop.permute.xlu0 %1839
    %1843 = vset.pattern.permute.xlu0 0
    %1844 = vperm.xlu0 %1843, %v1520
    %v1845 = vpop.permute.xlu0 %1844
    %v1847 = vrcp.pop %v1840
    %v1848 = vmul.f32 %v1835, %v1847
    %v1849 = vrcp.pop %v1845
    %v1850 = vmul.f32 %v1836, %v1849
    %v1851 = vmax.f32 %v1848, 0.0
    %v1852 = vmax.f32 %v1850, 0.0
    %v1853 = vmul.f32 %v1851, %v1851
    %v1854 = vrot.slane %v1853, 4
    %v1855 = vadd.f32 %v1853, %v1854
    %v1856 = vrot.slane %v1855, 2
    %v1857 = vadd.f32 %v1855, %v1856
    %v1858 = vrot.slane %v1857, 1
    %v1859 = vadd.f32 %v1857, %v1858
    %v1860 = vrsqrt.pop %v1859
    %v1861 = vmul.f32 %v1859, %v1860
    %vm1862 = vcmp.eq.f32.partialorder %v1859, inf
    %v1863 = vsel %vm1862, %v1859, %v1861
    %vm1864 = vcmp.eq.f32.partialorder %v1859, 0.0
    %v1865 = vand.u32 %v1859, 2147483648
    %v1866 = vsel %vm1864, %v1865, %v1863
    %v1867 = vmax.f32 %v1866, 1e-12
    %v1868 = vrcp.pop %v1867
    %v1869 = vmul.f32 %v1851, %v1868
    %1871 = vrot.lane.b32.xlu0 %v1869, 64
    %v1872 = vpop.permute.xlu0 %1871
    %v1874 = vsub.f32 %v1869, %v1872
    %1875 = vrot.lane.b32.xlu0 %v1869, 32
    %v1876 = vpop.permute.xlu0 %1875
    %v1878 = vsub.f32 %v1869, %v1876
    %v1879 = vmul.f32 %v1874, %v1874
    %1881 = vrot.lane.b32.xlu0 %v1879, 64
    %v1882 = vpop.permute.xlu0 %1881
    %v1884 = vsel %vm182, %v1882, 0.0
    %1885 = vadd.xlane.f32.xlu0 %v1884
    %v1886 = vpop.xlane.xlu0 %1885
    %v1887 = vrot.slane %v1886, 4
    %v1888 = vadd.f32 %v1886, %v1887
    %v1889 = vrot.slane %v1888, 2
    %v1890 = vadd.f32 %v1888, %v1889
    %v1891 = vrot.slane %v1890, 1
    %v1892 = vadd.f32 %v1890, %v1891
    %v1893 = vadd.f32 %v1892, 0.0
    %v1894 = vmul.f32 %v1878, %v1878
    %1896 = vrot.lane.b32.xlu0 %v1894, 64
    %v1897 = vpop.permute.xlu0 %1896
    %v1899 = vsel %vm182, %v1897, 0.0
    %1900 = vadd.xlane.f32.xlu0 %v1899
    %v1901 = vpop.xlane.xlu0 %1900
    %v1902 = vrot.slane %v1901, 4
    %v1903 = vadd.f32 %v1901, %v1902
    %v1904 = vrot.slane %v1903, 2
    %v1905 = vadd.f32 %v1903, %v1904
    %v1906 = vrot.slane %v1905, 1
    %v1907 = vadd.f32 %v1905, %v1906
    %v1908 = vadd.f32 %v1907, 0.0
    %v1909 = vmul.f32 %v1852, %v1852
    %v1910 = vrot.slane %v1909, 4
    %v1911 = vadd.f32 %v1909, %v1910
    %v1912 = vrot.slane %v1911, 2
    %v1913 = vadd.f32 %v1911, %v1912
    %v1914 = vrot.slane %v1913, 1
    %v1915 = vadd.f32 %v1913, %v1914
    %v1916 = vrsqrt.pop %v1915
    %v1917 = vmul.f32 %v1915, %v1916
    %vm1918 = vcmp.eq.f32.partialorder %v1915, inf
    %v1919 = vsel %vm1918, %v1915, %v1917
    %vm1920 = vcmp.eq.f32.partialorder %v1915, 0.0
    %v1921 = vand.u32 %v1915, 2147483648
    %v1922 = vsel %vm1920, %v1921, %v1919
    %v1923 = vmax.f32 %v1922, 1e-12
    %v1924 = vrcp.pop %v1923
    %v1925 = vmul.f32 %v1852, %v1924
    %1927 = vrot.lane.b32.xlu0 %v1925, 64
    %v1928 = vpop.permute.xlu0 %1927
    %v1930 = vsub.f32 %v1925, %v1928
    %1931 = vrot.lane.b32.xlu0 %v1925, 32
    %v1932 = vpop.permute.xlu0 %1931
    %v1934 = vsub.f32 %v1925, %v1932
    %v1935 = vmul.f32 %v1930, %v1930
    %1937 = vrot.lane.b32.xlu0 %v1935, 64
    %v1938 = vpop.permute.xlu0 %1937
    %v1940 = vsel %vm182, %v1938, 0.0
    %1941 = vadd.xlane.f32.xlu0 %v1940
    %v1942 = vpop.xlane.xlu0 %1941
    %v1943 = vrot.slane %v1942, 4
    %v1944 = vadd.f32 %v1942, %v1943
    %v1945 = vrot.slane %v1944, 2
    %v1946 = vadd.f32 %v1944, %v1945
    %v1947 = vrot.slane %v1946, 1
    %v1948 = vadd.f32 %v1946, %v1947
    %v1949 = vadd.f32 %v1893, %v1948
    %v1950 = vmul.f32 %v1934, %v1934
    %1952 = vrot.lane.b32.xlu0 %v1950, 64
    %v1953 = vpop.permute.xlu0 %1952
    %v1955 = vsel %vm182, %v1953, 0.0
    %1956 = vadd.xlane.f32.xlu0 %v1955
    %v1957 = vpop.xlane.xlu0 %1956
    %v1958 = vrot.slane %v1957, 4
    %v1959 = vadd.f32 %v1957, %v1958
    %v1960 = vrot.slane %v1959, 2
    %v1961 = vadd.f32 %v1959, %v1960
    %v1962 = vrot.slane %v1961, 1
    %v1963 = vadd.f32 %v1961, %v1962
    %v1964 = vadd.f32 %v1908, %v1963
    %1965 = vmatprep.subr.mxu0 0.0
    %1966 = vmatpush1.msra.mxu0 0.0
    %1967 = vmatprep.subr.mxu0 0.0
    %1968 = vmatpush1.msra.mxu0 0.0
    %1969 = vmatprep.subr.mxu0 0.0
    %1970 = vmatpush1.msra.mxu0 0.0
    %1971 = vmatprep.subr.mxu0 0.0
    %1972 = vmatpush1.msra.mxu0 0.0
    %1973 = vmatprep.subr.mxu0 0.0
    %1974 = vmatpush1.msra.mxu0 0.0
    %1975 = vmatprep.subr.mxu0 0.0
    %1976 = vmatpush1.msra.mxu0 0.0
    %1977 = vmatprep.subr.mxu0 0.0
    %1978 = vmatpush1.msra.mxu0 0.0
    %1979 = vmatprep.subr.mxu0 0.0
    %1980 = vmatpush1.msra.mxu0 0.0
    %1981 = vmatprep.subr.mxu0 0.0
    %1982 = vmatpush1.msra.mxu0 0.0
    %1983 = vmatprep.subr.mxu0 0.0
    %1984 = vmatpush1.msra.mxu0 0.0
    %1985 = vmatprep.subr.mxu0 0.0
    %1986 = vmatpush1.msra.mxu0 0.0
    %1987 = vmatprep.subr.mxu0 0.0
    %1988 = vmatpush1.msra.mxu0 0.0
    %1989 = vmatprep.subr.mxu0 0.0
    %1990 = vmatpush1.msra.mxu0 0.0
    %1991 = vmatprep.subr.mxu0 0.0
    %1992 = vmatpush1.msra.mxu0 0.0
    %1993 = vmatprep.subr.mxu0 0.0
    %1994 = vmatpush1.msra.mxu0 %v1852
    %1995 = vmatprep.subr.mxu0 0.0
    %1996 = vmatpush1.msra.mxu0 %v1851
    %1997 = vmatprep.subr.mxu0 0.0
    %1998 = vmatpush2.msra.mxu0 0.0
    %1999 = vmatprep.subr.mxu0 0.0
    %2000 = vmatpush2.msra.mxu0 0.0
    %2001 = vmatprep.subr.mxu0 0.0
    %2002 = vmatpush2.msra.mxu0 0.0
    %2003 = vmatprep.subr.mxu0 0.0
    %2004 = vmatpush2.msra.mxu0 0.0
    %2005 = vmatprep.subr.mxu0 0.0
    %2006 = vmatpush2.msra.mxu0 0.0
    %2007 = vmatprep.subr.mxu0 0.0
    %2008 = vmatpush2.msra.mxu0 0.0
    %2009 = vmatprep.subr.mxu0 0.0
    %2010 = vmatpush2.msra.mxu0 0.0
    %2011 = vmatprep.subr.mxu0 0.0
    %2012 = vmatpush2.msra.mxu0 0.0
    %2013 = vmatprep.subr.mxu0 0.0
    %2014 = vmatpush2.msra.mxu0 0.0
    %2015 = vmatprep.subr.mxu0 0.0
    %2016 = vmatpush2.msra.mxu0 0.0
    %2017 = vmatprep.subr.mxu0 0.0
    %2018 = vmatpush2.msra.mxu0 0.0
    %2019 = vmatprep.subr.mxu0 0.0
    %2020 = vmatpush2.msra.mxu0 0.0
    %2021 = vmatprep.subr.mxu0 0.0
    %2022 = vmatpush2.msra.mxu0 0.0
    %2023 = vmatprep.subr.mxu0 0.0
    %2024 = vmatpush2.msra.mxu0 0.0
    %2025 = vmatprep.subr.mxu0 0.0
    %2026 = vmatpush2.msra.mxu0 0.0
    %2027 = vmatprep.subr.mxu0 0.0
    %2028 = vmatpush2.msra.mxu0 0.0
    %2029 = vmatprep.mubr.f32.mxu0 0.0
    %2030 = vmatmul.mubr.f32.gmra.mxu0 %v104
    %v2031 = vpop.f32.mrf.mxu0
    %v2032 = vadd.f32 0.0, %v2031
    %v2033 = vpop.f32.mrf.mxu0
    %2034 = vdwg.mxu0
    %v2035 = vmul.f32 %v2032, %v176
    %v2036 = vlaneseq
    %v2037 = vshrl.u32 %v2036, 7
    %v2038 = vsub.s32 0, %v2037
    %v2039 = vrot.slane %v64, %v2038
    %vm2040 = vcmask 785408
    %v2042 = vsel %vm2040, %v2035, 0
    %2044 = vmatprep.subr.mxu0 0.0
    %2045 = vmatpush1.msra.mxu0 0.0
    %2046 = vmatprep.subr.mxu0 0.0
    %2047 = vmatpush1.msra.mxu0 0.0
    %2048 = vmatprep.subr.mxu0 0.0
    %2049 = vmatpush1.msra.mxu0 0.0
    %2050 = vmatprep.subr.mxu0 0.0
    %2051 = vmatpush1.msra.mxu0 0.0
    %2052 = vmatprep.subr.mxu0 0.0
    %2053 = vmatpush1.msra.mxu0 %v63
    %2054 = vmatprep.subr.mxu0 0.0
    %2055 = vmatpush1.msra.mxu0 %v62
    %2056 = vmatprep.subr.mxu0 0.0
    %2057 = vmatpush1.msra.mxu0 %v61
    %2058 = vmatprep.subr.mxu0 0.0
    %2059 = vmatpush1.msra.mxu0 %v60
    %2060 = vmatprep.subr.mxu0 0.0
    %2061 = vmatpush1.msra.mxu0 %v59
    %2062 = vmatprep.subr.mxu0 0.0
    %2063 = vmatpush1.msra.mxu0 %v58
    %2064 = vmatprep.subr.mxu0 0.0
    %2065 = vmatpush1.msra.mxu0 %v57
    %2066 = vmatprep.subr.mxu0 0.0
    %2067 = vmatpush1.msra.mxu0 %v56
    %2068 = vmatprep.subr.mxu0 0.0
    %2069 = vmatpush1.msra.mxu0 %v55
    %2070 = vmatprep.subr.mxu0 0.0
    %2071 = vmatpush1.msra.mxu0 %v54
    %2072 = vmatprep.subr.mxu0 0.0
    %2073 = vmatpush1.msra.mxu0 %v53
    %2074 = vmatprep.subr.mxu0 0.0
    %2075 = vmatpush1.msra.mxu0 %v52
    %2076 = vmatprep.subr.mxu0 0.0
    %2077 = vmatpush2.msra.mxu0 0.0
    %2078 = vmatprep.subr.mxu0 0.0
    %2079 = vmatpush2.msra.mxu0 0.0
    %2080 = vmatprep.subr.mxu0 0.0
    %2081 = vmatpush2.msra.mxu0 0.0
    %2082 = vmatprep.subr.mxu0 0.0
    %2083 = vmatpush2.msra.mxu0 0.0
    %2084 = vmatprep.subr.mxu0 0.0
    %2085 = vmatpush2.msra.mxu0 0.0
    %2086 = vmatprep.subr.mxu0 0.0
    %2087 = vmatpush2.msra.mxu0 0.0
    %2088 = vmatprep.subr.mxu0 0.0
    %2089 = vmatpush2.msra.mxu0 0.0
    %2090 = vmatprep.subr.mxu0 0.0
    %2091 = vmatpush2.msra.mxu0 0.0
    %2092 = vmatprep.subr.mxu0 0.0
    %2093 = vmatpush2.msra.mxu0 0.0
    %2094 = vmatprep.subr.mxu0 0.0
    %2095 = vmatpush2.msra.mxu0 0.0
    %2096 = vmatprep.subr.mxu0 0.0
    %2097 = vmatpush2.msra.mxu0 0.0
    %2098 = vmatprep.subr.mxu0 0.0
    %2099 = vmatpush2.msra.mxu0 0.0
    %2100 = vmatprep.subr.mxu0 0.0
    %2101 = vmatpush2.msra.mxu0 0.0
    %2102 = vmatprep.subr.mxu0 0.0
    %2103 = vmatpush2.msra.mxu0 0.0
    %2104 = vmatprep.subr.mxu0 0.0
    %2105 = vmatpush2.msra.mxu0 0.0
    %2106 = vmatprep.subr.mxu0 0.0
    %2107 = vmatpush2.msra.mxu0 0.0
    %2108 = vmatprep.mubr.f32.mxu0 0.0
    %2109 = vmatmul.mubr.f32.gmra.mxu0 %v2042
    %v2110 = vpop.f32.mrf.mxu0
    %v2111 = vadd.f32 %v2039, %v2110
    %v2112 = vpop.f32.mrf.mxu0
    %2113 = vdwg.mxu0
    %v2114 = vmax.f32 %v2111, 0.0
    %2115 = vrot.lane.b32.xlu0 %v32, 32
    %v2116 = vpop.permute.xlu0 %2115
    %v2118 = vsel %vm182, %v2114, %v2116
    %v2119 = vlaneseq
    %v2120 = vshrl.u32 %v2119, 7
    %v2121 = vsub.s32 0, %v2120
    %v2122 = vrot.slane %v73, %v2121
    %v2124 = vsel %vm745, %v2118, 0
    %2126 = vmatprep.subr.mxu0 0.0
    %2127 = vmatpush1.msra.mxu0 0.0
    %2128 = vmatprep.subr.mxu0 0.0
    %2129 = vmatpush1.msra.mxu0 0.0
    %2130 = vmatprep.subr.mxu0 0.0
    %2131 = vmatpush1.msra.mxu0 0.0
    %2132 = vmatprep.subr.mxu0 0.0
    %2133 = vmatpush1.msra.mxu0 0.0
    %2134 = vmatprep.subr.mxu0 0.0
    %2135 = vmatpush1.msra.mxu0 0.0
    %2136 = vmatprep.subr.mxu0 0.0
    %2137 = vmatpush1.msra.mxu0 0.0
    %2138 = vmatprep.subr.mxu0 0.0
    %2139 = vmatpush1.msra.mxu0 0.0
    %2140 = vmatprep.subr.mxu0 0.0
    %2141 = vmatpush1.msra.mxu0 0.0
    %2142 = vmatprep.subr.mxu0 0.0
    %2143 = vmatpush1.msra.mxu0 %v72
    %2144 = vmatprep.subr.mxu0 0.0
    %2145 = vmatpush1.msra.mxu0 %v71
    %2146 = vmatprep.subr.mxu0 0.0
    %2147 = vmatpush1.msra.mxu0 %v70
    %2148 = vmatprep.subr.mxu0 0.0
    %2149 = vmatpush1.msra.mxu0 %v69
    %2150 = vmatprep.subr.mxu0 0.0
    %2151 = vmatpush1.msra.mxu0 %v68
    %2152 = vmatprep.subr.mxu0 0.0
    %2153 = vmatpush1.msra.mxu0 %v67
    %2154 = vmatprep.subr.mxu0 0.0
    %2155 = vmatpush1.msra.mxu0 %v66
    %2156 = vmatprep.subr.mxu0 0.0
    %2157 = vmatpush1.msra.mxu0 %v65
    %2158 = vmatprep.subr.mxu0 0.0
    %2159 = vmatpush2.msra.mxu0 0.0
    %2160 = vmatprep.subr.mxu0 0.0
    %2161 = vmatpush2.msra.mxu0 0.0
    %2162 = vmatprep.subr.mxu0 0.0
    %2163 = vmatpush2.msra.mxu0 0.0
    %2164 = vmatprep.subr.mxu0 0.0
    %2165 = vmatpush2.msra.mxu0 0.0
    %2166 = vmatprep.subr.mxu0 0.0
    %2167 = vmatpush2.msra.mxu0 0.0
    %2168 = vmatprep.subr.mxu0 0.0
    %2169 = vmatpush2.msra.mxu0 0.0
    %2170 = vmatprep.subr.mxu0 0.0
    %2171 = vmatpush2.msra.mxu0 0.0
    %2172 = vmatprep.subr.mxu0 0.0
    %2173 = vmatpush2.msra.mxu0 0.0
    %2174 = vmatprep.subr.mxu0 0.0
    %2175 = vmatpush2.msra.mxu0 0.0
    %2176 = vmatprep.subr.mxu0 0.0
    %2177 = vmatpush2.msra.mxu0 0.0
    %2178 = vmatprep.subr.mxu0 0.0
    %2179 = vmatpush2.msra.mxu0 0.0
    %2180 = vmatprep.subr.mxu0 0.0
    %2181 = vmatpush2.msra.mxu0 0.0
    %2182 = vmatprep.subr.mxu0 0.0
    %2183 = vmatpush2.msra.mxu0 0.0
    %2184 = vmatprep.subr.mxu0 0.0
    %2185 = vmatpush2.msra.mxu0 0.0
    %2186 = vmatprep.subr.mxu0 0.0
    %2187 = vmatpush2.msra.mxu0 0.0
    %2188 = vmatprep.subr.mxu0 0.0
    %2189 = vmatpush2.msra.mxu0 0.0
    %2190 = vmatprep.mubr.f32.mxu0 0.0
    %2191 = vmatmul.mubr.f32.gmra.mxu0 %v2124
    %v2192 = vpop.f32.mrf.mxu0
    %v2193 = vadd.f32 %v2122, %v2192
    %v2194 = vpop.f32.mrf.mxu0
    %2195 = vdwg.mxu0
    %v2196 = vcvt.f32.s32.to.zero.pseudo %v32
    %2197 = vset.pattern.permute.xlu0 48
    %2198 = vperm.xlu0 %2197, %v2196
    %v2199 = vpop.permute.xlu0 %2198
    %vm2200 = vcmp.eq.s32.totalorder %v342, %v2199
    %v2201 = vsel %vm2200, 1, 0
    %v2202 = vcvt.s32.f32 %v2201
    %vm2203 = vcmp.lt.s32.totalorder %v342, 3
    %v2204 = vsel %vm2203, %v2193, -1e+30
    %vm2205 = vcmask 1041408
    %v2206 = vsel %vm2205, %v2204, -inf
    %2207 = vmax.xlane.f32.xlu0 %v2206
    %v2208 = vpop.xlane.xlu0 %2207
    %v2209 = vsub.f32 %v2204, %v2208
    %v2210 = vmul.f32 %v2209, 1.442695
    %v2211 = vpow.pop %v2210
    %v2212 = vsel %vm2205, %v2211, 0.0
    %2213 = vadd.xlane.f32.xlu0 %v2212
    %v2214 = vpop.xlane.xlu0 %2213
    %v2215 = vlog2.pop %v2214
    %v2216 = vmul.f32 %v2215, 0.6931472
    %v2217 = vadd.f32 %v2208, %v2216
    %v2218 = vmul.f32 %v2193, %v2202
    %v2219 = vsel %vm2205, %v2218, 0.0
    %2220 = vadd.xlane.f32.xlu0 %v2219
    %v2221 = vpop.xlane.xlu0 %2220
    %v2222 = vsub.f32 %v2217, %v2221
    %v2223 = vsel %vm2205, %v2222, 0.0
    %v2224 = vrot.slane %v2223, 4
    %v2225 = vadd.f32 %v2223, %v2224
    %v2226 = vrot.slane %v2225, 2
    %v2227 = vadd.f32 %v2225, %v2226
    %v2228 = vrot.slane %v2227, 1
    %v2229 = vadd.f32 %v2227, %v2228
    %v2230 = vmul.f32 %v2229, 0.5
    %v2231 = vmul.f32 %v1949, 0.001953125
    %v2232 = vmul.f32 %v1964, 0.001953125
    %vm2233 = vcmp.eq.s32.totalorder %v342, 0
    %v2234 = vsel %vm2233, %v2230, 0.0
    %vm2235 = vcmp.eq.s32.totalorder %v342, 1
    %v2236 = vsel %vm2235, %v2231, 0.0
    %v2237 = vadd.f32 %v2234, %v2236
    %vm2238 = vcmp.eq.s32.totalorder %v342, 2
    %v2239 = vsel %vm2238, %v2232, 0.0
    %v2240 = vadd.f32 %v2237, %v2239
    %v2241 = vsel %vm2205, %v2193, %v2240
    %vm2242 = vcmask 1042432
    %v2243 = vsel %vm2242, %v2241, 0.0
    %2244 = vst [vmem:[%s3] sm:$0xff] %v2243
    // Predicated region
    $region18: #{rgat_absa_forward.1} parent=1 // pred_check
      _
    $region19: #{rgat_absa_forward.1} parent=1 // pred_check_branch
      %2246 = sbr.rel (0) target = $region21
    $region20: #{rgat_absa_forward.1} parent=1 // pred_region
      _
    $region21: #{rgat_absa_forward.1} parent=1 // pred_fallthru
      _
    // Predicated region
    $region22: #{rgat_absa_forward.1} parent=1 // pred_check
      _
    $region23: #{rgat_absa_forward.1} parent=1 // pred_check_branch
      %2248 = sbr.rel (0) target = $region25
    $region24: #{rgat_absa_forward.1} parent=1 // pred_region
      _
    $region25: #{rgat_absa_forward.1} parent=1 // pred_fallthru
      _
    %2249 = vsyncpa [#allocation3], 1

</llo_original>
